<compile_context>
chip_gen: v7x
topology: tpu7x:2x2x1
jax: 0.10.0
libtpu: 0.0.40
codegen_flags: <defaults>
</compile_context>

<pallas_src>
import functools
import math

import jax
import jax.numpy as jnp
import numpy as np
from jax import lax
from jax.experimental import pallas as pl
from jax.experimental.pallas import tpu as pltpu

_B_TILE = 8           # sublane tile for the batch ("parallel" grid axis)
_LANE = 128           # all feature dims padded to multiples of this
_I_CHUNK = 512        # in-feature chunk processed per inner step (bounds temporaries)
_NEG_INF = float("-inf")


def _round_up(n, m):
    return ((n + m - 1) // m) * m


# ----------------------------------------------------------------------------
# Per-layer math, traced inside the single fused kernel (all data VMEM resident)
# ----------------------------------------------------------------------------
def _out_focused_layer(x, w, b, in_true, out_true, beta, relu):
    """x:(Bt,Ip)  w:(Op,Ip) torch layout  b:(1,Op) -> (Bt,Op)
    out = (1-beta)*(x@W^T) + beta*max_i(W[o,i]*x[b,i]) + bias
    """
    Bt, I_pad = x.shape
    O_pad = w.shape[0]

    lin = lax.dot_general(x, w, (((1,), (1,)), ((), ())),
                          preferred_element_type=jnp.float32)           # (Bt, Op) MXU

    mx = jnp.full((Bt, O_pad), _NEG_INF, jnp.float32)
    for i0 in range(0, I_pad, _I_CHUNK):                                # static chunking
        ic = min(_I_CHUNK, I_pad - i0)
        xi = x[:, i0:i0 + ic]                                           # (Bt, ic)
        wi = w[:, i0:i0 + ic]                                           # (Op, ic)
        cube = xi[:, None, :] * wi[None, :, :]                          # (Bt, Op, ic)
        ivalid = (lax.broadcasted_iota(jnp.int32, (1, ic), 1) + i0) < in_true
        cube = jnp.where(ivalid[None, :, :], cube, _NEG_INF)            # mask padded i
        mx = jnp.maximum(mx, jnp.max(cube, axis=-1))

    out = (1.0 - beta) * lin + beta * mx + b
    if relu:
        out = jnp.maximum(out, 0.0)
    # zero padded output lanes so downstream layers see exact zeros
    ovalid = lax.broadcasted_iota(jnp.int32, (1, O_pad), 1) < out_true
    return jnp.where(ovalid, out, 0.0)


def _in_focused_layer(x, wt, b, in_true, out_true, beta, relu, bias_included, cos):
    """x:(Bt,Ip)  wt:(Ip,Op) pre-transposed nn.Linear weight  b:(1,Op) -> (Bt,Op)
    summands[b,i] = max_o(W[o,i]*x[b,i] + bias_included*bias[o]);  the max value of each
    (b,i) is scattered to its argmax-o bucket and summed over i (torch index_put + sum).
    out = (1-beta)*(x@W^T + bias) + beta*(sum_max + (not bias_included)*bias)
    """
    Bt, I_pad = x.shape
    O_pad = wt.shape[1]
    if cos:
        wt = jnp.cos(wt)                                                # EUP, cheap

    lin = jnp.dot(x, wt, preferred_element_type=jnp.float32) + b        # (Bt, Op) MXU

    ovalid = lax.broadcasted_iota(jnp.int32, (1, 1, O_pad), 2) < out_true
    # float iota is exact for O_pad < 2^24 (first-occurrence argmax, matches numpy)
    oo_f = lax.broadcasted_iota(jnp.float32, (1, 1, O_pad), 2)

    sum_max = jnp.zeros((Bt, O_pad), jnp.float32)
    for i0 in range(0, I_pad, _I_CHUNK):                                # static chunking
        ic = min(_I_CHUNK, I_pad - i0)
        xi = x[:, i0:i0 + ic]                                           # (Bt, ic)
        wti = wt[i0:i0 + ic, :]                                         # (ic, Op)
        z = xi[:, :, None] * wti[None, :, :]                            # (Bt, ic, Op)
        if bias_included:
            z = z + b[None, :, :]
        z = jnp.where(ovalid, z, _NEG_INF)                              # padded o never wins
        m = jnp.max(z, axis=-1)                                         # (Bt, ic)
        idx = jnp.min(jnp.where(z == m[..., None], oo_f, float(O_pad)), axis=-1)
        onehot = (oo_f == idx[..., None]).astype(jnp.float32)           # (Bt, ic, Op)
        ivalid = (lax.broadcasted_iota(jnp.int32, (1, ic), 1) + i0) < in_true
        mval = jnp.where(ivalid, m, 0.0)                                # padded i adds 0
        # scatter-as-one-hot sum on the MXU: batched (1,ic)x(ic,Op) contraction over i
        part = lax.dot_general(mval[:, None, :], onehot,
                               (((2,), (1,)), ((0,), (0,))),
                               preferred_element_type=jnp.float32)      # (Bt, 1, Op)
        sum_max = sum_max + part[:, 0, :]

    if bias_included:
        out = (1.0 - beta) * lin + beta * sum_max
    else:
        out = (1.0 - beta) * lin + beta * (sum_max + b)
    if relu:
        out = jnp.maximum(out, 0.0)
    ovalid2 = lax.broadcasted_iota(jnp.int32, (1, O_pad), 1) < out_true
    return jnp.where(ovalid2, out, 0.0)


def _maxnet_kernel(*refs, layer_cfgs, focus, beta, bias_included, cos):
    """Fused forward: refs = (x_ref, w0, b0, w1, b1, ..., o_ref)."""
    x_ref, o_ref = refs[0], refs[-1]
    p_refs = refs[1:-1]
    x = x_ref[...]
    for li, (in_true, out_true, relu) in enumerate(layer_cfgs):
        w = p_refs[2 * li][...]
        b = p_refs[2 * li + 1][...]
        if focus == "Out":
            x = _out_focused_layer(x, w, b, in_true, out_true, beta, relu)
        else:
            x = _in_focused_layer(x, w, b, in_true, out_true, beta, relu,
                                  bias_included, cos)
    o_ref[...] = x
    # TODO(synk): dropout > 0 in training mode (stochastic masking via pltpu.prng_*)
    # is not implemented; torch.nn.Dropout(p=0.0) is the identity, which is matched.


# ----------------------------------------------------------------------------
# Host-side fused forward (pad -> one pallas_call -> slice)
# ----------------------------------------------------------------------------
def _forward_host(x, flat_params, cfg):
    (focus, beta, bias_included, cos, layer_cfgs,
     input_width, output_width, in_pad, out_pad) = cfg
    B = x.shape[0]
    B_pad = _round_up(max(B, 1), _B_TILE)

    xp = jnp.zeros((B_pad, in_pad), jnp.float32)
    xp = xp.at[:B, :input_width].set(x.astype(jnp.float32))

    kernel = functools.partial(_maxnet_kernel, layer_cfgs=layer_cfgs, focus=focus,
                               beta=beta, bias_included=bias_included, cos=cos)

    in_specs = [pl.BlockSpec((_B_TILE, in_pad), lambda i: (i, 0))]
    for p in flat_params:                       # weights / biases: whole array, 2-D
        in_specs.append(pl.BlockSpec(p.shape, lambda i: (0, 0)))

    yp = pl.pallas_call(
        kernel,
        out_shape=jax.ShapeDtypeStruct((B_pad, out_pad), jnp.float32),
        grid=(B_pad // _B_TILE,),
        in_specs=in_specs,
        out_specs=pl.BlockSpec((_B_TILE, out_pad), lambda i: (i, 0)),
        compiler_params=pltpu.CompilerParams(dimension_semantics=("parallel",)),
    )(xp, *flat_params)

    y = yp[:B, :output_width]
    if output_width == 1:                        # torch .squeeze(dim=-1)
        y = jnp.squeeze(y, axis=-1)
    return y


_jit_forward = jax.jit(_forward_host, static_argnums=(2,))


# ----------------------------------------------------------------------------
# MaxNet in JAX + Pallas
# ----------------------------------------------------------------------------
def _init_linear(key, in_f, out_f):
    """Deterministic nn.Linear-style init: U(-1/sqrt(in), 1/sqrt(in))."""
    kw, kb = jax.random.split(key)
    bound = 1.0 / math.sqrt(in_f)
    w = jax.random.uniform(kw, (out_f, in_f), jnp.float32, -bound, bound)
    b = jax.random.uniform(kb, (1, out_f), jnp.float32, -bound, bound)
    return w, b


def _pad2d(a, shape):
    return jnp.pad(a, [(0, s - d) for d, s in zip(a.shape, shape)])


class MaxNetPallas:
    def __init__(self, key, input_width, output_width, focus, layers, width,
                 beta=0.2, bias_included=False, relu=False, cos=False, dropout=0.0):
        assert focus in ("Out", "In")
        self.focus = focus
        self.beta = float(beta)
        self.bias_included = bool(bias_included)
        self.relu = bool(relu)
        self.cos = bool(cos)
        self.dropout = float(dropout)
        self.input_width = int(input_width)
        self.output_width = int(output_width)

        dims = ([(input_width, width)]
                + [(width, width)] * (layers - 2)
                + [(width, output_width)])
        keys = jax.random.split(key, len(dims))
        self.params = [_init_linear(k, i, o) for k, (i, o) in zip(keys, dims)]

        # Padded (lane-dense) parameters; In-focused weights pre-transposed once here.
        flat, cfgs = [], []
        for li, ((w, b), (i_f, o_f)) in enumerate(zip(self.params, dims)):
            i_pad, o_pad = _round_up(i_f, _LANE), _round_up(o_f, _LANE)
            relu_l = self.relu and li != len(dims) - 1   # layer_last built without relu
            cfgs.append((i_f, o_f, relu_l))
            wp = _pad2d(w, (o_pad, i_pad))
            if focus == "In":
                wp = jnp.transpose(wp)                   # (i_pad, o_pad), once at init
            flat += [wp, _pad2d(b, (1, o_pad))]
        self.flat_params = tuple(flat)
        self.in_pad = _round_up(input_width, _LANE)
        self.out_pad = _round_up(output_width, _LANE)
        self.cfg = (self.focus, self.beta, self.bias_included, self.cos,
                    tuple(cfgs), self.input_width, self.output_width,
                    self.in_pad, self.out_pad)

    def __call__(self, x):
        return _jit_forward(x, self.flat_params, self.cfg)


# ----------------------------------------------------------------------------
# Pure numpy reference (mirrors the PyTorch math)
# ----------------------------------------------------------------------------
def _ref_out_layer(x, w, b, beta, relu):
    lin = x @ w.T
    mx = (x[:, None, :] * w[None, :, :]).max(axis=-1)
    out = (1.0 - beta) * lin + beta * mx + b
    return np.maximum(out, 0.0) if relu else out


def _ref_in_layer(x, w, b, beta, relu, cos, bias_included):
    if cos:
        w = np.cos(w)
    B, I = x.shape
    O = w.shape[0]
    lin = x @ w.T + b
    # argmax routing decided in float32 to mirror the on-device kernel exactly
    z32 = np.einsum("oi,bi->bio", w.astype(np.float32), x.astype(np.float32))
    if bias_included:
        z32 = z32 + b.astype(np.float32).reshape(1, 1, O)
    m = z32.max(axis=-1).astype(np.float64)                   # (B, I)
    idx = z32.argmax(axis=-1)                                 # (B, I), first occurrence
    onehot = (idx[..., None] == np.arange(O)[None, None, :]).astype(np.float64)
    sum_max = (m[..., None] * onehot).sum(axis=1)             # (B, O)
    if bias_included:
        out = (1.0 - beta) * lin + beta * sum_max
    else:
        out = (1.0 - beta) * lin + beta * (sum_max + b)
    return np.maximum(out, 0.0) if relu else out


def _ref_maxnet(model, x):
    x = np.asarray(x, np.float64)
    n = len(model.params)
    for li, (w, b) in enumerate(model.params):
        w = np.asarray(w, np.float64)
        b = np.asarray(b, np.float64)
        relu = model.relu and li != n - 1
        if model.focus == "Out":
            x = _ref_out_layer(x, w, b, model.beta, relu)
        else:
            x = _ref_in_layer(x, w, b, model.beta, relu, model.cos, model.bias_included)
    if x.shape[-1] == 1:
        x = x[..., 0]
    return x


# ----------------------------------------------------------------------------
if __name__ == "__main__":
    key = jax.random.PRNGKey(0)
    k_in, k_models = jax.random.split(key)

    BATCH, INPUT_W, OUTPUT_W, LAYERS, WIDTH = 2, 16, 1, 3, 32
    x = jax.random.normal(k_in, (BATCH, INPUT_W), jnp.float32)

    configs = [
        dict(focus="Out", beta=0.2, bias_included=False, relu=True, cos=False),
        dict(focus="In", beta=0.2, bias_included=False, relu=True, cos=False),
        dict(focus="In", beta=0.3, bias_included=True, relu=True, cos=True),
    ]
    for cfg in configs:
        model = MaxNetPallas(k_models, INPUT_W, OUTPUT_W, layers=LAYERS, width=WIDTH,
                             dropout=0.0, **cfg)
        y = jax.block_until_ready(model(x))
        y_ref = _ref_maxnet(model, np.asarray(x))
        np.testing.assert_allclose(np.asarray(y), y_ref, rtol=1e-4, atol=1e-5)
        assert np.asarray(y).shape == (BATCH,)

    print("KERNEL_OK")
</pallas_src>

<mosaic_0001>
module attributes {stable_mosaic.version = 11 : i64} {
  func.func @_maxnet_kernel(%arg0: i32, %arg1: memref<8x128xf32, #tpu.memory_space<vmem>>, %arg2: memref<128x128xf32, #tpu.memory_space<vmem>>, %arg3: memref<1x128xf32, #tpu.memory_space<vmem>>, %arg4: memref<128x128xf32, #tpu.memory_space<vmem>>, %arg5: memref<1x128xf32, #tpu.memory_space<vmem>>, %arg6: memref<128x128xf32, #tpu.memory_space<vmem>>, %arg7: memref<1x128xf32, #tpu.memory_space<vmem>>, %arg8: memref<8x128xf32, #tpu.memory_space<vmem>>) attributes {dimension_semantics = [#tpu.dimension_semantics<parallel>], iteration_bounds = array<i64: 1>, scalar_prefetch = 0 : i64, scratch_operands = 0 : i64, tpu.core_type = #tpu.core_type<tc>, window_params = [{transform_indices = @transform_0, window_bounds = array<i64: 8, 128>}, {pipeline_mode = #tpu.pipeline_mode<synchronous>, transform_indices = @transform_1, window_bounds = array<i64: 128, 128>}, {pipeline_mode = #tpu.pipeline_mode<synchronous>, transform_indices = @transform_2, window_bounds = array<i64: 1, 128>}, {pipeline_mode = #tpu.pipeline_mode<synchronous>, transform_indices = @transform_3, window_bounds = array<i64: 128, 128>}, {pipeline_mode = #tpu.pipeline_mode<synchronous>, transform_indices = @transform_4, window_bounds = array<i64: 1, 128>}, {pipeline_mode = #tpu.pipeline_mode<synchronous>, transform_indices = @transform_5, window_bounds = array<i64: 128, 128>}, {pipeline_mode = #tpu.pipeline_mode<synchronous>, transform_indices = @transform_6, window_bounds = array<i64: 1, 128>}, {transform_indices = @transform_7, window_bounds = array<i64: 8, 128>}]} {
    %c0 = arith.constant 0 : index
    %c0_0 = arith.constant 0 : index
    %0 = vector.load %arg1[%c0, %c0_0] : memref<8x128xf32, #tpu.memory_space<vmem>>, vector<8x128xf32>
    %c0_1 = arith.constant 0 : index
    %c0_2 = arith.constant 0 : index
    %1 = vector.load %arg2[%c0_1, %c0_2] : memref<128x128xf32, #tpu.memory_space<vmem>>, vector<128x128xf32>
    %c0_3 = arith.constant 0 : index
    %c0_4 = arith.constant 0 : index
    %2 = vector.load %arg3[%c0_3, %c0_4] : memref<1x128xf32, #tpu.memory_space<vmem>>, vector<1x128xf32>
    %cst = arith.constant dense<0.000000e+00> : vector<8x128xf32>
    %3 = tpu.matmul %0, %1, %cst {dimension_numbers = #tpu.dot_dimension_numbers<[1], [1], [0], [0], [0, 0, 1, 0], [], []>} : vector<8x128xf32>, vector<128x128xf32>, vector<8x128xf32> -> vector<8x128xf32>
    %cst_5 = arith.constant 0xFF800000 : f32
    %4 = vector.broadcast %cst_5 : f32 to vector<8x128xf32>
    %5 = vector.shape_cast %0 : vector<8x128xf32> to vector<8x1x128xf32>
    %6 = vector.shape_cast %1 : vector<128x128xf32> to vector<1x128x128xf32>
    %7 = vector.broadcast %5 : vector<8x1x128xf32> to vector<8x128x128xf32>
    %8 = vector.broadcast %6 : vector<1x128x128xf32> to vector<8x128x128xf32>
    %9 = arith.mulf %7, %8 : vector<8x128x128xf32>
    %10 = tpu.iota {dimensions = array<i32: 1>} : vector<1x128xi32>
    %c0_i32 = arith.constant 0 : i32
    %11 = vector.broadcast %c0_i32 : i32 to vector<1x128xi32>
    %12 = arith.addi %10, %11 : vector<1x128xi32>
    %c16_i32 = arith.constant 16 : i32
    %13 = vector.broadcast %c16_i32 : i32 to vector<1x128xi32>
    %14 = arith.cmpi slt, %12, %13 : vector<1x128xi32>
    %15 = vector.shape_cast %14 : vector<1x128xi1> to vector<1x1x128xi1>
    %cst_6 = arith.constant 0xFF800000 : f32
    %16 = vector.shape_cast %15 : vector<1x1x128xi1> to vector<1x1x128xi1>
    %17 = vector.broadcast %16 : vector<1x1x128xi1> to vector<8x128x128xi1>
    %18 = vector.broadcast %cst_6 : f32 to vector<8x128x128xf32>
    %19 = arith.select %17, %9, %18 : vector<8x128x128xi1>, vector<8x128x128xf32>
    %cst_7 = arith.constant dense<0xFF800000> : vector<8x128xf32>
    %20 = vector.multi_reduction <maximumf>, %19, %cst_7 [2] : vector<8x128x128xf32> to vector<8x128xf32>
    %21 = arith.maximumf %4, %20 : vector<8x128xf32>
    %cst_8 = arith.constant 8.000000e-01 : f32
    %22 = vector.broadcast %cst_8 : f32 to vector<8x128xf32>
    %23 = arith.mulf %22, %3 : vector<8x128xf32>
    %cst_9 = arith.constant 2.000000e-01 : f32
    %24 = vector.broadcast %cst_9 : f32 to vector<8x128xf32>
    %25 = arith.mulf %24, %21 : vector<8x128xf32>
    %26 = arith.addf %23, %25 : vector<8x128xf32>
    %27 = vector.broadcast %2 : vector<1x128xf32> to vector<8x128xf32>
    %28 = arith.addf %26, %27 : vector<8x128xf32>
    %cst_10 = arith.constant 0.000000e+00 : f32
    %29 = vector.broadcast %cst_10 : f32 to vector<8x128xf32>
    %30 = arith.maximumf %28, %29 : vector<8x128xf32>
    %31 = tpu.iota {dimensions = array<i32: 1>} : vector<1x128xi32>
    %c32_i32 = arith.constant 32 : i32
    %32 = vector.broadcast %c32_i32 : i32 to vector<1x128xi32>
    %33 = arith.cmpi slt, %31, %32 : vector<1x128xi32>
    %cst_11 = arith.constant 0.000000e+00 : f32
    %34 = vector.shape_cast %33 : vector<1x128xi1> to vector<1x128xi1>
    %35 = vector.broadcast %34 : vector<1x128xi1> to vector<8x128xi1>
    %36 = vector.broadcast %cst_11 : f32 to vector<8x128xf32>
    %37 = arith.select %35, %30, %36 : vector<8x128xi1>, vector<8x128xf32>
    %c0_12 = arith.constant 0 : index
    %c0_13 = arith.constant 0 : index
    %38 = vector.load %arg4[%c0_12, %c0_13] : memref<128x128xf32, #tpu.memory_space<vmem>>, vector<128x128xf32>
    %c0_14 = arith.constant 0 : index
    %c0_15 = arith.constant 0 : index
    %39 = vector.load %arg5[%c0_14, %c0_15] : memref<1x128xf32, #tpu.memory_space<vmem>>, vector<1x128xf32>
    %cst_16 = arith.constant dense<0.000000e+00> : vector<8x128xf32>
    %40 = tpu.matmul %37, %38, %cst_16 {dimension_numbers = #tpu.dot_dimension_numbers<[1], [1], [0], [0], [0, 0, 1, 0], [], []>} : vector<8x128xf32>, vector<128x128xf32>, vector<8x128xf32> -> vector<8x128xf32>
    %cst_17 = arith.constant 0xFF800000 : f32
    %41 = vector.broadcast %cst_17 : f32 to vector<8x128xf32>
    %42 = vector.shape_cast %37 : vector<8x128xf32> to vector<8x1x128xf32>
    %43 = vector.shape_cast %38 : vector<128x128xf32> to vector<1x128x128xf32>
    %44 = vector.broadcast %42 : vector<8x1x128xf32> to vector<8x128x128xf32>
    %45 = vector.broadcast %43 : vector<1x128x128xf32> to vector<8x128x128xf32>
    %46 = arith.mulf %44, %45 : vector<8x128x128xf32>
    %47 = tpu.iota {dimensions = array<i32: 1>} : vector<1x128xi32>
    %c0_i32_18 = arith.constant 0 : i32
    %48 = vector.broadcast %c0_i32_18 : i32 to vector<1x128xi32>
    %49 = arith.addi %47, %48 : vector<1x128xi32>
    %c32_i32_19 = arith.constant 32 : i32
    %50 = vector.broadcast %c32_i32_19 : i32 to vector<1x128xi32>
    %51 = arith.cmpi slt, %49, %50 : vector<1x128xi32>
    %52 = vector.shape_cast %51 : vector<1x128xi1> to vector<1x1x128xi1>
    %cst_20 = arith.constant 0xFF800000 : f32
    %53 = vector.shape_cast %52 : vector<1x1x128xi1> to vector<1x1x128xi1>
    %54 = vector.broadcast %53 : vector<1x1x128xi1> to vector<8x128x128xi1>
    %55 = vector.broadcast %cst_20 : f32 to vector<8x128x128xf32>
    %56 = arith.select %54, %46, %55 : vector<8x128x128xi1>, vector<8x128x128xf32>
    %cst_21 = arith.constant dense<0xFF800000> : vector<8x128xf32>
    %57 = vector.multi_reduction <maximumf>, %56, %cst_21 [2] : vector<8x128x128xf32> to vector<8x128xf32>
    %58 = arith.maximumf %41, %57 : vector<8x128xf32>
    %cst_22 = arith.constant 8.000000e-01 : f32
    %59 = vector.broadcast %cst_22 : f32 to vector<8x128xf32>
    %60 = arith.mulf %59, %40 : vector<8x128xf32>
    %cst_23 = arith.constant 2.000000e-01 : f32
    %61 = vector.broadcast %cst_23 : f32 to vector<8x128xf32>
    %62 = arith.mulf %61, %58 : vector<8x128xf32>
    %63 = arith.addf %60, %62 : vector<8x128xf32>
    %64 = vector.broadcast %39 : vector<1x128xf32> to vector<8x128xf32>
    %65 = arith.addf %63, %64 : vector<8x128xf32>
    %cst_24 = arith.constant 0.000000e+00 : f32
    %66 = vector.broadcast %cst_24 : f32 to vector<8x128xf32>
    %67 = arith.maximumf %65, %66 : vector<8x128xf32>
    %68 = tpu.iota {dimensions = array<i32: 1>} : vector<1x128xi32>
    %c32_i32_25 = arith.constant 32 : i32
    %69 = vector.broadcast %c32_i32_25 : i32 to vector<1x128xi32>
    %70 = arith.cmpi slt, %68, %69 : vector<1x128xi32>
    %cst_26 = arith.constant 0.000000e+00 : f32
    %71 = vector.shape_cast %70 : vector<1x128xi1> to vector<1x128xi1>
    %72 = vector.broadcast %71 : vector<1x128xi1> to vector<8x128xi1>
    %73 = vector.broadcast %cst_26 : f32 to vector<8x128xf32>
    %74 = arith.select %72, %67, %73 : vector<8x128xi1>, vector<8x128xf32>
    %c0_27 = arith.constant 0 : index
    %c0_28 = arith.constant 0 : index
    %75 = vector.load %arg6[%c0_27, %c0_28] : memref<128x128xf32, #tpu.memory_space<vmem>>, vector<128x128xf32>
    %c0_29 = arith.constant 0 : index
    %c0_30 = arith.constant 0 : index
    %76 = vector.load %arg7[%c0_29, %c0_30] : memref<1x128xf32, #tpu.memory_space<vmem>>, vector<1x128xf32>
    %cst_31 = arith.constant dense<0.000000e+00> : vector<8x128xf32>
    %77 = tpu.matmul %74, %75, %cst_31 {dimension_numbers = #tpu.dot_dimension_numbers<[1], [1], [0], [0], [0, 0, 1, 0], [], []>} : vector<8x128xf32>, vector<128x128xf32>, vector<8x128xf32> -> vector<8x128xf32>
    %cst_32 = arith.constant 0xFF800000 : f32
    %78 = vector.broadcast %cst_32 : f32 to vector<8x128xf32>
    %79 = vector.shape_cast %74 : vector<8x128xf32> to vector<8x1x128xf32>
    %80 = vector.shape_cast %75 : vector<128x128xf32> to vector<1x128x128xf32>
    %81 = vector.broadcast %79 : vector<8x1x128xf32> to vector<8x128x128xf32>
    %82 = vector.broadcast %80 : vector<1x128x128xf32> to vector<8x128x128xf32>
    %83 = arith.mulf %81, %82 : vector<8x128x128xf32>
    %84 = tpu.iota {dimensions = array<i32: 1>} : vector<1x128xi32>
    %c0_i32_33 = arith.constant 0 : i32
    %85 = vector.broadcast %c0_i32_33 : i32 to vector<1x128xi32>
    %86 = arith.addi %84, %85 : vector<1x128xi32>
    %c32_i32_34 = arith.constant 32 : i32
    %87 = vector.broadcast %c32_i32_34 : i32 to vector<1x128xi32>
    %88 = arith.cmpi slt, %86, %87 : vector<1x128xi32>
    %89 = vector.shape_cast %88 : vector<1x128xi1> to vector<1x1x128xi1>
    %cst_35 = arith.constant 0xFF800000 : f32
    %90 = vector.shape_cast %89 : vector<1x1x128xi1> to vector<1x1x128xi1>
    %91 = vector.broadcast %90 : vector<1x1x128xi1> to vector<8x128x128xi1>
    %92 = vector.broadcast %cst_35 : f32 to vector<8x128x128xf32>
    %93 = arith.select %91, %83, %92 : vector<8x128x128xi1>, vector<8x128x128xf32>
    %cst_36 = arith.constant dense<0xFF800000> : vector<8x128xf32>
    %94 = vector.multi_reduction <maximumf>, %93, %cst_36 [2] : vector<8x128x128xf32> to vector<8x128xf32>
    %95 = arith.maximumf %78, %94 : vector<8x128xf32>
    %cst_37 = arith.constant 8.000000e-01 : f32
    %96 = vector.broadcast %cst_37 : f32 to vector<8x128xf32>
    %97 = arith.mulf %96, %77 : vector<8x128xf32>
    %cst_38 = arith.constant 2.000000e-01 : f32
    %98 = vector.broadcast %cst_38 : f32 to vector<8x128xf32>
    %99 = arith.mulf %98, %95 : vector<8x128xf32>
    %100 = arith.addf %97, %99 : vector<8x128xf32>
    %101 = vector.broadcast %76 : vector<1x128xf32> to vector<8x128xf32>
    %102 = arith.addf %100, %101 : vector<8x128xf32>
    %103 = tpu.iota {dimensions = array<i32: 1>} : vector<1x128xi32>
    %c1_i32 = arith.constant 1 : i32
    %104 = vector.broadcast %c1_i32 : i32 to vector<1x128xi32>
    %105 = arith.cmpi slt, %103, %104 : vector<1x128xi32>
    %cst_39 = arith.constant 0.000000e+00 : f32
    %106 = vector.shape_cast %105 : vector<1x128xi1> to vector<1x128xi1>
    %107 = vector.broadcast %106 : vector<1x128xi1> to vector<8x128xi1>
    %108 = vector.broadcast %cst_39 : f32 to vector<8x128xf32>
    %109 = arith.select %107, %102, %108 : vector<8x128xi1>, vector<8x128xf32>
    %c0_40 = arith.constant 0 : index
    %c0_41 = arith.constant 0 : index
    %110 = vector.load %arg8[%c0_40, %c0_41] : memref<8x128xf32, #tpu.memory_space<vmem>>, vector<8x128xf32>
    tpu.vector_store %arg8[%c0_40, %c0_41], %109 {strides = array<i32>} : memref<8x128xf32, #tpu.memory_space<vmem>>, vector<8x128xf32>,
    return
  }
  func.func @transform_0(%arg0: i32) -> (i32, i32) {
    %c0_i32 = arith.constant 0 : i32
    %c0_i32_0 = arith.constant 0 : i32
    return %arg0, %c0_i32 : i32, i32
  }
  func.func @transform_1(%arg0: i32) -> (i32, i32) {
    %c0_i32 = arith.constant 0 : i32
    %c0_i32_0 = arith.constant 0 : i32
    %c0_i32_1 = arith.constant 0 : i32
    return %c0_i32, %c0_i32_0 : i32, i32
  }
  func.func @transform_2(%arg0: i32) -> (i32, i32) {
    %c0_i32 = arith.constant 0 : i32
    %c0_i32_0 = arith.constant 0 : i32
    %c0_i32_1 = arith.constant 0 : i32
    return %c0_i32, %c0_i32_0 : i32, i32
  }
  func.func @transform_3(%arg0: i32) -> (i32, i32) {
    %c0_i32 = arith.constant 0 : i32
    %c0_i32_0 = arith.constant 0 : i32
    %c0_i32_1 = arith.constant 0 : i32
    return %c0_i32, %c0_i32_0 : i32, i32
  }
  func.func @transform_4(%arg0: i32) -> (i32, i32) {
    %c0_i32 = arith.constant 0 : i32
    %c0_i32_0 = arith.constant 0 : i32
    %c0_i32_1 = arith.constant 0 : i32
    return %c0_i32, %c0_i32_0 : i32, i32
  }
  func.func @transform_5(%arg0: i32) -> (i32, i32) {
    %c0_i32 = arith.constant 0 : i32
    %c0_i32_0 = arith.constant 0 : i32
    %c0_i32_1 = arith.constant 0 : i32
    return %c0_i32, %c0_i32_0 : i32, i32
  }
  func.func @transform_6(%arg0: i32) -> (i32, i32) {
    %c0_i32 = arith.constant 0 : i32
    %c0_i32_0 = arith.constant 0 : i32
    %c0_i32_1 = arith.constant 0 : i32
    return %c0_i32, %c0_i32_0 : i32, i32
  }
  func.func @transform_7(%arg0: i32) -> (i32, i32) {
    %c0_i32 = arith.constant 0 : i32
    %c0_i32_0 = arith.constant 0 : i32
    return %arg0, %c0_i32 : i32, i32
  }
}

</mosaic_0001>

<llo_original>
// kernel: _forward_host.1
$region0: #{_forward_host.1}
  #allocation0 [shape = 'u32[]', space=smem, size = 0x4, offset = 0x4, fixed_abs, tag = 'smem constant byte address 0x4 - core index']
  #allocation1 [shape = 'u32[144,128]{1,0:T(1,128)}', space=vmem, size = 0x12000, scoped, tag = 'internal scratch']
  %s0 = inlined_call_operand.vmem [shape: f32[8,128], index: 0, kind: input, shape index: {}]
  %s1 = inlined_call_operand.hbm [shape: f32[128,128], index: 1, kind: input, shape index: {}]
  %s2 = inlined_call_operand.vmem [shape: f32[1,128], index: 2, kind: input, shape index: {}]
  %s3 = inlined_call_operand.hbm [shape: f32[128,128], index: 3, kind: input, shape index: {}]
  %s4 = inlined_call_operand.vmem [shape: f32[1,128], index: 4, kind: input, shape index: {}]
  %s5 = inlined_call_operand.hbm [shape: f32[128,128], index: 5, kind: input, shape index: {}]
  %s6 = inlined_call_operand.vmem [shape: f32[1,128], index: 6, kind: input, shape index: {}]
  %s7 = inlined_call_operand.vmem [shape: f32[8,128], index: 7, kind: output, shape index: {}]
  %s8 = sld [smem:[#allocation0]]
  $region50: #{_forward_host.1} parent=0
    _
  %s10 = ssub.s32 1, %s8
  %s11 = scalar_select 0, %s10, %s8
  $region1: #{_forward_host.1} parent=0
    #allocation2 [shape = 'u8[65536]{0}', space=vmem, size = 0x10000, scoped, tag = 'input window, operand 1, single buffered']
    #allocation3 [shape = 's32[1]{0}', space=sflag, size = 0x4, scoped, tag = 'scoped memory for _forward_host.1']
    #allocation4 [shape = 'u8[65536]{0}', space=vmem, size = 0x10000, scoped, tag = 'input window, operand 3, single buffered']
    #allocation5 [shape = 's32[1]{0}', space=sflag, size = 0x4, scoped, tag = 'scoped memory for _forward_host.1']
    #allocation6 [shape = 'u8[65536]{0}', space=vmem, size = 0x10000, scoped, tag = 'input window, operand 5, single buffered']
    %12 = vsyncpa [#allocation3], 0
    %13 = vsyncpa [#allocation5], 0
    // Predicated region
    $region2: #{_forward_host.1} parent=1 // pred_check
      _
    $region3: #{_forward_host.1} parent=1 // pred_check_branch
      %15 = sbr.rel (0) target = $region5
    $region4: #{_forward_host.1} parent=1 // pred_region
      _
    $region5: #{_forward_host.1} parent=1 // pred_fallthru
      _
    // Predicated region
    $region6: #{_forward_host.1} parent=1 // pred_check
      _
    $region7: #{_forward_host.1} parent=1 // pred_check_branch
      %17 = sbr.rel (0) target = $region9
    $region8: #{_forward_host.1} parent=1 // pred_region
      %s19 = ssub.s32 2048, 2048
      %20 = vsyncadd [#allocation3], %s19
      %s21 = sshll.u32 [#allocation2], 4
      %s22 = int_to_ptr.vmem [resolvable:$true] %s21
      %27 = dma.hbm_to_vmem [thread:$0]  %s1, 2048, %s22, [#allocation3], 128, 128, 8
    $region9: #{_forward_host.1} parent=1 // pred_fallthru
      _
    // Predicated region
    $region10: #{_forward_host.1} parent=1 // pred_check
      _
    $region11: #{_forward_host.1} parent=1 // pred_check_branch
      %29 = sbr.rel (0) target = $region13
    $region12: #{_forward_host.1} parent=1 // pred_region
      _
    $region13: #{_forward_host.1} parent=1 // pred_fallthru
      _
    // Predicated region
    $region14: #{_forward_host.1} parent=1 // pred_check
      _
    $region15: #{_forward_host.1} parent=1 // pred_check_branch
      %31 = sbr.rel (0) target = $region17
    $region16: #{_forward_host.1} parent=1 // pred_region
      %s33 = ssub.s32 2048, 2048
      %34 = vsyncadd [#allocation5], %s33
      %s35 = sshll.u32 [#allocation4], 4
      %s36 = int_to_ptr.vmem [resolvable:$true] %s35
      %41 = dma.hbm_to_vmem [thread:$0]  %s3, 2048, %s36, [#allocation5], 128, 128, 8
    $region17: #{_forward_host.1} parent=1 // pred_fallthru
      _
    // Predicated region
    $region18: #{_forward_host.1} parent=1 // pred_check
      _
    $region19: #{_forward_host.1} parent=1 // pred_check_branch
      %43 = sbr.rel (0) target = $region21
    $region20: #{_forward_host.1} parent=1 // pred_region
      _
    $region21: #{_forward_host.1} parent=1 // pred_fallthru
      _
    // Predicated region
    $region22: #{_forward_host.1} parent=1 // pred_check
      _
    $region23: #{_forward_host.1} parent=1 // pred_check_branch
      %45 = sbr.rel (0) target = $region25
    $region24: #{_forward_host.1} parent=1 // pred_region
      %s47 = ssub.s32 2048, 2048
      %48 = vsyncadd [#allocation5], %s47
      %s49 = sshll.u32 [#allocation6], 4
      %s50 = int_to_ptr.vmem [resolvable:$true] %s49
      %55 = dma.hbm_to_vmem [thread:$0]  %s5, 2048, %s50, [#allocation5], 128, 128, 8
    $region25: #{_forward_host.1} parent=1 // pred_fallthru
      _
    // Predicated region
    $region26: #{_forward_host.1} parent=1 // pred_check
      _
    $region27: #{_forward_host.1} parent=1 // pred_check_branch
      %57 = sbr.rel (0) target = $region29
    $region28: #{_forward_host.1} parent=1 // pred_region
      _
    $region29: #{_forward_host.1} parent=1 // pred_fallthru
      _
    // Predicated region
    $region30: #{_forward_host.1} parent=1 // pred_check
      _
    $region31: #{_forward_host.1} parent=1 // pred_check_branch
      %59 = sbr.rel (0) target = $region33
    $region32: #{_forward_host.1} parent=1 // pred_region
      %60 = dma.done [#allocation3], 2048
    $region33: #{_forward_host.1} parent=1 // pred_fallthru
      _
    // Predicated region
    $region34: #{_forward_host.1} parent=1 // pred_check
      _
    $region35: #{_forward_host.1} parent=1 // pred_check_branch
      %62 = sbr.rel (0) target = $region37
    $region36: #{_forward_host.1} parent=1 // pred_region
      %63 = dma.done [#allocation5], 2048
    $region37: #{_forward_host.1} parent=1 // pred_fallthru
      _
    // Predicated region
    $region38: #{_forward_host.1} parent=1 // pred_check
      _
    $region39: #{_forward_host.1} parent=1 // pred_check_branch
      %65 = sbr.rel (0) target = $region41
    $region40: #{_forward_host.1} parent=1 // pred_region
      %66 = dma.done [#allocation5], 2048
    $region41: #{_forward_host.1} parent=1 // pred_fallthru
      _
    %v67 = vld [vmem:[%s0] sm:$0xff]
    %v68 = vld [vmem:[#allocation2] sm:$0xff]
    %v69 = vld [vmem:[#allocation2 + $0x8] sm:$0xff]
    %v70 = vld [vmem:[#allocation2 + $0x10] sm:$0xff]
    %v71 = vld [vmem:[#allocation2 + $0x18] sm:$0xff]
    %v72 = vld [vmem:[#allocation2 + $0x20] sm:$0xff]
    %v73 = vld [vmem:[#allocation2 + $0x28] sm:$0xff]
    %v74 = vld [vmem:[#allocation2 + $0x30] sm:$0xff]
    %v75 = vld [vmem:[#allocation2 + $0x38] sm:$0xff]
    %v76 = vld [vmem:[#allocation2 + $0x40] sm:$0xff]
    %v77 = vld [vmem:[#allocation2 + $0x48] sm:$0xff]
    %v78 = vld [vmem:[#allocation2 + $0x50] sm:$0xff]
    %v79 = vld [vmem:[#allocation2 + $0x58] sm:$0xff]
    %v80 = vld [vmem:[#allocation2 + $0x60] sm:$0xff]
    %v81 = vld [vmem:[#allocation2 + $0x68] sm:$0xff]
    %v82 = vld [vmem:[#allocation2 + $0x70] sm:$0xff]
    %v83 = vld [vmem:[#allocation2 + $0x78] sm:$0xff]
    %v84 = vld [vmem:[%s2] sm:$0x1]
    %85 = vmatprep.subr.mxu0 0.0
    %86 = vmatpush1.xpose.msra.mxu0 %v68
    %87 = vmatprep.subr.mxu0 0.0
    %88 = vmatpush1.xpose.msra.mxu0 %v69
    %89 = vmatprep.subr.mxu0 0.0
    %90 = vmatpush1.xpose.msra.mxu0 %v70
    %91 = vmatprep.subr.mxu0 0.0
    %92 = vmatpush1.xpose.msra.mxu0 %v71
    %93 = vmatprep.subr.mxu0 0.0
    %94 = vmatpush1.xpose.msra.mxu0 %v72
    %95 = vmatprep.subr.mxu0 0.0
    %96 = vmatpush1.xpose.msra.mxu0 %v73
    %97 = vmatprep.subr.mxu0 0.0
    %98 = vmatpush1.xpose.msra.mxu0 %v74
    %99 = vmatprep.subr.mxu0 0.0
    %100 = vmatpush1.xpose.msra.mxu0 %v75
    %101 = vmatprep.subr.mxu0 0.0
    %102 = vmatpush1.xpose.msra.mxu0 %v76
    %103 = vmatprep.subr.mxu0 0.0
    %104 = vmatpush1.xpose.msra.mxu0 %v77
    %105 = vmatprep.subr.mxu0 0.0
    %106 = vmatpush1.xpose.msra.mxu0 %v78
    %107 = vmatprep.subr.mxu0 0.0
    %108 = vmatpush1.xpose.msra.mxu0 %v79
    %109 = vmatprep.subr.mxu0 0.0
    %110 = vmatpush1.xpose.msra.mxu0 %v80
    %111 = vmatprep.subr.mxu0 0.0
    %112 = vmatpush1.xpose.msra.mxu0 %v81
    %113 = vmatprep.subr.mxu0 0.0
    %114 = vmatpush1.xpose.msra.mxu0 %v82
    %115 = vmatprep.subr.mxu0 0.0
    %116 = vmatpush1.xpose.msra.mxu0 %v83
    %117 = vmatprep.subr.mxu0 0.0
    %118 = vmatpush1.xpose.msra.mxu0 0.0
    %119 = vmatprep.subr.mxu0 0.0
    %120 = vmatpush1.xpose.msra.mxu0 0.0
    %121 = vmatprep.subr.mxu0 0.0
    %122 = vmatpush1.xpose.msra.mxu0 0.0
    %123 = vmatprep.subr.mxu0 0.0
    %124 = vmatpush1.xpose.msra.mxu0 0.0
    %125 = vmatprep.subr.mxu0 0.0
    %126 = vmatpush1.xpose.msra.mxu0 0.0
    %127 = vmatprep.subr.mxu0 0.0
    %128 = vmatpush1.xpose.msra.mxu0 0.0
    %129 = vmatprep.subr.mxu0 0.0
    %130 = vmatpush1.xpose.msra.mxu0 0.0
    %131 = vmatprep.subr.mxu0 0.0
    %132 = vmatpush1.xpose.msra.mxu0 0.0
    %133 = vmatprep.subr.mxu0 0.0
    %134 = vmatpush1.xpose.msra.mxu0 0.0
    %135 = vmatprep.subr.mxu0 0.0
    %136 = vmatpush1.xpose.msra.mxu0 0.0
    %137 = vmatprep.subr.mxu0 0.0
    %138 = vmatpush1.xpose.msra.mxu0 0.0
    %139 = vmatprep.subr.mxu0 0.0
    %140 = vmatpush1.xpose.msra.mxu0 0.0
    %141 = vmatprep.subr.mxu0 0.0
    %142 = vmatpush1.xpose.msra.mxu0 0.0
    %143 = vmatprep.subr.mxu0 0.0
    %144 = vmatpush1.xpose.msra.mxu0 0.0
    %145 = vmatprep.subr.mxu0 0.0
    %146 = vmatpush1.xpose.msra.mxu0 0.0
    %147 = vmatprep.subr.mxu0 0.0
    %148 = vmatpush1.xpose.msra.mxu0 0.0
    %149 = vmatprep.mubr.f32.mxu0 0.0
    %150 = vmatmul.mubr.f32.gmra.mrb[0].mxu0 %v67
    %v151 = vpop.f32.mrb[0].mxu0
    %v152 = vadd.f32 0.0, %v151
    %v153 = vpop.f32.mrb[0].mxu0
    %154 = vdwg.mxu0
    %v156 = vcombine.high %v67, %v67
    %v158 = vunpack.c.l.s4 1966171168
    %v159 = vunpack.c.0.s8 %v158
    %v160 = vlaneseq
    %v161 = vshrl.u32 %v160, 7
    %v162 = vsub.s32 %v159, %v161
    %v163 = vrot.slane %v67, %v162
    %v165 = vunpack.c.l.s4 1966171168
    %v166 = vunpack.c.0.s8 %v165
    %v167 = vlaneseq
    %v168 = vshrl.u32 %v167, 7
    %v169 = vsub.s32 %v166, %v168
    %v170 = vrot.slane %v156, %v169
    %v171 = vcombine.high %v163, %v163
    %v172 = vcombine.high %v170, %v170
    %v174 = vunpack.c.l.s4 1966171168
    %v175 = vunpack.c.0.s8 %v174
    %v176 = vlaneseq
    %v177 = vshrl.u32 %v176, 7
    %v178 = vsub.s32 %v175, %v177
    %v179 = vrot.slane %v163, %v178
    %v181 = vunpack.c.l.s4 1966171168
    %v182 = vunpack.c.0.s8 %v181
    %v183 = vlaneseq
    %v184 = vshrl.u32 %v183, 7
    %v185 = vsub.s32 %v182, %v184
    %v186 = vrot.slane %v170, %v185
    %v188 = vunpack.c.l.s4 1966171168
    %v189 = vunpack.c.0.s8 %v188
    %v190 = vlaneseq
    %v191 = vshrl.u32 %v190, 7
    %v192 = vsub.s32 %v189, %v191
    %v193 = vrot.slane %v171, %v192
    %v195 = vunpack.c.l.s4 1966171168
    %v196 = vunpack.c.0.s8 %v195
    %v197 = vlaneseq
    %v198 = vshrl.u32 %v197, 7
    %v199 = vsub.s32 %v196, %v198
    %v200 = vrot.slane %v172, %v199
    %v201 = vcombine.high %v179, %v179
    %v202 = vcombine.high %v186, %v186
    %v203 = vcombine.high %v193, %v193
    %v204 = vcombine.high %v200, %v200
    %v205 = vlaneseq
    %v206 = vshrl.u32 %v205, 7
    %v207 = vsub.s32 0, %v206
    %v208 = vrot.slane %v179, %v207
    %v209 = vlaneseq
    %v210 = vshrl.u32 %v209, 7
    %v211 = vsub.s32 0, %v210
    %v212 = vrot.slane %v193, %v211
    %v213 = vlaneseq
    %v214 = vshrl.u32 %v213, 7
    %v215 = vsub.s32 0, %v214
    %v216 = vrot.slane %v201, %v215
    %v217 = vlaneseq
    %v218 = vshrl.u32 %v217, 7
    %v219 = vsub.s32 0, %v218
    %v220 = vrot.slane %v203, %v219
    %v221 = vlaneseq
    %v222 = vshrl.u32 %v221, 7
    %v223 = vsub.s32 0, %v222
    %v224 = vrot.slane %v186, %v223
    %v225 = vlaneseq
    %v226 = vshrl.u32 %v225, 7
    %v227 = vsub.s32 0, %v226
    %v228 = vrot.slane %v200, %v227
    %v229 = vlaneseq
    %v230 = vshrl.u32 %v229, 7
    %v231 = vsub.s32 0, %v230
    %v232 = vrot.slane %v202, %v231
    %v233 = vlaneseq
    %v234 = vshrl.u32 %v233, 7
    %v235 = vsub.s32 0, %v234
    %v236 = vrot.slane %v204, %v235
    %v245 = vmul.f32 %v208, %v68
    %v246 = vmul.f32 %v208, %v69
    %v247 = vmul.f32 %v208, %v70
    %v248 = vmul.f32 %v208, %v71
    %v249 = vmul.f32 %v208, %v72
    %v250 = vmul.f32 %v208, %v73
    %v251 = vmul.f32 %v208, %v74
    %v252 = vmul.f32 %v208, %v75
    %v253 = vmul.f32 %v208, %v76
    %v254 = vmul.f32 %v208, %v77
    %v255 = vmul.f32 %v208, %v78
    %v256 = vmul.f32 %v208, %v79
    %v257 = vmul.f32 %v208, %v80
    %v258 = vmul.f32 %v208, %v81
    %v259 = vmul.f32 %v208, %v82
    %v260 = vmul.f32 %v208, %v83
    %v261 = vmul.f32 %v212, %v68
    %v262 = vmul.f32 %v212, %v69
    %v263 = vmul.f32 %v212, %v70
    %v264 = vmul.f32 %v212, %v71
    %v265 = vmul.f32 %v212, %v72
    %v266 = vmul.f32 %v212, %v73
    %v267 = vmul.f32 %v212, %v74
    %v268 = vmul.f32 %v212, %v75
    %v269 = vmul.f32 %v212, %v76
    %v270 = vmul.f32 %v212, %v77
    %v271 = vmul.f32 %v212, %v78
    %v272 = vmul.f32 %v212, %v79
    %v273 = vmul.f32 %v212, %v80
    %v274 = vmul.f32 %v212, %v81
    %v275 = vmul.f32 %v212, %v82
    %v276 = vmul.f32 %v212, %v83
    %v277 = vmul.f32 %v216, %v68
    %v278 = vmul.f32 %v216, %v69
    %v279 = vmul.f32 %v216, %v70
    %v280 = vmul.f32 %v216, %v71
    %v281 = vmul.f32 %v216, %v72
    %v282 = vmul.f32 %v216, %v73
    %v283 = vmul.f32 %v216, %v74
    %v284 = vmul.f32 %v216, %v75
    %v285 = vmul.f32 %v216, %v76
    %v286 = vmul.f32 %v216, %v77
    %v287 = vmul.f32 %v216, %v78
    %v288 = vmul.f32 %v216, %v79
    %v289 = vmul.f32 %v216, %v80
    %v290 = vmul.f32 %v216, %v81
    %v291 = vmul.f32 %v216, %v82
    %v292 = vmul.f32 %v216, %v83
    %v293 = vmul.f32 %v220, %v68
    %v294 = vmul.f32 %v220, %v69
    %v295 = vmul.f32 %v220, %v70
    %v296 = vmul.f32 %v220, %v71
    %v297 = vmul.f32 %v220, %v72
    %v298 = vmul.f32 %v220, %v73
    %v299 = vmul.f32 %v220, %v74
    %v300 = vmul.f32 %v220, %v75
    %v301 = vmul.f32 %v220, %v76
    %v302 = vmul.f32 %v220, %v77
    %v303 = vmul.f32 %v220, %v78
    %v304 = vmul.f32 %v220, %v79
    %v305 = vmul.f32 %v220, %v80
    %v306 = vmul.f32 %v220, %v81
    %v307 = vmul.f32 %v220, %v82
    %v308 = vmul.f32 %v220, %v83
    %v309 = vmul.f32 %v224, %v68
    %v310 = vmul.f32 %v224, %v69
    %v311 = vmul.f32 %v224, %v70
    %v312 = vmul.f32 %v224, %v71
    %v313 = vmul.f32 %v224, %v72
    %v314 = vmul.f32 %v224, %v73
    %v315 = vmul.f32 %v224, %v74
    %v316 = vmul.f32 %v224, %v75
    %v317 = vmul.f32 %v224, %v76
    %v318 = vmul.f32 %v224, %v77
    %v319 = vmul.f32 %v224, %v78
    %v320 = vmul.f32 %v224, %v79
    %v321 = vmul.f32 %v224, %v80
    %v322 = vmul.f32 %v224, %v81
    %v323 = vmul.f32 %v224, %v82
    %v324 = vmul.f32 %v224, %v83
    %v325 = vmul.f32 %v228, %v68
    %v326 = vmul.f32 %v228, %v69
    %v327 = vmul.f32 %v228, %v70
    %v328 = vmul.f32 %v228, %v71
    %v329 = vmul.f32 %v228, %v72
    %v330 = vmul.f32 %v228, %v73
    %v331 = vmul.f32 %v228, %v74
    %v332 = vmul.f32 %v228, %v75
    %v333 = vmul.f32 %v228, %v76
    %v334 = vmul.f32 %v228, %v77
    %v335 = vmul.f32 %v228, %v78
    %v336 = vmul.f32 %v228, %v79
    %v337 = vmul.f32 %v228, %v80
    %v338 = vmul.f32 %v228, %v81
    %v339 = vmul.f32 %v228, %v82
    %v340 = vmul.f32 %v228, %v83
    %v341 = vmul.f32 %v232, %v68
    %v342 = vmul.f32 %v232, %v69
    %v343 = vmul.f32 %v232, %v70
    %v344 = vmul.f32 %v232, %v71
    %v345 = vmul.f32 %v232, %v72
    %v346 = vmul.f32 %v232, %v73
    %v347 = vmul.f32 %v232, %v74
    %v348 = vmul.f32 %v232, %v75
    %v349 = vmul.f32 %v232, %v76
    %v350 = vmul.f32 %v232, %v77
    %v351 = vmul.f32 %v232, %v78
    %v352 = vmul.f32 %v232, %v79
    %v353 = vmul.f32 %v232, %v80
    %v354 = vmul.f32 %v232, %v81
    %v355 = vmul.f32 %v232, %v82
    %v356 = vmul.f32 %v232, %v83
    %v357 = vmul.f32 %v236, %v68
    %v358 = vmul.f32 %v236, %v69
    %v359 = vmul.f32 %v236, %v70
    %v360 = vmul.f32 %v236, %v71
    %v361 = vmul.f32 %v236, %v72
    %v362 = vmul.f32 %v236, %v73
    %v363 = vmul.f32 %v236, %v74
    %v364 = vmul.f32 %v236, %v75
    %v365 = vmul.f32 %v236, %v76
    %v366 = vmul.f32 %v236, %v77
    %v367 = vmul.f32 %v236, %v78
    %v368 = vmul.f32 %v236, %v79
    %v369 = vmul.f32 %v236, %v80
    %v370 = vmul.f32 %v236, %v81
    %v371 = vmul.f32 %v236, %v82
    %v372 = vmul.f32 %v236, %v83
    %v373 = vlaneseq
    %v374 = vand.u32 %v373, 127
    %vm375 = vcmp.lt.s32.totalorder %v374, 16
    %v376 = vsel %vm375, 1, 0
    %vm377 = vcmp.eq.s32.totalorder %v376, 1
    %v378 = vsel %vm377, %v245, -inf
    %v379 = vsel %vm377, %v246, -inf
    %v380 = vsel %vm377, %v247, -inf
    %v381 = vsel %vm377, %v248, -inf
    %v382 = vsel %vm377, %v249, -inf
    %v383 = vsel %vm377, %v250, -inf
    %v384 = vsel %vm377, %v251, -inf
    %v385 = vsel %vm377, %v252, -inf
    %v386 = vsel %vm377, %v253, -inf
    %v387 = vsel %vm377, %v254, -inf
    %v388 = vsel %vm377, %v255, -inf
    %v389 = vsel %vm377, %v256, -inf
    %v390 = vsel %vm377, %v257, -inf
    %v391 = vsel %vm377, %v258, -inf
    %v392 = vsel %vm377, %v259, -inf
    %v393 = vsel %vm377, %v260, -inf
    %v394 = vsel %vm377, %v261, -inf
    %v395 = vsel %vm377, %v262, -inf
    %v396 = vsel %vm377, %v263, -inf
    %v397 = vsel %vm377, %v264, -inf
    %v398 = vsel %vm377, %v265, -inf
    %v399 = vsel %vm377, %v266, -inf
    %v400 = vsel %vm377, %v267, -inf
    %v401 = vsel %vm377, %v268, -inf
    %v402 = vsel %vm377, %v269, -inf
    %v403 = vsel %vm377, %v270, -inf
    %v404 = vsel %vm377, %v271, -inf
    %v405 = vsel %vm377, %v272, -inf
    %v406 = vsel %vm377, %v273, -inf
    %v407 = vsel %vm377, %v274, -inf
    %v408 = vsel %vm377, %v275, -inf
    %v409 = vsel %vm377, %v276, -inf
    %v410 = vsel %vm377, %v277, -inf
    %v411 = vsel %vm377, %v278, -inf
    %v412 = vsel %vm377, %v279, -inf
    %v413 = vsel %vm377, %v280, -inf
    %v414 = vsel %vm377, %v281, -inf
    %v415 = vsel %vm377, %v282, -inf
    %v416 = vsel %vm377, %v283, -inf
    %v417 = vsel %vm377, %v284, -inf
    %v418 = vsel %vm377, %v285, -inf
    %v419 = vsel %vm377, %v286, -inf
    %v420 = vsel %vm377, %v287, -inf
    %v421 = vsel %vm377, %v288, -inf
    %v422 = vsel %vm377, %v289, -inf
    %v423 = vsel %vm377, %v290, -inf
    %v424 = vsel %vm377, %v291, -inf
    %v425 = vsel %vm377, %v292, -inf
    %v426 = vsel %vm377, %v293, -inf
    %v427 = vsel %vm377, %v294, -inf
    %v428 = vsel %vm377, %v295, -inf
    %v429 = vsel %vm377, %v296, -inf
    %v430 = vsel %vm377, %v297, -inf
    %v431 = vsel %vm377, %v298, -inf
    %v432 = vsel %vm377, %v299, -inf
    %v433 = vsel %vm377, %v300, -inf
    %v434 = vsel %vm377, %v301, -inf
    %v435 = vsel %vm377, %v302, -inf
    %v436 = vsel %vm377, %v303, -inf
    %v437 = vsel %vm377, %v304, -inf
    %v438 = vsel %vm377, %v305, -inf
    %v439 = vsel %vm377, %v306, -inf
    %v440 = vsel %vm377, %v307, -inf
    %v441 = vsel %vm377, %v308, -inf
    %v442 = vsel %vm377, %v309, -inf
    %v443 = vsel %vm377, %v310, -inf
    %v444 = vsel %vm377, %v311, -inf
    %v445 = vsel %vm377, %v312, -inf
    %v446 = vsel %vm377, %v313, -inf
    %v447 = vsel %vm377, %v314, -inf
    %v448 = vsel %vm377, %v315, -inf
    %v449 = vsel %vm377, %v316, -inf
    %v450 = vsel %vm377, %v317, -inf
    %v451 = vsel %vm377, %v318, -inf
    %v452 = vsel %vm377, %v319, -inf
    %v453 = vsel %vm377, %v320, -inf
    %v454 = vsel %vm377, %v321, -inf
    %v455 = vsel %vm377, %v322, -inf
    %v456 = vsel %vm377, %v323, -inf
    %v457 = vsel %vm377, %v324, -inf
    %v458 = vsel %vm377, %v325, -inf
    %v459 = vsel %vm377, %v326, -inf
    %v460 = vsel %vm377, %v327, -inf
    %v461 = vsel %vm377, %v328, -inf
    %v462 = vsel %vm377, %v329, -inf
    %v463 = vsel %vm377, %v330, -inf
    %v464 = vsel %vm377, %v331, -inf
    %v465 = vsel %vm377, %v332, -inf
    %v466 = vsel %vm377, %v333, -inf
    %v467 = vsel %vm377, %v334, -inf
    %v468 = vsel %vm377, %v335, -inf
    %v469 = vsel %vm377, %v336, -inf
    %v470 = vsel %vm377, %v337, -inf
    %v471 = vsel %vm377, %v338, -inf
    %v472 = vsel %vm377, %v339, -inf
    %v473 = vsel %vm377, %v340, -inf
    %v474 = vsel %vm377, %v341, -inf
    %v475 = vsel %vm377, %v342, -inf
    %v476 = vsel %vm377, %v343, -inf
    %v477 = vsel %vm377, %v344, -inf
    %v478 = vsel %vm377, %v345, -inf
    %v479 = vsel %vm377, %v346, -inf
    %v480 = vsel %vm377, %v347, -inf
    %v481 = vsel %vm377, %v348, -inf
    %v482 = vsel %vm377, %v349, -inf
    %v483 = vsel %vm377, %v350, -inf
    %v484 = vsel %vm377, %v351, -inf
    %v485 = vsel %vm377, %v352, -inf
    %v486 = vsel %vm377, %v353, -inf
    %v487 = vsel %vm377, %v354, -inf
    %v488 = vsel %vm377, %v355, -inf
    %v489 = vsel %vm377, %v356, -inf
    %v490 = vsel %vm377, %v357, -inf
    %v491 = vsel %vm377, %v358, -inf
    %v492 = vsel %vm377, %v359, -inf
    %v493 = vsel %vm377, %v360, -inf
    %v494 = vsel %vm377, %v361, -inf
    %v495 = vsel %vm377, %v362, -inf
    %v496 = vsel %vm377, %v363, -inf
    %v497 = vsel %vm377, %v364, -inf
    %v498 = vsel %vm377, %v365, -inf
    %v499 = vsel %vm377, %v366, -inf
    %v500 = vsel %vm377, %v367, -inf
    %v501 = vsel %vm377, %v368, -inf
    %v502 = vsel %vm377, %v369, -inf
    %v503 = vsel %vm377, %v370, -inf
    %v504 = vsel %vm377, %v371, -inf
    %v505 = vsel %vm377, %v372, -inf
    %506 = vmax.xlane.f32.xlu0 %v378
    %v507 = vpop.xlane.xlu0 %506
    %508 = vmax.xlane.f32.xlu0 %v379
    %v509 = vpop.xlane.xlu0 %508
    %510 = vmax.xlane.f32.xlu0 %v380
    %v511 = vpop.xlane.xlu0 %510
    %512 = vmax.xlane.f32.xlu0 %v381
    %v513 = vpop.xlane.xlu0 %512
    %514 = vmax.xlane.f32.xlu0 %v382
    %v515 = vpop.xlane.xlu0 %514
    %516 = vmax.xlane.f32.xlu0 %v383
    %v517 = vpop.xlane.xlu0 %516
    %518 = vmax.xlane.f32.xlu0 %v384
    %v519 = vpop.xlane.xlu0 %518
    %520 = vmax.xlane.f32.xlu0 %v385
    %v521 = vpop.xlane.xlu0 %520
    %522 = vmax.xlane.f32.xlu0 %v386
    %v523 = vpop.xlane.xlu0 %522
    %524 = vmax.xlane.f32.xlu0 %v387
    %v525 = vpop.xlane.xlu0 %524
    %526 = vmax.xlane.f32.xlu0 %v388
    %v527 = vpop.xlane.xlu0 %526
    %528 = vmax.xlane.f32.xlu0 %v389
    %v529 = vpop.xlane.xlu0 %528
    %530 = vmax.xlane.f32.xlu0 %v390
    %v531 = vpop.xlane.xlu0 %530
    %532 = vmax.xlane.f32.xlu0 %v391
    %v533 = vpop.xlane.xlu0 %532
    %534 = vmax.xlane.f32.xlu0 %v392
    %v535 = vpop.xlane.xlu0 %534
    %536 = vmax.xlane.f32.xlu0 %v393
    %v537 = vpop.xlane.xlu0 %536
    %538 = vmax.xlane.f32.xlu0 %v394
    %v539 = vpop.xlane.xlu0 %538
    %540 = vmax.xlane.f32.xlu0 %v395
    %v541 = vpop.xlane.xlu0 %540
    %542 = vmax.xlane.f32.xlu0 %v396
    %v543 = vpop.xlane.xlu0 %542
    %544 = vmax.xlane.f32.xlu0 %v397
    %v545 = vpop.xlane.xlu0 %544
    %546 = vmax.xlane.f32.xlu0 %v398
    %v547 = vpop.xlane.xlu0 %546
    %548 = vmax.xlane.f32.xlu0 %v399
    %v549 = vpop.xlane.xlu0 %548
    %550 = vmax.xlane.f32.xlu0 %v400
    %v551 = vpop.xlane.xlu0 %550
    %552 = vmax.xlane.f32.xlu0 %v401
    %v553 = vpop.xlane.xlu0 %552
    %554 = vmax.xlane.f32.xlu0 %v402
    %v555 = vpop.xlane.xlu0 %554
    %556 = vmax.xlane.f32.xlu0 %v403
    %v557 = vpop.xlane.xlu0 %556
    %558 = vmax.xlane.f32.xlu0 %v404
    %v559 = vpop.xlane.xlu0 %558
    %560 = vmax.xlane.f32.xlu0 %v405
    %v561 = vpop.xlane.xlu0 %560
    %562 = vmax.xlane.f32.xlu0 %v406
    %v563 = vpop.xlane.xlu0 %562
    %564 = vmax.xlane.f32.xlu0 %v407
    %v565 = vpop.xlane.xlu0 %564
    %566 = vmax.xlane.f32.xlu0 %v408
    %v567 = vpop.xlane.xlu0 %566
    %568 = vmax.xlane.f32.xlu0 %v409
    %v569 = vpop.xlane.xlu0 %568
    %570 = vmax.xlane.f32.xlu0 %v410
    %v571 = vpop.xlane.xlu0 %570
    %572 = vmax.xlane.f32.xlu0 %v411
    %v573 = vpop.xlane.xlu0 %572
    %574 = vmax.xlane.f32.xlu0 %v412
    %v575 = vpop.xlane.xlu0 %574
    %576 = vmax.xlane.f32.xlu0 %v413
    %v577 = vpop.xlane.xlu0 %576
    %578 = vmax.xlane.f32.xlu0 %v414
    %v579 = vpop.xlane.xlu0 %578
    %580 = vmax.xlane.f32.xlu0 %v415
    %v581 = vpop.xlane.xlu0 %580
    %582 = vmax.xlane.f32.xlu0 %v416
    %v583 = vpop.xlane.xlu0 %582
    %584 = vmax.xlane.f32.xlu0 %v417
    %v585 = vpop.xlane.xlu0 %584
    %586 = vmax.xlane.f32.xlu0 %v418
    %v587 = vpop.xlane.xlu0 %586
    %588 = vmax.xlane.f32.xlu0 %v419
    %v589 = vpop.xlane.xlu0 %588
    %590 = vmax.xlane.f32.xlu0 %v420
    %v591 = vpop.xlane.xlu0 %590
    %592 = vmax.xlane.f32.xlu0 %v421
    %v593 = vpop.xlane.xlu0 %592
    %594 = vmax.xlane.f32.xlu0 %v422
    %v595 = vpop.xlane.xlu0 %594
    %596 = vmax.xlane.f32.xlu0 %v423
    %v597 = vpop.xlane.xlu0 %596
    %598 = vmax.xlane.f32.xlu0 %v424
    %v599 = vpop.xlane.xlu0 %598
    %600 = vmax.xlane.f32.xlu0 %v425
    %v601 = vpop.xlane.xlu0 %600
    %602 = vmax.xlane.f32.xlu0 %v426
    %v603 = vpop.xlane.xlu0 %602
    %604 = vmax.xlane.f32.xlu0 %v427
    %v605 = vpop.xlane.xlu0 %604
    %606 = vmax.xlane.f32.xlu0 %v428
    %v607 = vpop.xlane.xlu0 %606
    %608 = vmax.xlane.f32.xlu0 %v429
    %v609 = vpop.xlane.xlu0 %608
    %610 = vmax.xlane.f32.xlu0 %v430
    %v611 = vpop.xlane.xlu0 %610
    %612 = vmax.xlane.f32.xlu0 %v431
    %v613 = vpop.xlane.xlu0 %612
    %614 = vmax.xlane.f32.xlu0 %v432
    %v615 = vpop.xlane.xlu0 %614
    %616 = vmax.xlane.f32.xlu0 %v433
    %v617 = vpop.xlane.xlu0 %616
    %618 = vmax.xlane.f32.xlu0 %v434
    %v619 = vpop.xlane.xlu0 %618
    %620 = vmax.xlane.f32.xlu0 %v435
    %v621 = vpop.xlane.xlu0 %620
    %622 = vmax.xlane.f32.xlu0 %v436
    %v623 = vpop.xlane.xlu0 %622
    %624 = vmax.xlane.f32.xlu0 %v437
    %v625 = vpop.xlane.xlu0 %624
    %626 = vmax.xlane.f32.xlu0 %v438
    %v627 = vpop.xlane.xlu0 %626
    %628 = vmax.xlane.f32.xlu0 %v439
    %v629 = vpop.xlane.xlu0 %628
    %630 = vmax.xlane.f32.xlu0 %v440
    %v631 = vpop.xlane.xlu0 %630
    %632 = vmax.xlane.f32.xlu0 %v441
    %v633 = vpop.xlane.xlu0 %632
    %634 = vmax.xlane.f32.xlu0 %v442
    %v635 = vpop.xlane.xlu0 %634
    %636 = vmax.xlane.f32.xlu0 %v443
    %v637 = vpop.xlane.xlu0 %636
    %638 = vmax.xlane.f32.xlu0 %v444
    %v639 = vpop.xlane.xlu0 %638
    %640 = vmax.xlane.f32.xlu0 %v445
    %v641 = vpop.xlane.xlu0 %640
    %642 = vmax.xlane.f32.xlu0 %v446
    %v643 = vpop.xlane.xlu0 %642
    %644 = vmax.xlane.f32.xlu0 %v447
    %v645 = vpop.xlane.xlu0 %644
    %646 = vmax.xlane.f32.xlu0 %v448
    %v647 = vpop.xlane.xlu0 %646
    %648 = vmax.xlane.f32.xlu0 %v449
    %v649 = vpop.xlane.xlu0 %648
    %650 = vmax.xlane.f32.xlu0 %v450
    %v651 = vpop.xlane.xlu0 %650
    %652 = vmax.xlane.f32.xlu0 %v451
    %v653 = vpop.xlane.xlu0 %652
    %654 = vmax.xlane.f32.xlu0 %v452
    %v655 = vpop.xlane.xlu0 %654
    %656 = vmax.xlane.f32.xlu0 %v453
    %v657 = vpop.xlane.xlu0 %656
    %658 = vmax.xlane.f32.xlu0 %v454
    %v659 = vpop.xlane.xlu0 %658
    %660 = vmax.xlane.f32.xlu0 %v455
    %v661 = vpop.xlane.xlu0 %660
    %662 = vmax.xlane.f32.xlu0 %v456
    %v663 = vpop.xlane.xlu0 %662
    %664 = vmax.xlane.f32.xlu0 %v457
    %v665 = vpop.xlane.xlu0 %664
    %666 = vmax.xlane.f32.xlu0 %v458
    %v667 = vpop.xlane.xlu0 %666
    %668 = vmax.xlane.f32.xlu0 %v459
    %v669 = vpop.xlane.xlu0 %668
    %670 = vmax.xlane.f32.xlu0 %v460
    %v671 = vpop.xlane.xlu0 %670
    %672 = vmax.xlane.f32.xlu0 %v461
    %v673 = vpop.xlane.xlu0 %672
    %674 = vmax.xlane.f32.xlu0 %v462
    %v675 = vpop.xlane.xlu0 %674
    %676 = vmax.xlane.f32.xlu0 %v463
    %v677 = vpop.xlane.xlu0 %676
    %678 = vmax.xlane.f32.xlu0 %v464
    %v679 = vpop.xlane.xlu0 %678
    %680 = vmax.xlane.f32.xlu0 %v465
    %v681 = vpop.xlane.xlu0 %680
    %682 = vmax.xlane.f32.xlu0 %v466
    %v683 = vpop.xlane.xlu0 %682
    %684 = vmax.xlane.f32.xlu0 %v467
    %v685 = vpop.xlane.xlu0 %684
    %686 = vmax.xlane.f32.xlu0 %v468
    %v687 = vpop.xlane.xlu0 %686
    %688 = vmax.xlane.f32.xlu0 %v469
    %v689 = vpop.xlane.xlu0 %688
    %690 = vmax.xlane.f32.xlu0 %v470
    %v691 = vpop.xlane.xlu0 %690
    %692 = vmax.xlane.f32.xlu0 %v471
    %v693 = vpop.xlane.xlu0 %692
    %694 = vmax.xlane.f32.xlu0 %v472
    %v695 = vpop.xlane.xlu0 %694
    %696 = vmax.xlane.f32.xlu0 %v473
    %v697 = vpop.xlane.xlu0 %696
    %698 = vmax.xlane.f32.xlu0 %v474
    %v699 = vpop.xlane.xlu0 %698
    %700 = vmax.xlane.f32.xlu0 %v475
    %v701 = vpop.xlane.xlu0 %700
    %702 = vmax.xlane.f32.xlu0 %v476
    %v703 = vpop.xlane.xlu0 %702
    %704 = vmax.xlane.f32.xlu0 %v477
    %v705 = vpop.xlane.xlu0 %704
    %706 = vmax.xlane.f32.xlu0 %v478
    %v707 = vpop.xlane.xlu0 %706
    %708 = vmax.xlane.f32.xlu0 %v479
    %v709 = vpop.xlane.xlu0 %708
    %710 = vmax.xlane.f32.xlu0 %v480
    %v711 = vpop.xlane.xlu0 %710
    %712 = vmax.xlane.f32.xlu0 %v481
    %v713 = vpop.xlane.xlu0 %712
    %714 = vmax.xlane.f32.xlu0 %v482
    %v715 = vpop.xlane.xlu0 %714
    %716 = vmax.xlane.f32.xlu0 %v483
    %v717 = vpop.xlane.xlu0 %716
    %718 = vmax.xlane.f32.xlu0 %v484
    %v719 = vpop.xlane.xlu0 %718
    %720 = vmax.xlane.f32.xlu0 %v485
    %v721 = vpop.xlane.xlu0 %720
    %722 = vmax.xlane.f32.xlu0 %v486
    %v723 = vpop.xlane.xlu0 %722
    %724 = vmax.xlane.f32.xlu0 %v487
    %v725 = vpop.xlane.xlu0 %724
    %726 = vmax.xlane.f32.xlu0 %v488
    %v727 = vpop.xlane.xlu0 %726
    %728 = vmax.xlane.f32.xlu0 %v489
    %v729 = vpop.xlane.xlu0 %728
    %730 = vmax.xlane.f32.xlu0 %v490
    %v731 = vpop.xlane.xlu0 %730
    %732 = vmax.xlane.f32.xlu0 %v491
    %v733 = vpop.xlane.xlu0 %732
    %734 = vmax.xlane.f32.xlu0 %v492
    %v735 = vpop.xlane.xlu0 %734
    %736 = vmax.xlane.f32.xlu0 %v493
    %v737 = vpop.xlane.xlu0 %736
    %738 = vmax.xlane.f32.xlu0 %v494
    %v739 = vpop.xlane.xlu0 %738
    %740 = vmax.xlane.f32.xlu0 %v495
    %v741 = vpop.xlane.xlu0 %740
    %742 = vmax.xlane.f32.xlu0 %v496
    %v743 = vpop.xlane.xlu0 %742
    %744 = vmax.xlane.f32.xlu0 %v497
    %v745 = vpop.xlane.xlu0 %744
    %746 = vmax.xlane.f32.xlu0 %v498
    %v747 = vpop.xlane.xlu0 %746
    %748 = vmax.xlane.f32.xlu0 %v499
    %v749 = vpop.xlane.xlu0 %748
    %750 = vmax.xlane.f32.xlu0 %v500
    %v751 = vpop.xlane.xlu0 %750
    %752 = vmax.xlane.f32.xlu0 %v501
    %v753 = vpop.xlane.xlu0 %752
    %754 = vmax.xlane.f32.xlu0 %v502
    %v755 = vpop.xlane.xlu0 %754
    %756 = vmax.xlane.f32.xlu0 %v503
    %v757 = vpop.xlane.xlu0 %756
    %758 = vmax.xlane.f32.xlu0 %v504
    %v759 = vpop.xlane.xlu0 %758
    %760 = vmax.xlane.f32.xlu0 %v505
    %v761 = vpop.xlane.xlu0 %760
    %v762 = vmul.f32 %v152, 0.8
    %v763 = vmul.f32 %v507, 0.2
    %v764 = vmul.f32 %v509, 0.2
    %v765 = vmul.f32 %v511, 0.2
    %v766 = vmul.f32 %v513, 0.2
    %v767 = vmul.f32 %v515, 0.2
    %v768 = vmul.f32 %v517, 0.2
    %v769 = vmul.f32 %v519, 0.2
    %v770 = vmul.f32 %v521, 0.2
    %v771 = vmul.f32 %v523, 0.2
    %v772 = vmul.f32 %v525, 0.2
    %v773 = vmul.f32 %v527, 0.2
    %v774 = vmul.f32 %v529, 0.2
    %v775 = vmul.f32 %v531, 0.2
    %v776 = vmul.f32 %v533, 0.2
    %v777 = vmul.f32 %v535, 0.2
    %v778 = vmul.f32 %v537, 0.2
    %v779 = vmul.f32 %v539, 0.2
    %v780 = vmul.f32 %v541, 0.2
    %v781 = vmul.f32 %v543, 0.2
    %v782 = vmul.f32 %v545, 0.2
    %v783 = vmul.f32 %v547, 0.2
    %v784 = vmul.f32 %v549, 0.2
    %v785 = vmul.f32 %v551, 0.2
    %v786 = vmul.f32 %v553, 0.2
    %v787 = vmul.f32 %v555, 0.2
    %v788 = vmul.f32 %v557, 0.2
    %v789 = vmul.f32 %v559, 0.2
    %v790 = vmul.f32 %v561, 0.2
    %v791 = vmul.f32 %v563, 0.2
    %v792 = vmul.f32 %v565, 0.2
    %v793 = vmul.f32 %v567, 0.2
    %v794 = vmul.f32 %v569, 0.2
    %v795 = vmul.f32 %v571, 0.2
    %v796 = vmul.f32 %v573, 0.2
    %v797 = vmul.f32 %v575, 0.2
    %v798 = vmul.f32 %v577, 0.2
    %v799 = vmul.f32 %v579, 0.2
    %v800 = vmul.f32 %v581, 0.2
    %v801 = vmul.f32 %v583, 0.2
    %v802 = vmul.f32 %v585, 0.2
    %v803 = vmul.f32 %v587, 0.2
    %v804 = vmul.f32 %v589, 0.2
    %v805 = vmul.f32 %v591, 0.2
    %v806 = vmul.f32 %v593, 0.2
    %v807 = vmul.f32 %v595, 0.2
    %v808 = vmul.f32 %v597, 0.2
    %v809 = vmul.f32 %v599, 0.2
    %v810 = vmul.f32 %v601, 0.2
    %v811 = vmul.f32 %v603, 0.2
    %v812 = vmul.f32 %v605, 0.2
    %v813 = vmul.f32 %v607, 0.2
    %v814 = vmul.f32 %v609, 0.2
    %v815 = vmul.f32 %v611, 0.2
    %v816 = vmul.f32 %v613, 0.2
    %v817 = vmul.f32 %v615, 0.2
    %v818 = vmul.f32 %v617, 0.2
    %v819 = vmul.f32 %v619, 0.2
    %v820 = vmul.f32 %v621, 0.2
    %v821 = vmul.f32 %v623, 0.2
    %v822 = vmul.f32 %v625, 0.2
    %v823 = vmul.f32 %v627, 0.2
    %v824 = vmul.f32 %v629, 0.2
    %v825 = vmul.f32 %v631, 0.2
    %v826 = vmul.f32 %v633, 0.2
    %v827 = vmul.f32 %v635, 0.2
    %v828 = vmul.f32 %v637, 0.2
    %v829 = vmul.f32 %v639, 0.2
    %v830 = vmul.f32 %v641, 0.2
    %v831 = vmul.f32 %v643, 0.2
    %v832 = vmul.f32 %v645, 0.2
    %v833 = vmul.f32 %v647, 0.2
    %v834 = vmul.f32 %v649, 0.2
    %v835 = vmul.f32 %v651, 0.2
    %v836 = vmul.f32 %v653, 0.2
    %v837 = vmul.f32 %v655, 0.2
    %v838 = vmul.f32 %v657, 0.2
    %v839 = vmul.f32 %v659, 0.2
    %v840 = vmul.f32 %v661, 0.2
    %v841 = vmul.f32 %v663, 0.2
    %v842 = vmul.f32 %v665, 0.2
    %v843 = vmul.f32 %v667, 0.2
    %v844 = vmul.f32 %v669, 0.2
    %v845 = vmul.f32 %v671, 0.2
    %v846 = vmul.f32 %v673, 0.2
    %v847 = vmul.f32 %v675, 0.2
    %v848 = vmul.f32 %v677, 0.2
    %v849 = vmul.f32 %v679, 0.2
    %v850 = vmul.f32 %v681, 0.2
    %v851 = vmul.f32 %v683, 0.2
    %v852 = vmul.f32 %v685, 0.2
    %v853 = vmul.f32 %v687, 0.2
    %v854 = vmul.f32 %v689, 0.2
    %v855 = vmul.f32 %v691, 0.2
    %v856 = vmul.f32 %v693, 0.2
    %v857 = vmul.f32 %v695, 0.2
    %v858 = vmul.f32 %v697, 0.2
    %v859 = vmul.f32 %v699, 0.2
    %v860 = vmul.f32 %v701, 0.2
    %v861 = vmul.f32 %v703, 0.2
    %v862 = vmul.f32 %v705, 0.2
    %v863 = vmul.f32 %v707, 0.2
    %v864 = vmul.f32 %v709, 0.2
    %v865 = vmul.f32 %v711, 0.2
    %v866 = vmul.f32 %v713, 0.2
    %v867 = vmul.f32 %v715, 0.2
    %v868 = vmul.f32 %v717, 0.2
    %v869 = vmul.f32 %v719, 0.2
    %v870 = vmul.f32 %v721, 0.2
    %v871 = vmul.f32 %v723, 0.2
    %v872 = vmul.f32 %v725, 0.2
    %v873 = vmul.f32 %v727, 0.2
    %v874 = vmul.f32 %v729, 0.2
    %v875 = vmul.f32 %v731, 0.2
    %v876 = vmul.f32 %v733, 0.2
    %v877 = vmul.f32 %v735, 0.2
    %v878 = vmul.f32 %v737, 0.2
    %v879 = vmul.f32 %v739, 0.2
    %v880 = vmul.f32 %v741, 0.2
    %v881 = vmul.f32 %v743, 0.2
    %v882 = vmul.f32 %v745, 0.2
    %v883 = vmul.f32 %v747, 0.2
    %v884 = vmul.f32 %v749, 0.2
    %v885 = vmul.f32 %v751, 0.2
    %v886 = vmul.f32 %v753, 0.2
    %v887 = vmul.f32 %v755, 0.2
    %v888 = vmul.f32 %v757, 0.2
    %v889 = vmul.f32 %v759, 0.2
    %v890 = vmul.f32 %v761, 0.2
    %v1019 = vlaneseq
    %v1020 = vshrl.u32 %v1019, 7
    %v1021 = vsub.s32 %v374, %v1020
    %v1022 = vrot.slane %v763, %v1021
    %v1023 = vadd.s32 %v374, 4294967288
    %v1024 = vlaneseq
    %v1025 = vshrl.u32 %v1024, 7
    %v1026 = vsub.s32 %v1023, %v1025
    %v1027 = vrot.slane %v764, %v1026
    %vm1028 = vcmask 130112
    %v1029 = vsel %vm1028, %v1027, %v1022
    %v1030 = vadd.s32 %v374, 4294967280
    %v1031 = vlaneseq
    %v1032 = vshrl.u32 %v1031, 7
    %v1033 = vsub.s32 %v1030, %v1032
    %v1034 = vrot.slane %v765, %v1033
    %vm1035 = vcmask 195712
    %v1036 = vsel %vm1035, %v1034, %v1029
    %v1037 = vadd.s32 %v374, 4294967272
    %v1038 = vlaneseq
    %v1039 = vshrl.u32 %v1038, 7
    %v1040 = vsub.s32 %v1037, %v1039
    %v1041 = vrot.slane %v766, %v1040
    %vm1042 = vcmask 261312
    %v1043 = vsel %vm1042, %v1041, %v1036
    %v1044 = vadd.s32 %v374, 4294967264
    %v1045 = vlaneseq
    %v1046 = vshrl.u32 %v1045, 7
    %v1047 = vsub.s32 %v1044, %v1046
    %v1048 = vrot.slane %v767, %v1047
    %vm1049 = vcmask 326912
    %v1050 = vsel %vm1049, %v1048, %v1043
    %v1051 = vadd.s32 %v374, 4294967256
    %v1052 = vlaneseq
    %v1053 = vshrl.u32 %v1052, 7
    %v1054 = vsub.s32 %v1051, %v1053
    %v1055 = vrot.slane %v768, %v1054
    %vm1056 = vcmask 392512
    %v1057 = vsel %vm1056, %v1055, %v1050
    %v1058 = vadd.s32 %v374, 4294967248
    %v1059 = vlaneseq
    %v1060 = vshrl.u32 %v1059, 7
    %v1061 = vsub.s32 %v1058, %v1060
    %v1062 = vrot.slane %v769, %v1061
    %vm1063 = vcmask 458112
    %v1064 = vsel %vm1063, %v1062, %v1057
    %v1065 = vadd.s32 %v374, 4294967240
    %v1066 = vlaneseq
    %v1067 = vshrl.u32 %v1066, 7
    %v1068 = vsub.s32 %v1065, %v1067
    %v1069 = vrot.slane %v770, %v1068
    %vm1070 = vcmask 523712
    %v1071 = vsel %vm1070, %v1069, %v1064
    %v1072 = vadd.s32 %v374, 4294967232
    %v1073 = vlaneseq
    %v1074 = vshrl.u32 %v1073, 7
    %v1075 = vsub.s32 %v1072, %v1074
    %v1076 = vrot.slane %v771, %v1075
    %vm1077 = vcmask 589312
    %v1078 = vsel %vm1077, %v1076, %v1071
    %v1079 = vadd.s32 %v374, 4294967224
    %v1080 = vlaneseq
    %v1081 = vshrl.u32 %v1080, 7
    %v1082 = vsub.s32 %v1079, %v1081
    %v1083 = vrot.slane %v772, %v1082
    %vm1084 = vcmask 654912
    %v1085 = vsel %vm1084, %v1083, %v1078
    %v1086 = vadd.s32 %v374, 4294967216
    %v1087 = vlaneseq
    %v1088 = vshrl.u32 %v1087, 7
    %v1089 = vsub.s32 %v1086, %v1088
    %v1090 = vrot.slane %v773, %v1089
    %vm1091 = vcmask 720512
    %v1092 = vsel %vm1091, %v1090, %v1085
    %v1093 = vadd.s32 %v374, 4294967208
    %v1094 = vlaneseq
    %v1095 = vshrl.u32 %v1094, 7
    %v1096 = vsub.s32 %v1093, %v1095
    %v1097 = vrot.slane %v774, %v1096
    %vm1098 = vcmask 786112
    %v1099 = vsel %vm1098, %v1097, %v1092
    %v1100 = vadd.s32 %v374, 4294967200
    %v1101 = vlaneseq
    %v1102 = vshrl.u32 %v1101, 7
    %v1103 = vsub.s32 %v1100, %v1102
    %v1104 = vrot.slane %v775, %v1103
    %vm1105 = vcmask 851712
    %v1106 = vsel %vm1105, %v1104, %v1099
    %v1107 = vadd.s32 %v374, 4294967192
    %v1108 = vlaneseq
    %v1109 = vshrl.u32 %v1108, 7
    %v1110 = vsub.s32 %v1107, %v1109
    %v1111 = vrot.slane %v776, %v1110
    %vm1112 = vcmask 917312
    %v1113 = vsel %vm1112, %v1111, %v1106
    %v1114 = vadd.s32 %v374, 4294967184
    %v1115 = vlaneseq
    %v1116 = vshrl.u32 %v1115, 7
    %v1117 = vsub.s32 %v1114, %v1116
    %v1118 = vrot.slane %v777, %v1117
    %vm1119 = vcmask 982912
    %v1120 = vsel %vm1119, %v1118, %v1113
    %v1121 = vadd.s32 %v374, 4294967176
    %v1122 = vlaneseq
    %v1123 = vshrl.u32 %v1122, 7
    %v1124 = vsub.s32 %v1121, %v1123
    %v1125 = vrot.slane %v778, %v1124
    %vm1126 = vcmask 1048512
    %v1127 = vsel %vm1126, %v1125, %v1120
    %v1128 = vlaneseq
    %v1129 = vshrl.u32 %v1128, 7
    %v1130 = vsub.s32 %v374, %v1129
    %v1131 = vrot.slane %v779, %v1130
    %v1132 = vlaneseq
    %v1133 = vshrl.u32 %v1132, 7
    %v1134 = vsub.s32 %v1023, %v1133
    %v1135 = vrot.slane %v780, %v1134
    %v1136 = vsel %vm1028, %v1135, %v1131
    %v1137 = vlaneseq
    %v1138 = vshrl.u32 %v1137, 7
    %v1139 = vsub.s32 %v1030, %v1138
    %v1140 = vrot.slane %v781, %v1139
    %v1141 = vsel %vm1035, %v1140, %v1136
    %v1142 = vlaneseq
    %v1143 = vshrl.u32 %v1142, 7
    %v1144 = vsub.s32 %v1037, %v1143
    %v1145 = vrot.slane %v782, %v1144
    %v1146 = vsel %vm1042, %v1145, %v1141
    %v1147 = vlaneseq
    %v1148 = vshrl.u32 %v1147, 7
    %v1149 = vsub.s32 %v1044, %v1148
    %v1150 = vrot.slane %v783, %v1149
    %v1151 = vsel %vm1049, %v1150, %v1146
    %v1152 = vlaneseq
    %v1153 = vshrl.u32 %v1152, 7
    %v1154 = vsub.s32 %v1051, %v1153
    %v1155 = vrot.slane %v784, %v1154
    %v1156 = vsel %vm1056, %v1155, %v1151
    %v1157 = vlaneseq
    %v1158 = vshrl.u32 %v1157, 7
    %v1159 = vsub.s32 %v1058, %v1158
    %v1160 = vrot.slane %v785, %v1159
    %v1161 = vsel %vm1063, %v1160, %v1156
    %v1162 = vlaneseq
    %v1163 = vshrl.u32 %v1162, 7
    %v1164 = vsub.s32 %v1065, %v1163
    %v1165 = vrot.slane %v786, %v1164
    %v1166 = vsel %vm1070, %v1165, %v1161
    %v1167 = vlaneseq
    %v1168 = vshrl.u32 %v1167, 7
    %v1169 = vsub.s32 %v1072, %v1168
    %v1170 = vrot.slane %v787, %v1169
    %v1171 = vsel %vm1077, %v1170, %v1166
    %v1172 = vlaneseq
    %v1173 = vshrl.u32 %v1172, 7
    %v1174 = vsub.s32 %v1079, %v1173
    %v1175 = vrot.slane %v788, %v1174
    %v1176 = vsel %vm1084, %v1175, %v1171
    %v1177 = vlaneseq
    %v1178 = vshrl.u32 %v1177, 7
    %v1179 = vsub.s32 %v1086, %v1178
    %v1180 = vrot.slane %v789, %v1179
    %v1181 = vsel %vm1091, %v1180, %v1176
    %v1182 = vlaneseq
    %v1183 = vshrl.u32 %v1182, 7
    %v1184 = vsub.s32 %v1093, %v1183
    %v1185 = vrot.slane %v790, %v1184
    %v1186 = vsel %vm1098, %v1185, %v1181
    %v1187 = vlaneseq
    %v1188 = vshrl.u32 %v1187, 7
    %v1189 = vsub.s32 %v1100, %v1188
    %v1190 = vrot.slane %v791, %v1189
    %v1191 = vsel %vm1105, %v1190, %v1186
    %v1192 = vlaneseq
    %v1193 = vshrl.u32 %v1192, 7
    %v1194 = vsub.s32 %v1107, %v1193
    %v1195 = vrot.slane %v792, %v1194
    %v1196 = vsel %vm1112, %v1195, %v1191
    %v1197 = vlaneseq
    %v1198 = vshrl.u32 %v1197, 7
    %v1199 = vsub.s32 %v1114, %v1198
    %v1200 = vrot.slane %v793, %v1199
    %v1201 = vsel %vm1119, %v1200, %v1196
    %v1202 = vlaneseq
    %v1203 = vshrl.u32 %v1202, 7
    %v1204 = vsub.s32 %v1121, %v1203
    %v1205 = vrot.slane %v794, %v1204
    %v1206 = vsel %vm1126, %v1205, %v1201
    %v1207 = vlaneseq
    %v1208 = vshrl.u32 %v1207, 7
    %v1209 = vsub.s32 %v374, %v1208
    %v1210 = vrot.slane %v795, %v1209
    %v1211 = vlaneseq
    %v1212 = vshrl.u32 %v1211, 7
    %v1213 = vsub.s32 %v1023, %v1212
    %v1214 = vrot.slane %v796, %v1213
    %v1215 = vsel %vm1028, %v1214, %v1210
    %v1216 = vlaneseq
    %v1217 = vshrl.u32 %v1216, 7
    %v1218 = vsub.s32 %v1030, %v1217
    %v1219 = vrot.slane %v797, %v1218
    %v1220 = vsel %vm1035, %v1219, %v1215
    %v1221 = vlaneseq
    %v1222 = vshrl.u32 %v1221, 7
    %v1223 = vsub.s32 %v1037, %v1222
    %v1224 = vrot.slane %v798, %v1223
    %v1225 = vsel %vm1042, %v1224, %v1220
    %v1226 = vlaneseq
    %v1227 = vshrl.u32 %v1226, 7
    %v1228 = vsub.s32 %v1044, %v1227
    %v1229 = vrot.slane %v799, %v1228
    %v1230 = vsel %vm1049, %v1229, %v1225
    %v1231 = vlaneseq
    %v1232 = vshrl.u32 %v1231, 7
    %v1233 = vsub.s32 %v1051, %v1232
    %v1234 = vrot.slane %v800, %v1233
    %v1235 = vsel %vm1056, %v1234, %v1230
    %v1236 = vlaneseq
    %v1237 = vshrl.u32 %v1236, 7
    %v1238 = vsub.s32 %v1058, %v1237
    %v1239 = vrot.slane %v801, %v1238
    %v1240 = vsel %vm1063, %v1239, %v1235
    %v1241 = vlaneseq
    %v1242 = vshrl.u32 %v1241, 7
    %v1243 = vsub.s32 %v1065, %v1242
    %v1244 = vrot.slane %v802, %v1243
    %v1245 = vsel %vm1070, %v1244, %v1240
    %v1246 = vlaneseq
    %v1247 = vshrl.u32 %v1246, 7
    %v1248 = vsub.s32 %v1072, %v1247
    %v1249 = vrot.slane %v803, %v1248
    %v1250 = vsel %vm1077, %v1249, %v1245
    %v1251 = vlaneseq
    %v1252 = vshrl.u32 %v1251, 7
    %v1253 = vsub.s32 %v1079, %v1252
    %v1254 = vrot.slane %v804, %v1253
    %v1255 = vsel %vm1084, %v1254, %v1250
    %v1256 = vlaneseq
    %v1257 = vshrl.u32 %v1256, 7
    %v1258 = vsub.s32 %v1086, %v1257
    %v1259 = vrot.slane %v805, %v1258
    %v1260 = vsel %vm1091, %v1259, %v1255
    %v1261 = vlaneseq
    %v1262 = vshrl.u32 %v1261, 7
    %v1263 = vsub.s32 %v1093, %v1262
    %v1264 = vrot.slane %v806, %v1263
    %v1265 = vsel %vm1098, %v1264, %v1260
    %v1266 = vlaneseq
    %v1267 = vshrl.u32 %v1266, 7
    %v1268 = vsub.s32 %v1100, %v1267
    %v1269 = vrot.slane %v807, %v1268
    %v1270 = vsel %vm1105, %v1269, %v1265
    %v1271 = vlaneseq
    %v1272 = vshrl.u32 %v1271, 7
    %v1273 = vsub.s32 %v1107, %v1272
    %v1274 = vrot.slane %v808, %v1273
    %v1275 = vsel %vm1112, %v1274, %v1270
    %v1276 = vlaneseq
    %v1277 = vshrl.u32 %v1276, 7
    %v1278 = vsub.s32 %v1114, %v1277
    %v1279 = vrot.slane %v809, %v1278
    %v1280 = vsel %vm1119, %v1279, %v1275
    %v1281 = vlaneseq
    %v1282 = vshrl.u32 %v1281, 7
    %v1283 = vsub.s32 %v1121, %v1282
    %v1284 = vrot.slane %v810, %v1283
    %v1285 = vsel %vm1126, %v1284, %v1280
    %v1286 = vlaneseq
    %v1287 = vshrl.u32 %v1286, 7
    %v1288 = vsub.s32 %v374, %v1287
    %v1289 = vrot.slane %v811, %v1288
    %v1290 = vlaneseq
    %v1291 = vshrl.u32 %v1290, 7
    %v1292 = vsub.s32 %v1023, %v1291
    %v1293 = vrot.slane %v812, %v1292
    %v1294 = vsel %vm1028, %v1293, %v1289
    %v1295 = vlaneseq
    %v1296 = vshrl.u32 %v1295, 7
    %v1297 = vsub.s32 %v1030, %v1296
    %v1298 = vrot.slane %v813, %v1297
    %v1299 = vsel %vm1035, %v1298, %v1294
    %v1300 = vlaneseq
    %v1301 = vshrl.u32 %v1300, 7
    %v1302 = vsub.s32 %v1037, %v1301
    %v1303 = vrot.slane %v814, %v1302
    %v1304 = vsel %vm1042, %v1303, %v1299
    %v1305 = vlaneseq
    %v1306 = vshrl.u32 %v1305, 7
    %v1307 = vsub.s32 %v1044, %v1306
    %v1308 = vrot.slane %v815, %v1307
    %v1309 = vsel %vm1049, %v1308, %v1304
    %v1310 = vlaneseq
    %v1311 = vshrl.u32 %v1310, 7
    %v1312 = vsub.s32 %v1051, %v1311
    %v1313 = vrot.slane %v816, %v1312
    %v1314 = vsel %vm1056, %v1313, %v1309
    %v1315 = vlaneseq
    %v1316 = vshrl.u32 %v1315, 7
    %v1317 = vsub.s32 %v1058, %v1316
    %v1318 = vrot.slane %v817, %v1317
    %v1319 = vsel %vm1063, %v1318, %v1314
    %v1320 = vlaneseq
    %v1321 = vshrl.u32 %v1320, 7
    %v1322 = vsub.s32 %v1065, %v1321
    %v1323 = vrot.slane %v818, %v1322
    %v1324 = vsel %vm1070, %v1323, %v1319
    %v1325 = vlaneseq
    %v1326 = vshrl.u32 %v1325, 7
    %v1327 = vsub.s32 %v1072, %v1326
    %v1328 = vrot.slane %v819, %v1327
    %v1329 = vsel %vm1077, %v1328, %v1324
    %v1330 = vlaneseq
    %v1331 = vshrl.u32 %v1330, 7
    %v1332 = vsub.s32 %v1079, %v1331
    %v1333 = vrot.slane %v820, %v1332
    %v1334 = vsel %vm1084, %v1333, %v1329
    %v1335 = vlaneseq
    %v1336 = vshrl.u32 %v1335, 7
    %v1337 = vsub.s32 %v1086, %v1336
    %v1338 = vrot.slane %v821, %v1337
    %v1339 = vsel %vm1091, %v1338, %v1334
    %v1340 = vlaneseq
    %v1341 = vshrl.u32 %v1340, 7
    %v1342 = vsub.s32 %v1093, %v1341
    %v1343 = vrot.slane %v822, %v1342
    %v1344 = vsel %vm1098, %v1343, %v1339
    %v1345 = vlaneseq
    %v1346 = vshrl.u32 %v1345, 7
    %v1347 = vsub.s32 %v1100, %v1346
    %v1348 = vrot.slane %v823, %v1347
    %v1349 = vsel %vm1105, %v1348, %v1344
    %v1350 = vlaneseq
    %v1351 = vshrl.u32 %v1350, 7
    %v1352 = vsub.s32 %v1107, %v1351
    %v1353 = vrot.slane %v824, %v1352
    %v1354 = vsel %vm1112, %v1353, %v1349
    %v1355 = vlaneseq
    %v1356 = vshrl.u32 %v1355, 7
    %v1357 = vsub.s32 %v1114, %v1356
    %v1358 = vrot.slane %v825, %v1357
    %v1359 = vsel %vm1119, %v1358, %v1354
    %v1360 = vlaneseq
    %v1361 = vshrl.u32 %v1360, 7
    %v1362 = vsub.s32 %v1121, %v1361
    %v1363 = vrot.slane %v826, %v1362
    %v1364 = vsel %vm1126, %v1363, %v1359
    %v1365 = vlaneseq
    %v1366 = vshrl.u32 %v1365, 7
    %v1367 = vsub.s32 %v374, %v1366
    %v1368 = vrot.slane %v827, %v1367
    %v1369 = vlaneseq
    %v1370 = vshrl.u32 %v1369, 7
    %v1371 = vsub.s32 %v1023, %v1370
    %v1372 = vrot.slane %v828, %v1371
    %v1373 = vsel %vm1028, %v1372, %v1368
    %v1374 = vlaneseq
    %v1375 = vshrl.u32 %v1374, 7
    %v1376 = vsub.s32 %v1030, %v1375
    %v1377 = vrot.slane %v829, %v1376
    %v1378 = vsel %vm1035, %v1377, %v1373
    %v1379 = vlaneseq
    %v1380 = vshrl.u32 %v1379, 7
    %v1381 = vsub.s32 %v1037, %v1380
    %v1382 = vrot.slane %v830, %v1381
    %v1383 = vsel %vm1042, %v1382, %v1378
    %v1384 = vlaneseq
    %v1385 = vshrl.u32 %v1384, 7
    %v1386 = vsub.s32 %v1044, %v1385
    %v1387 = vrot.slane %v831, %v1386
    %v1388 = vsel %vm1049, %v1387, %v1383
    %v1389 = vlaneseq
    %v1390 = vshrl.u32 %v1389, 7
    %v1391 = vsub.s32 %v1051, %v1390
    %v1392 = vrot.slane %v832, %v1391
    %v1393 = vsel %vm1056, %v1392, %v1388
    %v1394 = vlaneseq
    %v1395 = vshrl.u32 %v1394, 7
    %v1396 = vsub.s32 %v1058, %v1395
    %v1397 = vrot.slane %v833, %v1396
    %v1398 = vsel %vm1063, %v1397, %v1393
    %v1399 = vlaneseq
    %v1400 = vshrl.u32 %v1399, 7
    %v1401 = vsub.s32 %v1065, %v1400
    %v1402 = vrot.slane %v834, %v1401
    %v1403 = vsel %vm1070, %v1402, %v1398
    %v1404 = vlaneseq
    %v1405 = vshrl.u32 %v1404, 7
    %v1406 = vsub.s32 %v1072, %v1405
    %v1407 = vrot.slane %v835, %v1406
    %v1408 = vsel %vm1077, %v1407, %v1403
    %v1409 = vlaneseq
    %v1410 = vshrl.u32 %v1409, 7
    %v1411 = vsub.s32 %v1079, %v1410
    %v1412 = vrot.slane %v836, %v1411
    %v1413 = vsel %vm1084, %v1412, %v1408
    %v1414 = vlaneseq
    %v1415 = vshrl.u32 %v1414, 7
    %v1416 = vsub.s32 %v1086, %v1415
    %v1417 = vrot.slane %v837, %v1416
    %v1418 = vsel %vm1091, %v1417, %v1413
    %v1419 = vlaneseq
    %v1420 = vshrl.u32 %v1419, 7
    %v1421 = vsub.s32 %v1093, %v1420
    %v1422 = vrot.slane %v838, %v1421
    %v1423 = vsel %vm1098, %v1422, %v1418
    %v1424 = vlaneseq
    %v1425 = vshrl.u32 %v1424, 7
    %v1426 = vsub.s32 %v1100, %v1425
    %v1427 = vrot.slane %v839, %v1426
    %v1428 = vsel %vm1105, %v1427, %v1423
    %v1429 = vlaneseq
    %v1430 = vshrl.u32 %v1429, 7
    %v1431 = vsub.s32 %v1107, %v1430
    %v1432 = vrot.slane %v840, %v1431
    %v1433 = vsel %vm1112, %v1432, %v1428
    %v1434 = vlaneseq
    %v1435 = vshrl.u32 %v1434, 7
    %v1436 = vsub.s32 %v1114, %v1435
    %v1437 = vrot.slane %v841, %v1436
    %v1438 = vsel %vm1119, %v1437, %v1433
    %v1439 = vlaneseq
    %v1440 = vshrl.u32 %v1439, 7
    %v1441 = vsub.s32 %v1121, %v1440
    %v1442 = vrot.slane %v842, %v1441
    %v1443 = vsel %vm1126, %v1442, %v1438
    %v1444 = vlaneseq
    %v1445 = vshrl.u32 %v1444, 7
    %v1446 = vsub.s32 %v374, %v1445
    %v1447 = vrot.slane %v843, %v1446
    %v1448 = vlaneseq
    %v1449 = vshrl.u32 %v1448, 7
    %v1450 = vsub.s32 %v1023, %v1449
    %v1451 = vrot.slane %v844, %v1450
    %v1452 = vsel %vm1028, %v1451, %v1447
    %v1453 = vlaneseq
    %v1454 = vshrl.u32 %v1453, 7
    %v1455 = vsub.s32 %v1030, %v1454
    %v1456 = vrot.slane %v845, %v1455
    %v1457 = vsel %vm1035, %v1456, %v1452
    %v1458 = vlaneseq
    %v1459 = vshrl.u32 %v1458, 7
    %v1460 = vsub.s32 %v1037, %v1459
    %v1461 = vrot.slane %v846, %v1460
    %v1462 = vsel %vm1042, %v1461, %v1457
    %v1463 = vlaneseq
    %v1464 = vshrl.u32 %v1463, 7
    %v1465 = vsub.s32 %v1044, %v1464
    %v1466 = vrot.slane %v847, %v1465
    %v1467 = vsel %vm1049, %v1466, %v1462
    %v1468 = vlaneseq
    %v1469 = vshrl.u32 %v1468, 7
    %v1470 = vsub.s32 %v1051, %v1469
    %v1471 = vrot.slane %v848, %v1470
    %v1472 = vsel %vm1056, %v1471, %v1467
    %v1473 = vlaneseq
    %v1474 = vshrl.u32 %v1473, 7
    %v1475 = vsub.s32 %v1058, %v1474
    %v1476 = vrot.slane %v849, %v1475
    %v1477 = vsel %vm1063, %v1476, %v1472
    %v1478 = vlaneseq
    %v1479 = vshrl.u32 %v1478, 7
    %v1480 = vsub.s32 %v1065, %v1479
    %v1481 = vrot.slane %v850, %v1480
    %v1482 = vsel %vm1070, %v1481, %v1477
    %v1483 = vlaneseq
    %v1484 = vshrl.u32 %v1483, 7
    %v1485 = vsub.s32 %v1072, %v1484
    %v1486 = vrot.slane %v851, %v1485
    %v1487 = vsel %vm1077, %v1486, %v1482
    %v1488 = vlaneseq
    %v1489 = vshrl.u32 %v1488, 7
    %v1490 = vsub.s32 %v1079, %v1489
    %v1491 = vrot.slane %v852, %v1490
    %v1492 = vsel %vm1084, %v1491, %v1487
    %v1493 = vlaneseq
    %v1494 = vshrl.u32 %v1493, 7
    %v1495 = vsub.s32 %v1086, %v1494
    %v1496 = vrot.slane %v853, %v1495
    %v1497 = vsel %vm1091, %v1496, %v1492
    %v1498 = vlaneseq
    %v1499 = vshrl.u32 %v1498, 7
    %v1500 = vsub.s32 %v1093, %v1499
    %v1501 = vrot.slane %v854, %v1500
    %v1502 = vsel %vm1098, %v1501, %v1497
    %v1503 = vlaneseq
    %v1504 = vshrl.u32 %v1503, 7
    %v1505 = vsub.s32 %v1100, %v1504
    %v1506 = vrot.slane %v855, %v1505
    %v1507 = vsel %vm1105, %v1506, %v1502
    %v1508 = vlaneseq
    %v1509 = vshrl.u32 %v1508, 7
    %v1510 = vsub.s32 %v1107, %v1509
    %v1511 = vrot.slane %v856, %v1510
    %v1512 = vsel %vm1112, %v1511, %v1507
    %v1513 = vlaneseq
    %v1514 = vshrl.u32 %v1513, 7
    %v1515 = vsub.s32 %v1114, %v1514
    %v1516 = vrot.slane %v857, %v1515
    %v1517 = vsel %vm1119, %v1516, %v1512
    %v1518 = vlaneseq
    %v1519 = vshrl.u32 %v1518, 7
    %v1520 = vsub.s32 %v1121, %v1519
    %v1521 = vrot.slane %v858, %v1520
    %v1522 = vsel %vm1126, %v1521, %v1517
    %v1523 = vlaneseq
    %v1524 = vshrl.u32 %v1523, 7
    %v1525 = vsub.s32 %v374, %v1524
    %v1526 = vrot.slane %v859, %v1525
    %v1527 = vlaneseq
    %v1528 = vshrl.u32 %v1527, 7
    %v1529 = vsub.s32 %v1023, %v1528
    %v1530 = vrot.slane %v860, %v1529
    %v1531 = vsel %vm1028, %v1530, %v1526
    %v1532 = vlaneseq
    %v1533 = vshrl.u32 %v1532, 7
    %v1534 = vsub.s32 %v1030, %v1533
    %v1535 = vrot.slane %v861, %v1534
    %v1536 = vsel %vm1035, %v1535, %v1531
    %v1537 = vlaneseq
    %v1538 = vshrl.u32 %v1537, 7
    %v1539 = vsub.s32 %v1037, %v1538
    %v1540 = vrot.slane %v862, %v1539
    %v1541 = vsel %vm1042, %v1540, %v1536
    %v1542 = vlaneseq
    %v1543 = vshrl.u32 %v1542, 7
    %v1544 = vsub.s32 %v1044, %v1543
    %v1545 = vrot.slane %v863, %v1544
    %v1546 = vsel %vm1049, %v1545, %v1541
    %v1547 = vlaneseq
    %v1548 = vshrl.u32 %v1547, 7
    %v1549 = vsub.s32 %v1051, %v1548
    %v1550 = vrot.slane %v864, %v1549
    %v1551 = vsel %vm1056, %v1550, %v1546
    %v1552 = vlaneseq
    %v1553 = vshrl.u32 %v1552, 7
    %v1554 = vsub.s32 %v1058, %v1553
    %v1555 = vrot.slane %v865, %v1554
    %v1556 = vsel %vm1063, %v1555, %v1551
    %v1557 = vlaneseq
    %v1558 = vshrl.u32 %v1557, 7
    %v1559 = vsub.s32 %v1065, %v1558
    %v1560 = vrot.slane %v866, %v1559
    %v1561 = vsel %vm1070, %v1560, %v1556
    %v1562 = vlaneseq
    %v1563 = vshrl.u32 %v1562, 7
    %v1564 = vsub.s32 %v1072, %v1563
    %v1565 = vrot.slane %v867, %v1564
    %v1566 = vsel %vm1077, %v1565, %v1561
    %v1567 = vlaneseq
    %v1568 = vshrl.u32 %v1567, 7
    %v1569 = vsub.s32 %v1079, %v1568
    %v1570 = vrot.slane %v868, %v1569
    %v1571 = vsel %vm1084, %v1570, %v1566
    %v1572 = vlaneseq
    %v1573 = vshrl.u32 %v1572, 7
    %v1574 = vsub.s32 %v1086, %v1573
    %v1575 = vrot.slane %v869, %v1574
    %v1576 = vsel %vm1091, %v1575, %v1571
    %v1577 = vlaneseq
    %v1578 = vshrl.u32 %v1577, 7
    %v1579 = vsub.s32 %v1093, %v1578
    %v1580 = vrot.slane %v870, %v1579
    %v1581 = vsel %vm1098, %v1580, %v1576
    %v1582 = vlaneseq
    %v1583 = vshrl.u32 %v1582, 7
    %v1584 = vsub.s32 %v1100, %v1583
    %v1585 = vrot.slane %v871, %v1584
    %v1586 = vsel %vm1105, %v1585, %v1581
    %v1587 = vlaneseq
    %v1588 = vshrl.u32 %v1587, 7
    %v1589 = vsub.s32 %v1107, %v1588
    %v1590 = vrot.slane %v872, %v1589
    %v1591 = vsel %vm1112, %v1590, %v1586
    %v1592 = vlaneseq
    %v1593 = vshrl.u32 %v1592, 7
    %v1594 = vsub.s32 %v1114, %v1593
    %v1595 = vrot.slane %v873, %v1594
    %v1596 = vsel %vm1119, %v1595, %v1591
    %v1597 = vlaneseq
    %v1598 = vshrl.u32 %v1597, 7
    %v1599 = vsub.s32 %v1121, %v1598
    %v1600 = vrot.slane %v874, %v1599
    %v1601 = vsel %vm1126, %v1600, %v1596
    %v1602 = vlaneseq
    %v1603 = vshrl.u32 %v1602, 7
    %v1604 = vsub.s32 %v374, %v1603
    %v1605 = vrot.slane %v875, %v1604
    %v1606 = vlaneseq
    %v1607 = vshrl.u32 %v1606, 7
    %v1608 = vsub.s32 %v1023, %v1607
    %v1609 = vrot.slane %v876, %v1608
    %v1610 = vsel %vm1028, %v1609, %v1605
    %v1611 = vlaneseq
    %v1612 = vshrl.u32 %v1611, 7
    %v1613 = vsub.s32 %v1030, %v1612
    %v1614 = vrot.slane %v877, %v1613
    %v1615 = vsel %vm1035, %v1614, %v1610
    %v1616 = vlaneseq
    %v1617 = vshrl.u32 %v1616, 7
    %v1618 = vsub.s32 %v1037, %v1617
    %v1619 = vrot.slane %v878, %v1618
    %v1620 = vsel %vm1042, %v1619, %v1615
    %v1621 = vlaneseq
    %v1622 = vshrl.u32 %v1621, 7
    %v1623 = vsub.s32 %v1044, %v1622
    %v1624 = vrot.slane %v879, %v1623
    %v1625 = vsel %vm1049, %v1624, %v1620
    %v1626 = vlaneseq
    %v1627 = vshrl.u32 %v1626, 7
    %v1628 = vsub.s32 %v1051, %v1627
    %v1629 = vrot.slane %v880, %v1628
    %v1630 = vsel %vm1056, %v1629, %v1625
    %v1631 = vlaneseq
    %v1632 = vshrl.u32 %v1631, 7
    %v1633 = vsub.s32 %v1058, %v1632
    %v1634 = vrot.slane %v881, %v1633
    %v1635 = vsel %vm1063, %v1634, %v1630
    %v1636 = vlaneseq
    %v1637 = vshrl.u32 %v1636, 7
    %v1638 = vsub.s32 %v1065, %v1637
    %v1639 = vrot.slane %v882, %v1638
    %v1640 = vsel %vm1070, %v1639, %v1635
    %v1641 = vlaneseq
    %v1642 = vshrl.u32 %v1641, 7
    %v1643 = vsub.s32 %v1072, %v1642
    %v1644 = vrot.slane %v883, %v1643
    %v1645 = vsel %vm1077, %v1644, %v1640
    %v1646 = vlaneseq
    %v1647 = vshrl.u32 %v1646, 7
    %v1648 = vsub.s32 %v1079, %v1647
    %v1649 = vrot.slane %v884, %v1648
    %v1650 = vsel %vm1084, %v1649, %v1645
    %v1651 = vlaneseq
    %v1652 = vshrl.u32 %v1651, 7
    %v1653 = vsub.s32 %v1086, %v1652
    %v1654 = vrot.slane %v885, %v1653
    %v1655 = vsel %vm1091, %v1654, %v1650
    %v1656 = vlaneseq
    %v1657 = vshrl.u32 %v1656, 7
    %v1658 = vsub.s32 %v1093, %v1657
    %v1659 = vrot.slane %v886, %v1658
    %v1660 = vsel %vm1098, %v1659, %v1655
    %v1661 = vlaneseq
    %v1662 = vshrl.u32 %v1661, 7
    %v1663 = vsub.s32 %v1100, %v1662
    %v1664 = vrot.slane %v887, %v1663
    %v1665 = vsel %vm1105, %v1664, %v1660
    %v1666 = vlaneseq
    %v1667 = vshrl.u32 %v1666, 7
    %v1668 = vsub.s32 %v1107, %v1667
    %v1669 = vrot.slane %v888, %v1668
    %v1670 = vsel %vm1112, %v1669, %v1665
    %v1671 = vlaneseq
    %v1672 = vshrl.u32 %v1671, 7
    %v1673 = vsub.s32 %v1114, %v1672
    %v1674 = vrot.slane %v889, %v1673
    %v1675 = vsel %vm1119, %v1674, %v1670
    %v1676 = vlaneseq
    %v1677 = vshrl.u32 %v1676, 7
    %v1678 = vsub.s32 %v1121, %v1677
    %v1679 = vrot.slane %v890, %v1678
    %v1680 = vsel %vm1126, %v1679, %v1675
    %vm1681 = vcmask 1041409
    %v1682 = vsel %vm1681, %v1206, %v1127
    %vm1683 = vcmask 1042434
    %v1684 = vsel %vm1683, %v1285, %v1682
    %vm1685 = vcmask 1043459
    %v1686 = vsel %vm1685, %v1364, %v1684
    %vm1687 = vcmask 1044484
    %v1688 = vsel %vm1687, %v1443, %v1686
    %vm1689 = vcmask 1045509
    %v1690 = vsel %vm1689, %v1522, %v1688
    %vm1691 = vcmask 1046534
    %v1692 = vsel %vm1691, %v1601, %v1690
    %vm1693 = vcmask 1047559
    %v1694 = vsel %vm1693, %v1680, %v1692
    %v1696 = vadd.f32 %v762, %v1694
    %v1698 = vlaneseq
    %v1699 = vshrl.u32 %v1698, 7
    %v1700 = vsub.s32 0, %v1699
    %v1701 = vrot.slane %v84, %v1700
    %v1703 = vadd.f32 %v1696, %v1701
    %v1704 = vmax.f32 %v1703, 0.0
    %vm1705 = vcmp.lt.s32.totalorder %v374, 32
    %v1706 = vsel %vm1705, 1, 0
    %vm1707 = vcmp.eq.s32.totalorder %v1706, 1
    %v1708 = vsel %vm1707, %v1704, 0.0
    %v1709 = vld [vmem:[#allocation4] sm:$0xff]
    %v1710 = vld [vmem:[#allocation4 + $0x8] sm:$0xff]
    %v1711 = vld [vmem:[#allocation4 + $0x10] sm:$0xff]
    %v1712 = vld [vmem:[#allocation4 + $0x18] sm:$0xff]
    %v1713 = vld [vmem:[#allocation4 + $0x20] sm:$0xff]
    %v1714 = vld [vmem:[#allocation4 + $0x28] sm:$0xff]
    %v1715 = vld [vmem:[#allocation4 + $0x30] sm:$0xff]
    %v1716 = vld [vmem:[#allocation4 + $0x38] sm:$0xff]
    %v1717 = vld [vmem:[#allocation4 + $0x40] sm:$0xff]
    %v1718 = vld [vmem:[#allocation4 + $0x48] sm:$0xff]
    %v1719 = vld [vmem:[#allocation4 + $0x50] sm:$0xff]
    %v1720 = vld [vmem:[#allocation4 + $0x58] sm:$0xff]
    %v1721 = vld [vmem:[#allocation4 + $0x60] sm:$0xff]
    %v1722 = vld [vmem:[#allocation4 + $0x68] sm:$0xff]
    %v1723 = vld [vmem:[#allocation4 + $0x70] sm:$0xff]
    %v1724 = vld [vmem:[#allocation4 + $0x78] sm:$0xff]
    %v1725 = vld [vmem:[%s4] sm:$0x1]
    %1726 = vmatprep.subr.mxu0 0.0
    %1727 = vmatpush1.xpose.msra.mxu0 %v1709
    %1728 = vmatprep.subr.mxu0 0.0
    %1729 = vmatpush1.xpose.msra.mxu0 %v1710
    %1730 = vmatprep.subr.mxu0 0.0
    %1731 = vmatpush1.xpose.msra.mxu0 %v1711
    %1732 = vmatprep.subr.mxu0 0.0
    %1733 = vmatpush1.xpose.msra.mxu0 %v1712
    %1734 = vmatprep.subr.mxu0 0.0
    %1735 = vmatpush1.xpose.msra.mxu0 %v1713
    %1736 = vmatprep.subr.mxu0 0.0
    %1737 = vmatpush1.xpose.msra.mxu0 %v1714
    %1738 = vmatprep.subr.mxu0 0.0
    %1739 = vmatpush1.xpose.msra.mxu0 %v1715
    %1740 = vmatprep.subr.mxu0 0.0
    %1741 = vmatpush1.xpose.msra.mxu0 %v1716
    %1742 = vmatprep.subr.mxu0 0.0
    %1743 = vmatpush1.xpose.msra.mxu0 %v1717
    %1744 = vmatprep.subr.mxu0 0.0
    %1745 = vmatpush1.xpose.msra.mxu0 %v1718
    %1746 = vmatprep.subr.mxu0 0.0
    %1747 = vmatpush1.xpose.msra.mxu0 %v1719
    %1748 = vmatprep.subr.mxu0 0.0
    %1749 = vmatpush1.xpose.msra.mxu0 %v1720
    %1750 = vmatprep.subr.mxu0 0.0
    %1751 = vmatpush1.xpose.msra.mxu0 %v1721
    %1752 = vmatprep.subr.mxu0 0.0
    %1753 = vmatpush1.xpose.msra.mxu0 %v1722
    %1754 = vmatprep.subr.mxu0 0.0
    %1755 = vmatpush1.xpose.msra.mxu0 %v1723
    %1756 = vmatprep.subr.mxu0 0.0
    %1757 = vmatpush1.xpose.msra.mxu0 %v1724
    %1758 = vmatprep.subr.mxu0 0.0
    %1759 = vmatpush1.xpose.msra.mxu0 0.0
    %1760 = vmatprep.subr.mxu0 0.0
    %1761 = vmatpush1.xpose.msra.mxu0 0.0
    %1762 = vmatprep.subr.mxu0 0.0
    %1763 = vmatpush1.xpose.msra.mxu0 0.0
    %1764 = vmatprep.subr.mxu0 0.0
    %1765 = vmatpush1.xpose.msra.mxu0 0.0
    %1766 = vmatprep.subr.mxu0 0.0
    %1767 = vmatpush1.xpose.msra.mxu0 0.0
    %1768 = vmatprep.subr.mxu0 0.0
    %1769 = vmatpush1.xpose.msra.mxu0 0.0
    %1770 = vmatprep.subr.mxu0 0.0
    %1771 = vmatpush1.xpose.msra.mxu0 0.0
    %1772 = vmatprep.subr.mxu0 0.0
    %1773 = vmatpush1.xpose.msra.mxu0 0.0
    %1774 = vmatprep.subr.mxu0 0.0
    %1775 = vmatpush1.xpose.msra.mxu0 0.0
    %1776 = vmatprep.subr.mxu0 0.0
    %1777 = vmatpush1.xpose.msra.mxu0 0.0
    %1778 = vmatprep.subr.mxu0 0.0
    %1779 = vmatpush1.xpose.msra.mxu0 0.0
    %1780 = vmatprep.subr.mxu0 0.0
    %1781 = vmatpush1.xpose.msra.mxu0 0.0
    %1782 = vmatprep.subr.mxu0 0.0
    %1783 = vmatpush1.xpose.msra.mxu0 0.0
    %1784 = vmatprep.subr.mxu0 0.0
    %1785 = vmatpush1.xpose.msra.mxu0 0.0
    %1786 = vmatprep.subr.mxu0 0.0
    %1787 = vmatpush1.xpose.msra.mxu0 0.0
    %1788 = vmatprep.subr.mxu0 0.0
    %1789 = vmatpush1.xpose.msra.mxu0 0.0
    %1790 = vmatprep.mubr.f32.mxu0 0.0
    %1791 = vmatmul.mubr.f32.gmra.mrb[0].mxu0 %v1708
    %v1792 = vpop.f32.mrb[0].mxu0
    %v1793 = vadd.f32 0.0, %v1792
    %v1794 = vpop.f32.mrb[0].mxu0
    %1795 = vdwg.mxu0
    %v1797 = vcombine.high %v1708, %v1708
    %v1799 = vunpack.c.l.s4 1966171168
    %v1800 = vunpack.c.0.s8 %v1799
    %v1801 = vlaneseq
    %v1802 = vshrl.u32 %v1801, 7
    %v1803 = vsub.s32 %v1800, %v1802
    %v1804 = vrot.slane %v1708, %v1803
    %v1806 = vunpack.c.l.s4 1966171168
    %v1807 = vunpack.c.0.s8 %v1806
    %v1808 = vlaneseq
    %v1809 = vshrl.u32 %v1808, 7
    %v1810 = vsub.s32 %v1807, %v1809
    %v1811 = vrot.slane %v1797, %v1810
    %v1812 = vcombine.high %v1804, %v1804
    %v1813 = vcombine.high %v1811, %v1811
    %v1815 = vunpack.c.l.s4 1966171168
    %v1816 = vunpack.c.0.s8 %v1815
    %v1817 = vlaneseq
    %v1818 = vshrl.u32 %v1817, 7
    %v1819 = vsub.s32 %v1816, %v1818
    %v1820 = vrot.slane %v1804, %v1819
    %v1822 = vunpack.c.l.s4 1966171168
    %v1823 = vunpack.c.0.s8 %v1822
    %v1824 = vlaneseq
    %v1825 = vshrl.u32 %v1824, 7
    %v1826 = vsub.s32 %v1823, %v1825
    %v1827 = vrot.slane %v1811, %v1826
    %v1829 = vunpack.c.l.s4 1966171168
    %v1830 = vunpack.c.0.s8 %v1829
    %v1831 = vlaneseq
    %v1832 = vshrl.u32 %v1831, 7
    %v1833 = vsub.s32 %v1830, %v1832
    %v1834 = vrot.slane %v1812, %v1833
    %v1836 = vunpack.c.l.s4 1966171168
    %v1837 = vunpack.c.0.s8 %v1836
    %v1838 = vlaneseq
    %v1839 = vshrl.u32 %v1838, 7
    %v1840 = vsub.s32 %v1837, %v1839
    %v1841 = vrot.slane %v1813, %v1840
    %v1842 = vcombine.high %v1820, %v1820
    %v1843 = vcombine.high %v1827, %v1827
    %v1844 = vcombine.high %v1834, %v1834
    %v1845 = vcombine.high %v1841, %v1841
    %v1846 = vlaneseq
    %v1847 = vshrl.u32 %v1846, 7
    %v1848 = vsub.s32 0, %v1847
    %v1849 = vrot.slane %v1820, %v1848
    %v1850 = vlaneseq
    %v1851 = vshrl.u32 %v1850, 7
    %v1852 = vsub.s32 0, %v1851
    %v1853 = vrot.slane %v1834, %v1852
    %v1854 = vlaneseq
    %v1855 = vshrl.u32 %v1854, 7
    %v1856 = vsub.s32 0, %v1855
    %v1857 = vrot.slane %v1842, %v1856
    %v1858 = vlaneseq
    %v1859 = vshrl.u32 %v1858, 7
    %v1860 = vsub.s32 0, %v1859
    %v1861 = vrot.slane %v1844, %v1860
    %v1862 = vlaneseq
    %v1863 = vshrl.u32 %v1862, 7
    %v1864 = vsub.s32 0, %v1863
    %v1865 = vrot.slane %v1827, %v1864
    %v1866 = vlaneseq
    %v1867 = vshrl.u32 %v1866, 7
    %v1868 = vsub.s32 0, %v1867
    %v1869 = vrot.slane %v1841, %v1868
    %v1870 = vlaneseq
    %v1871 = vshrl.u32 %v1870, 7
    %v1872 = vsub.s32 0, %v1871
    %v1873 = vrot.slane %v1843, %v1872
    %v1874 = vlaneseq
    %v1875 = vshrl.u32 %v1874, 7
    %v1876 = vsub.s32 0, %v1875
    %v1877 = vrot.slane %v1845, %v1876
    %v1886 = vmul.f32 %v1849, %v1709
    %v1887 = vmul.f32 %v1849, %v1710
    %v1888 = vmul.f32 %v1849, %v1711
    %v1889 = vmul.f32 %v1849, %v1712
    %v1890 = vmul.f32 %v1849, %v1713
    %v1891 = vmul.f32 %v1849, %v1714
    %v1892 = vmul.f32 %v1849, %v1715
    %v1893 = vmul.f32 %v1849, %v1716
    %v1894 = vmul.f32 %v1849, %v1717
    %v1895 = vmul.f32 %v1849, %v1718
    %v1896 = vmul.f32 %v1849, %v1719
    %v1897 = vmul.f32 %v1849, %v1720
    %v1898 = vmul.f32 %v1849, %v1721
    %v1899 = vmul.f32 %v1849, %v1722
    %v1900 = vmul.f32 %v1849, %v1723
    %v1901 = vmul.f32 %v1849, %v1724
    %v1902 = vmul.f32 %v1853, %v1709
    %v1903 = vmul.f32 %v1853, %v1710
    %v1904 = vmul.f32 %v1853, %v1711
    %v1905 = vmul.f32 %v1853, %v1712
    %v1906 = vmul.f32 %v1853, %v1713
    %v1907 = vmul.f32 %v1853, %v1714
    %v1908 = vmul.f32 %v1853, %v1715
    %v1909 = vmul.f32 %v1853, %v1716
    %v1910 = vmul.f32 %v1853, %v1717
    %v1911 = vmul.f32 %v1853, %v1718
    %v1912 = vmul.f32 %v1853, %v1719
    %v1913 = vmul.f32 %v1853, %v1720
    %v1914 = vmul.f32 %v1853, %v1721
    %v1915 = vmul.f32 %v1853, %v1722
    %v1916 = vmul.f32 %v1853, %v1723
    %v1917 = vmul.f32 %v1853, %v1724
    %v1918 = vmul.f32 %v1857, %v1709
    %v1919 = vmul.f32 %v1857, %v1710
    %v1920 = vmul.f32 %v1857, %v1711
    %v1921 = vmul.f32 %v1857, %v1712
    %v1922 = vmul.f32 %v1857, %v1713
    %v1923 = vmul.f32 %v1857, %v1714
    %v1924 = vmul.f32 %v1857, %v1715
    %v1925 = vmul.f32 %v1857, %v1716
    %v1926 = vmul.f32 %v1857, %v1717
    %v1927 = vmul.f32 %v1857, %v1718
    %v1928 = vmul.f32 %v1857, %v1719
    %v1929 = vmul.f32 %v1857, %v1720
    %v1930 = vmul.f32 %v1857, %v1721
    %v1931 = vmul.f32 %v1857, %v1722
    %v1932 = vmul.f32 %v1857, %v1723
    %v1933 = vmul.f32 %v1857, %v1724
    %v1934 = vmul.f32 %v1861, %v1709
    %v1935 = vmul.f32 %v1861, %v1710
    %v1936 = vmul.f32 %v1861, %v1711
    %v1937 = vmul.f32 %v1861, %v1712
    %v1938 = vmul.f32 %v1861, %v1713
    %v1939 = vmul.f32 %v1861, %v1714
    %v1940 = vmul.f32 %v1861, %v1715
    %v1941 = vmul.f32 %v1861, %v1716
    %v1942 = vmul.f32 %v1861, %v1717
    %v1943 = vmul.f32 %v1861, %v1718
    %v1944 = vmul.f32 %v1861, %v1719
    %v1945 = vmul.f32 %v1861, %v1720
    %v1946 = vmul.f32 %v1861, %v1721
    %v1947 = vmul.f32 %v1861, %v1722
    %v1948 = vmul.f32 %v1861, %v1723
    %v1949 = vmul.f32 %v1861, %v1724
    %v1950 = vmul.f32 %v1865, %v1709
    %v1951 = vmul.f32 %v1865, %v1710
    %v1952 = vmul.f32 %v1865, %v1711
    %v1953 = vmul.f32 %v1865, %v1712
    %v1954 = vmul.f32 %v1865, %v1713
    %v1955 = vmul.f32 %v1865, %v1714
    %v1956 = vmul.f32 %v1865, %v1715
    %v1957 = vmul.f32 %v1865, %v1716
    %v1958 = vmul.f32 %v1865, %v1717
    %v1959 = vmul.f32 %v1865, %v1718
    %v1960 = vmul.f32 %v1865, %v1719
    %v1961 = vmul.f32 %v1865, %v1720
    %v1962 = vmul.f32 %v1865, %v1721
    %v1963 = vmul.f32 %v1865, %v1722
    %v1964 = vmul.f32 %v1865, %v1723
    %v1965 = vmul.f32 %v1865, %v1724
    %v1966 = vmul.f32 %v1869, %v1709
    %v1967 = vmul.f32 %v1869, %v1710
    %v1968 = vmul.f32 %v1869, %v1711
    %v1969 = vmul.f32 %v1869, %v1712
    %v1970 = vmul.f32 %v1869, %v1713
    %v1971 = vmul.f32 %v1869, %v1714
    %v1972 = vmul.f32 %v1869, %v1715
    %v1973 = vmul.f32 %v1869, %v1716
    %v1974 = vmul.f32 %v1869, %v1717
    %v1975 = vmul.f32 %v1869, %v1718
    %v1976 = vmul.f32 %v1869, %v1719
    %v1977 = vmul.f32 %v1869, %v1720
    %v1978 = vmul.f32 %v1869, %v1721
    %v1979 = vmul.f32 %v1869, %v1722
    %v1980 = vmul.f32 %v1869, %v1723
    %v1981 = vmul.f32 %v1869, %v1724
    %v1982 = vmul.f32 %v1873, %v1709
    %v1983 = vmul.f32 %v1873, %v1710
    %v1984 = vmul.f32 %v1873, %v1711
    %v1985 = vmul.f32 %v1873, %v1712
    %v1986 = vmul.f32 %v1873, %v1713
    %v1987 = vmul.f32 %v1873, %v1714
    %v1988 = vmul.f32 %v1873, %v1715
    %v1989 = vmul.f32 %v1873, %v1716
    %v1990 = vmul.f32 %v1873, %v1717
    %v1991 = vmul.f32 %v1873, %v1718
    %v1992 = vmul.f32 %v1873, %v1719
    %v1993 = vmul.f32 %v1873, %v1720
    %v1994 = vmul.f32 %v1873, %v1721
    %v1995 = vmul.f32 %v1873, %v1722
    %v1996 = vmul.f32 %v1873, %v1723
    %v1997 = vmul.f32 %v1873, %v1724
    %v1998 = vmul.f32 %v1877, %v1709
    %v1999 = vmul.f32 %v1877, %v1710
    %v2000 = vmul.f32 %v1877, %v1711
    %v2001 = vmul.f32 %v1877, %v1712
    %v2002 = vmul.f32 %v1877, %v1713
    %v2003 = vmul.f32 %v1877, %v1714
    %v2004 = vmul.f32 %v1877, %v1715
    %v2005 = vmul.f32 %v1877, %v1716
    %v2006 = vmul.f32 %v1877, %v1717
    %v2007 = vmul.f32 %v1877, %v1718
    %v2008 = vmul.f32 %v1877, %v1719
    %v2009 = vmul.f32 %v1877, %v1720
    %v2010 = vmul.f32 %v1877, %v1721
    %v2011 = vmul.f32 %v1877, %v1722
    %v2012 = vmul.f32 %v1877, %v1723
    %v2013 = vmul.f32 %v1877, %v1724
    %v2014 = vsel %vm1707, %v1886, -inf
    %v2015 = vsel %vm1707, %v1887, -inf
    %v2016 = vsel %vm1707, %v1888, -inf
    %v2017 = vsel %vm1707, %v1889, -inf
    %v2018 = vsel %vm1707, %v1890, -inf
    %v2019 = vsel %vm1707, %v1891, -inf
    %v2020 = vsel %vm1707, %v1892, -inf
    %v2021 = vsel %vm1707, %v1893, -inf
    %v2022 = vsel %vm1707, %v1894, -inf
    %v2023 = vsel %vm1707, %v1895, -inf
    %v2024 = vsel %vm1707, %v1896, -inf
    %v2025 = vsel %vm1707, %v1897, -inf
    %v2026 = vsel %vm1707, %v1898, -inf
    %v2027 = vsel %vm1707, %v1899, -inf
    %v2028 = vsel %vm1707, %v1900, -inf
    %v2029 = vsel %vm1707, %v1901, -inf
    %v2030 = vsel %vm1707, %v1902, -inf
    %v2031 = vsel %vm1707, %v1903, -inf
    %v2032 = vsel %vm1707, %v1904, -inf
    %v2033 = vsel %vm1707, %v1905, -inf
    %v2034 = vsel %vm1707, %v1906, -inf
    %v2035 = vsel %vm1707, %v1907, -inf
    %v2036 = vsel %vm1707, %v1908, -inf
    %v2037 = vsel %vm1707, %v1909, -inf
    %v2038 = vsel %vm1707, %v1910, -inf
    %v2039 = vsel %vm1707, %v1911, -inf
    %v2040 = vsel %vm1707, %v1912, -inf
    %v2041 = vsel %vm1707, %v1913, -inf
    %v2042 = vsel %vm1707, %v1914, -inf
    %v2043 = vsel %vm1707, %v1915, -inf
    %v2044 = vsel %vm1707, %v1916, -inf
    %v2045 = vsel %vm1707, %v1917, -inf
    %v2046 = vsel %vm1707, %v1918, -inf
    %v2047 = vsel %vm1707, %v1919, -inf
    %v2048 = vsel %vm1707, %v1920, -inf
    %v2049 = vsel %vm1707, %v1921, -inf
    %v2050 = vsel %vm1707, %v1922, -inf
    %v2051 = vsel %vm1707, %v1923, -inf
    %v2052 = vsel %vm1707, %v1924, -inf
    %v2053 = vsel %vm1707, %v1925, -inf
    %v2054 = vsel %vm1707, %v1926, -inf
    %v2055 = vsel %vm1707, %v1927, -inf
    %v2056 = vsel %vm1707, %v1928, -inf
    %v2057 = vsel %vm1707, %v1929, -inf
    %v2058 = vsel %vm1707, %v1930, -inf
    %v2059 = vsel %vm1707, %v1931, -inf
    %v2060 = vsel %vm1707, %v1932, -inf
    %v2061 = vsel %vm1707, %v1933, -inf
    %v2062 = vsel %vm1707, %v1934, -inf
    %v2063 = vsel %vm1707, %v1935, -inf
    %v2064 = vsel %vm1707, %v1936, -inf
    %v2065 = vsel %vm1707, %v1937, -inf
    %v2066 = vsel %vm1707, %v1938, -inf
    %v2067 = vsel %vm1707, %v1939, -inf
    %v2068 = vsel %vm1707, %v1940, -inf
    %v2069 = vsel %vm1707, %v1941, -inf
    %v2070 = vsel %vm1707, %v1942, -inf
    %v2071 = vsel %vm1707, %v1943, -inf
    %v2072 = vsel %vm1707, %v1944, -inf
    %v2073 = vsel %vm1707, %v1945, -inf
    %v2074 = vsel %vm1707, %v1946, -inf
    %v2075 = vsel %vm1707, %v1947, -inf
    %v2076 = vsel %vm1707, %v1948, -inf
    %v2077 = vsel %vm1707, %v1949, -inf
    %v2078 = vsel %vm1707, %v1950, -inf
    %v2079 = vsel %vm1707, %v1951, -inf
    %v2080 = vsel %vm1707, %v1952, -inf
    %v2081 = vsel %vm1707, %v1953, -inf
    %v2082 = vsel %vm1707, %v1954, -inf
    %v2083 = vsel %vm1707, %v1955, -inf
    %v2084 = vsel %vm1707, %v1956, -inf
    %v2085 = vsel %vm1707, %v1957, -inf
    %v2086 = vsel %vm1707, %v1958, -inf
    %v2087 = vsel %vm1707, %v1959, -inf
    %v2088 = vsel %vm1707, %v1960, -inf
    %v2089 = vsel %vm1707, %v1961, -inf
    %v2090 = vsel %vm1707, %v1962, -inf
    %v2091 = vsel %vm1707, %v1963, -inf
    %v2092 = vsel %vm1707, %v1964, -inf
    %v2093 = vsel %vm1707, %v1965, -inf
    %v2094 = vsel %vm1707, %v1966, -inf
    %v2095 = vsel %vm1707, %v1967, -inf
    %v2096 = vsel %vm1707, %v1968, -inf
    %v2097 = vsel %vm1707, %v1969, -inf
    %v2098 = vsel %vm1707, %v1970, -inf
    %v2099 = vsel %vm1707, %v1971, -inf
    %v2100 = vsel %vm1707, %v1972, -inf
    %v2101 = vsel %vm1707, %v1973, -inf
    %v2102 = vsel %vm1707, %v1974, -inf
    %v2103 = vsel %vm1707, %v1975, -inf
    %v2104 = vsel %vm1707, %v1976, -inf
    %v2105 = vsel %vm1707, %v1977, -inf
    %v2106 = vsel %vm1707, %v1978, -inf
    %v2107 = vsel %vm1707, %v1979, -inf
    %v2108 = vsel %vm1707, %v1980, -inf
    %v2109 = vsel %vm1707, %v1981, -inf
    %v2110 = vsel %vm1707, %v1982, -inf
    %v2111 = vsel %vm1707, %v1983, -inf
    %v2112 = vsel %vm1707, %v1984, -inf
    %v2113 = vsel %vm1707, %v1985, -inf
    %v2114 = vsel %vm1707, %v1986, -inf
    %v2115 = vsel %vm1707, %v1987, -inf
    %v2116 = vsel %vm1707, %v1988, -inf
    %v2117 = vsel %vm1707, %v1989, -inf
    %v2118 = vsel %vm1707, %v1990, -inf
    %v2119 = vsel %vm1707, %v1991, -inf
    %v2120 = vsel %vm1707, %v1992, -inf
    %v2121 = vsel %vm1707, %v1993, -inf
    %v2122 = vsel %vm1707, %v1994, -inf
    %v2123 = vsel %vm1707, %v1995, -inf
    %v2124 = vsel %vm1707, %v1996, -inf
    %v2125 = vsel %vm1707, %v1997, -inf
    %v2126 = vsel %vm1707, %v1998, -inf
    %v2127 = vsel %vm1707, %v1999, -inf
    %v2128 = vsel %vm1707, %v2000, -inf
    %v2129 = vsel %vm1707, %v2001, -inf
    %v2130 = vsel %vm1707, %v2002, -inf
    %v2131 = vsel %vm1707, %v2003, -inf
    %v2132 = vsel %vm1707, %v2004, -inf
    %v2133 = vsel %vm1707, %v2005, -inf
    %v2134 = vsel %vm1707, %v2006, -inf
    %v2135 = vsel %vm1707, %v2007, -inf
    %v2136 = vsel %vm1707, %v2008, -inf
    %v2137 = vsel %vm1707, %v2009, -inf
    %v2138 = vsel %vm1707, %v2010, -inf
    %v2139 = vsel %vm1707, %v2011, -inf
    %v2140 = vsel %vm1707, %v2012, -inf
    %v2141 = vsel %vm1707, %v2013, -inf
    %2142 = vmax.xlane.f32.xlu0 %v2014
    %v2143 = vpop.xlane.xlu0 %2142
    %2144 = vmax.xlane.f32.xlu0 %v2015
    %v2145 = vpop.xlane.xlu0 %2144
    %2146 = vmax.xlane.f32.xlu0 %v2016
    %v2147 = vpop.xlane.xlu0 %2146
    %2148 = vmax.xlane.f32.xlu0 %v2017
    %v2149 = vpop.xlane.xlu0 %2148
    %2150 = vmax.xlane.f32.xlu0 %v2018
    %v2151 = vpop.xlane.xlu0 %2150
    %2152 = vmax.xlane.f32.xlu0 %v2019
    %v2153 = vpop.xlane.xlu0 %2152
    %2154 = vmax.xlane.f32.xlu0 %v2020
    %v2155 = vpop.xlane.xlu0 %2154
    %2156 = vmax.xlane.f32.xlu0 %v2021
    %v2157 = vpop.xlane.xlu0 %2156
    %2158 = vmax.xlane.f32.xlu0 %v2022
    %v2159 = vpop.xlane.xlu0 %2158
    %2160 = vmax.xlane.f32.xlu0 %v2023
    %v2161 = vpop.xlane.xlu0 %2160
    %2162 = vmax.xlane.f32.xlu0 %v2024
    %v2163 = vpop.xlane.xlu0 %2162
    %2164 = vmax.xlane.f32.xlu0 %v2025
    %v2165 = vpop.xlane.xlu0 %2164
    %2166 = vmax.xlane.f32.xlu0 %v2026
    %v2167 = vpop.xlane.xlu0 %2166
    %2168 = vmax.xlane.f32.xlu0 %v2027
    %v2169 = vpop.xlane.xlu0 %2168
    %2170 = vmax.xlane.f32.xlu0 %v2028
    %v2171 = vpop.xlane.xlu0 %2170
    %2172 = vmax.xlane.f32.xlu0 %v2029
    %v2173 = vpop.xlane.xlu0 %2172
    %2174 = vmax.xlane.f32.xlu0 %v2030
    %v2175 = vpop.xlane.xlu0 %2174
    %2176 = vmax.xlane.f32.xlu0 %v2031
    %v2177 = vpop.xlane.xlu0 %2176
    %2178 = vmax.xlane.f32.xlu0 %v2032
    %v2179 = vpop.xlane.xlu0 %2178
    %2180 = vmax.xlane.f32.xlu0 %v2033
    %v2181 = vpop.xlane.xlu0 %2180
    %2182 = vmax.xlane.f32.xlu0 %v2034
    %v2183 = vpop.xlane.xlu0 %2182
    %2184 = vmax.xlane.f32.xlu0 %v2035
    %v2185 = vpop.xlane.xlu0 %2184
    %2186 = vmax.xlane.f32.xlu0 %v2036
    %v2187 = vpop.xlane.xlu0 %2186
    %2188 = vmax.xlane.f32.xlu0 %v2037
    %v2189 = vpop.xlane.xlu0 %2188
    %2190 = vmax.xlane.f32.xlu0 %v2038
    %v2191 = vpop.xlane.xlu0 %2190
    %2192 = vmax.xlane.f32.xlu0 %v2039
    %v2193 = vpop.xlane.xlu0 %2192
    %2194 = vmax.xlane.f32.xlu0 %v2040
    %v2195 = vpop.xlane.xlu0 %2194
    %2196 = vmax.xlane.f32.xlu0 %v2041
    %v2197 = vpop.xlane.xlu0 %2196
    %2198 = vmax.xlane.f32.xlu0 %v2042
    %v2199 = vpop.xlane.xlu0 %2198
    %2200 = vmax.xlane.f32.xlu0 %v2043
    %v2201 = vpop.xlane.xlu0 %2200
    %2202 = vmax.xlane.f32.xlu0 %v2044
    %v2203 = vpop.xlane.xlu0 %2202
    %2204 = vmax.xlane.f32.xlu0 %v2045
    %v2205 = vpop.xlane.xlu0 %2204
    %2206 = vmax.xlane.f32.xlu0 %v2046
    %v2207 = vpop.xlane.xlu0 %2206
    %2208 = vmax.xlane.f32.xlu0 %v2047
    %v2209 = vpop.xlane.xlu0 %2208
    %2210 = vmax.xlane.f32.xlu0 %v2048
    %v2211 = vpop.xlane.xlu0 %2210
    %2212 = vmax.xlane.f32.xlu0 %v2049
    %v2213 = vpop.xlane.xlu0 %2212
    %2214 = vmax.xlane.f32.xlu0 %v2050
    %v2215 = vpop.xlane.xlu0 %2214
    %2216 = vmax.xlane.f32.xlu0 %v2051
    %v2217 = vpop.xlane.xlu0 %2216
    %2218 = vmax.xlane.f32.xlu0 %v2052
    %v2219 = vpop.xlane.xlu0 %2218
    %2220 = vmax.xlane.f32.xlu0 %v2053
    %v2221 = vpop.xlane.xlu0 %2220
    %2222 = vmax.xlane.f32.xlu0 %v2054
    %v2223 = vpop.xlane.xlu0 %2222
    %2224 = vmax.xlane.f32.xlu0 %v2055
    %v2225 = vpop.xlane.xlu0 %2224
    %2226 = vmax.xlane.f32.xlu0 %v2056
    %v2227 = vpop.xlane.xlu0 %2226
    %2228 = vmax.xlane.f32.xlu0 %v2057
    %v2229 = vpop.xlane.xlu0 %2228
    %2230 = vmax.xlane.f32.xlu0 %v2058
    %v2231 = vpop.xlane.xlu0 %2230
    %2232 = vmax.xlane.f32.xlu0 %v2059
    %v2233 = vpop.xlane.xlu0 %2232
    %2234 = vmax.xlane.f32.xlu0 %v2060
    %v2235 = vpop.xlane.xlu0 %2234
    %2236 = vmax.xlane.f32.xlu0 %v2061
    %v2237 = vpop.xlane.xlu0 %2236
    %2238 = vmax.xlane.f32.xlu0 %v2062
    %v2239 = vpop.xlane.xlu0 %2238
    %2240 = vmax.xlane.f32.xlu0 %v2063
    %v2241 = vpop.xlane.xlu0 %2240
    %2242 = vmax.xlane.f32.xlu0 %v2064
    %v2243 = vpop.xlane.xlu0 %2242
    %2244 = vmax.xlane.f32.xlu0 %v2065
    %v2245 = vpop.xlane.xlu0 %2244
    %2246 = vmax.xlane.f32.xlu0 %v2066
    %v2247 = vpop.xlane.xlu0 %2246
    %2248 = vmax.xlane.f32.xlu0 %v2067
    %v2249 = vpop.xlane.xlu0 %2248
    %2250 = vmax.xlane.f32.xlu0 %v2068
    %v2251 = vpop.xlane.xlu0 %2250
    %2252 = vmax.xlane.f32.xlu0 %v2069
    %v2253 = vpop.xlane.xlu0 %2252
    %2254 = vmax.xlane.f32.xlu0 %v2070
    %v2255 = vpop.xlane.xlu0 %2254
    %2256 = vmax.xlane.f32.xlu0 %v2071
    %v2257 = vpop.xlane.xlu0 %2256
    %2258 = vmax.xlane.f32.xlu0 %v2072
    %v2259 = vpop.xlane.xlu0 %2258
    %2260 = vmax.xlane.f32.xlu0 %v2073
    %v2261 = vpop.xlane.xlu0 %2260
    %2262 = vmax.xlane.f32.xlu0 %v2074
    %v2263 = vpop.xlane.xlu0 %2262
    %2264 = vmax.xlane.f32.xlu0 %v2075
    %v2265 = vpop.xlane.xlu0 %2264
    %2266 = vmax.xlane.f32.xlu0 %v2076
    %v2267 = vpop.xlane.xlu0 %2266
    %2268 = vmax.xlane.f32.xlu0 %v2077
    %v2269 = vpop.xlane.xlu0 %2268
    %2270 = vmax.xlane.f32.xlu0 %v2078
    %v2271 = vpop.xlane.xlu0 %2270
    %2272 = vmax.xlane.f32.xlu0 %v2079
    %v2273 = vpop.xlane.xlu0 %2272
    %2274 = vmax.xlane.f32.xlu0 %v2080
    %v2275 = vpop.xlane.xlu0 %2274
    %2276 = vmax.xlane.f32.xlu0 %v2081
    %v2277 = vpop.xlane.xlu0 %2276
    %2278 = vmax.xlane.f32.xlu0 %v2082
    %v2279 = vpop.xlane.xlu0 %2278
    %2280 = vmax.xlane.f32.xlu0 %v2083
    %v2281 = vpop.xlane.xlu0 %2280
    %2282 = vmax.xlane.f32.xlu0 %v2084
    %v2283 = vpop.xlane.xlu0 %2282
    %2284 = vmax.xlane.f32.xlu0 %v2085
    %v2285 = vpop.xlane.xlu0 %2284
    %2286 = vmax.xlane.f32.xlu0 %v2086
    %v2287 = vpop.xlane.xlu0 %2286
    %2288 = vmax.xlane.f32.xlu0 %v2087
    %v2289 = vpop.xlane.xlu0 %2288
    %2290 = vmax.xlane.f32.xlu0 %v2088
    %v2291 = vpop.xlane.xlu0 %2290
    %2292 = vmax.xlane.f32.xlu0 %v2089
    %v2293 = vpop.xlane.xlu0 %2292
    %2294 = vmax.xlane.f32.xlu0 %v2090
    %v2295 = vpop.xlane.xlu0 %2294
    %2296 = vmax.xlane.f32.xlu0 %v2091
    %v2297 = vpop.xlane.xlu0 %2296
    %2298 = vmax.xlane.f32.xlu0 %v2092
    %v2299 = vpop.xlane.xlu0 %2298
    %2300 = vmax.xlane.f32.xlu0 %v2093
    %v2301 = vpop.xlane.xlu0 %2300
    %2302 = vmax.xlane.f32.xlu0 %v2094
    %v2303 = vpop.xlane.xlu0 %2302
    %2304 = vmax.xlane.f32.xlu0 %v2095
    %v2305 = vpop.xlane.xlu0 %2304
    %2306 = vmax.xlane.f32.xlu0 %v2096
    %v2307 = vpop.xlane.xlu0 %2306
    %2308 = vmax.xlane.f32.xlu0 %v2097
    %v2309 = vpop.xlane.xlu0 %2308
    %2310 = vmax.xlane.f32.xlu0 %v2098
    %v2311 = vpop.xlane.xlu0 %2310
    %2312 = vmax.xlane.f32.xlu0 %v2099
    %v2313 = vpop.xlane.xlu0 %2312
    %2314 = vmax.xlane.f32.xlu0 %v2100
    %v2315 = vpop.xlane.xlu0 %2314
    %2316 = vmax.xlane.f32.xlu0 %v2101
    %v2317 = vpop.xlane.xlu0 %2316
    %2318 = vmax.xlane.f32.xlu0 %v2102
    %v2319 = vpop.xlane.xlu0 %2318
    %2320 = vmax.xlane.f32.xlu0 %v2103
    %v2321 = vpop.xlane.xlu0 %2320
    %2322 = vmax.xlane.f32.xlu0 %v2104
    %v2323 = vpop.xlane.xlu0 %2322
    %2324 = vmax.xlane.f32.xlu0 %v2105
    %v2325 = vpop.xlane.xlu0 %2324
    %2326 = vmax.xlane.f32.xlu0 %v2106
    %v2327 = vpop.xlane.xlu0 %2326
    %2328 = vmax.xlane.f32.xlu0 %v2107
    %v2329 = vpop.xlane.xlu0 %2328
    %2330 = vmax.xlane.f32.xlu0 %v2108
    %v2331 = vpop.xlane.xlu0 %2330
    %2332 = vmax.xlane.f32.xlu0 %v2109
    %v2333 = vpop.xlane.xlu0 %2332
    %2334 = vmax.xlane.f32.xlu0 %v2110
    %v2335 = vpop.xlane.xlu0 %2334
    %2336 = vmax.xlane.f32.xlu0 %v2111
    %v2337 = vpop.xlane.xlu0 %2336
    %2338 = vmax.xlane.f32.xlu0 %v2112
    %v2339 = vpop.xlane.xlu0 %2338
    %2340 = vmax.xlane.f32.xlu0 %v2113
    %v2341 = vpop.xlane.xlu0 %2340
    %2342 = vmax.xlane.f32.xlu0 %v2114
    %v2343 = vpop.xlane.xlu0 %2342
    %2344 = vmax.xlane.f32.xlu0 %v2115
    %v2345 = vpop.xlane.xlu0 %2344
    %2346 = vmax.xlane.f32.xlu0 %v2116
    %v2347 = vpop.xlane.xlu0 %2346
    %2348 = vmax.xlane.f32.xlu0 %v2117
    %v2349 = vpop.xlane.xlu0 %2348
    %2350 = vmax.xlane.f32.xlu0 %v2118
    %v2351 = vpop.xlane.xlu0 %2350
    %2352 = vmax.xlane.f32.xlu0 %v2119
    %v2353 = vpop.xlane.xlu0 %2352
    %2354 = vmax.xlane.f32.xlu0 %v2120
    %v2355 = vpop.xlane.xlu0 %2354
    %2356 = vmax.xlane.f32.xlu0 %v2121
    %v2357 = vpop.xlane.xlu0 %2356
    %2358 = vmax.xlane.f32.xlu0 %v2122
    %v2359 = vpop.xlane.xlu0 %2358
    %2360 = vmax.xlane.f32.xlu0 %v2123
    %v2361 = vpop.xlane.xlu0 %2360
    %2362 = vmax.xlane.f32.xlu0 %v2124
    %v2363 = vpop.xlane.xlu0 %2362
    %2364 = vmax.xlane.f32.xlu0 %v2125
    %v2365 = vpop.xlane.xlu0 %2364
    %2366 = vmax.xlane.f32.xlu0 %v2126
    %v2367 = vpop.xlane.xlu0 %2366
    %2368 = vmax.xlane.f32.xlu0 %v2127
    %v2369 = vpop.xlane.xlu0 %2368
    %2370 = vmax.xlane.f32.xlu0 %v2128
    %v2371 = vpop.xlane.xlu0 %2370
    %2372 = vmax.xlane.f32.xlu0 %v2129
    %v2373 = vpop.xlane.xlu0 %2372
    %2374 = vmax.xlane.f32.xlu0 %v2130
    %v2375 = vpop.xlane.xlu0 %2374
    %2376 = vmax.xlane.f32.xlu0 %v2131
    %v2377 = vpop.xlane.xlu0 %2376
    %2378 = vmax.xlane.f32.xlu0 %v2132
    %v2379 = vpop.xlane.xlu0 %2378
    %2380 = vmax.xlane.f32.xlu0 %v2133
    %v2381 = vpop.xlane.xlu0 %2380
    %2382 = vmax.xlane.f32.xlu0 %v2134
    %v2383 = vpop.xlane.xlu0 %2382
    %2384 = vmax.xlane.f32.xlu0 %v2135
    %v2385 = vpop.xlane.xlu0 %2384
    %2386 = vmax.xlane.f32.xlu0 %v2136
    %v2387 = vpop.xlane.xlu0 %2386
    %2388 = vmax.xlane.f32.xlu0 %v2137
    %v2389 = vpop.xlane.xlu0 %2388
    %2390 = vmax.xlane.f32.xlu0 %v2138
    %v2391 = vpop.xlane.xlu0 %2390
    %2392 = vmax.xlane.f32.xlu0 %v2139
    %v2393 = vpop.xlane.xlu0 %2392
    %2394 = vmax.xlane.f32.xlu0 %v2140
    %v2395 = vpop.xlane.xlu0 %2394
    %2396 = vmax.xlane.f32.xlu0 %v2141
    %v2397 = vpop.xlane.xlu0 %2396
    %v2398 = vmul.f32 %v1793, 0.8
    %v2399 = vmul.f32 %v2143, 0.2
    %v2400 = vmul.f32 %v2145, 0.2
    %v2401 = vmul.f32 %v2147, 0.2
    %v2402 = vmul.f32 %v2149, 0.2
    %v2403 = vmul.f32 %v2151, 0.2
    %v2404 = vmul.f32 %v2153, 0.2
    %v2405 = vmul.f32 %v2155, 0.2
    %v2406 = vmul.f32 %v2157, 0.2
    %v2407 = vmul.f32 %v2159, 0.2
    %v2408 = vmul.f32 %v2161, 0.2
    %v2409 = vmul.f32 %v2163, 0.2
    %v2410 = vmul.f32 %v2165, 0.2
    %v2411 = vmul.f32 %v2167, 0.2
    %v2412 = vmul.f32 %v2169, 0.2
    %v2413 = vmul.f32 %v2171, 0.2
    %v2414 = vmul.f32 %v2173, 0.2
    %v2415 = vmul.f32 %v2175, 0.2
    %v2416 = vmul.f32 %v2177, 0.2
    %v2417 = vmul.f32 %v2179, 0.2
    %v2418 = vmul.f32 %v2181, 0.2
    %v2419 = vmul.f32 %v2183, 0.2
    %v2420 = vmul.f32 %v2185, 0.2
    %v2421 = vmul.f32 %v2187, 0.2
    %v2422 = vmul.f32 %v2189, 0.2
    %v2423 = vmul.f32 %v2191, 0.2
    %v2424 = vmul.f32 %v2193, 0.2
    %v2425 = vmul.f32 %v2195, 0.2
    %v2426 = vmul.f32 %v2197, 0.2
    %v2427 = vmul.f32 %v2199, 0.2
    %v2428 = vmul.f32 %v2201, 0.2
    %v2429 = vmul.f32 %v2203, 0.2
    %v2430 = vmul.f32 %v2205, 0.2
    %v2431 = vmul.f32 %v2207, 0.2
    %v2432 = vmul.f32 %v2209, 0.2
    %v2433 = vmul.f32 %v2211, 0.2
    %v2434 = vmul.f32 %v2213, 0.2
    %v2435 = vmul.f32 %v2215, 0.2
    %v2436 = vmul.f32 %v2217, 0.2
    %v2437 = vmul.f32 %v2219, 0.2
    %v2438 = vmul.f32 %v2221, 0.2
    %v2439 = vmul.f32 %v2223, 0.2
    %v2440 = vmul.f32 %v2225, 0.2
    %v2441 = vmul.f32 %v2227, 0.2
    %v2442 = vmul.f32 %v2229, 0.2
    %v2443 = vmul.f32 %v2231, 0.2
    %v2444 = vmul.f32 %v2233, 0.2
    %v2445 = vmul.f32 %v2235, 0.2
    %v2446 = vmul.f32 %v2237, 0.2
    %v2447 = vmul.f32 %v2239, 0.2
    %v2448 = vmul.f32 %v2241, 0.2
    %v2449 = vmul.f32 %v2243, 0.2
    %v2450 = vmul.f32 %v2245, 0.2
    %v2451 = vmul.f32 %v2247, 0.2
    %v2452 = vmul.f32 %v2249, 0.2
    %v2453 = vmul.f32 %v2251, 0.2
    %v2454 = vmul.f32 %v2253, 0.2
    %v2455 = vmul.f32 %v2255, 0.2
    %v2456 = vmul.f32 %v2257, 0.2
    %v2457 = vmul.f32 %v2259, 0.2
    %v2458 = vmul.f32 %v2261, 0.2
    %v2459 = vmul.f32 %v2263, 0.2
    %v2460 = vmul.f32 %v2265, 0.2
    %v2461 = vmul.f32 %v2267, 0.2
    %v2462 = vmul.f32 %v2269, 0.2
    %v2463 = vmul.f32 %v2271, 0.2
    %v2464 = vmul.f32 %v2273, 0.2
    %v2465 = vmul.f32 %v2275, 0.2
    %v2466 = vmul.f32 %v2277, 0.2
    %v2467 = vmul.f32 %v2279, 0.2
    %v2468 = vmul.f32 %v2281, 0.2
    %v2469 = vmul.f32 %v2283, 0.2
    %v2470 = vmul.f32 %v2285, 0.2
    %v2471 = vmul.f32 %v2287, 0.2
    %v2472 = vmul.f32 %v2289, 0.2
    %v2473 = vmul.f32 %v2291, 0.2
    %v2474 = vmul.f32 %v2293, 0.2
    %v2475 = vmul.f32 %v2295, 0.2
    %v2476 = vmul.f32 %v2297, 0.2
    %v2477 = vmul.f32 %v2299, 0.2
    %v2478 = vmul.f32 %v2301, 0.2
    %v2479 = vmul.f32 %v2303, 0.2
    %v2480 = vmul.f32 %v2305, 0.2
    %v2481 = vmul.f32 %v2307, 0.2
    %v2482 = vmul.f32 %v2309, 0.2
    %v2483 = vmul.f32 %v2311, 0.2
    %v2484 = vmul.f32 %v2313, 0.2
    %v2485 = vmul.f32 %v2315, 0.2
    %v2486 = vmul.f32 %v2317, 0.2
    %v2487 = vmul.f32 %v2319, 0.2
    %v2488 = vmul.f32 %v2321, 0.2
    %v2489 = vmul.f32 %v2323, 0.2
    %v2490 = vmul.f32 %v2325, 0.2
    %v2491 = vmul.f32 %v2327, 0.2
    %v2492 = vmul.f32 %v2329, 0.2
    %v2493 = vmul.f32 %v2331, 0.2
    %v2494 = vmul.f32 %v2333, 0.2
    %v2495 = vmul.f32 %v2335, 0.2
    %v2496 = vmul.f32 %v2337, 0.2
    %v2497 = vmul.f32 %v2339, 0.2
    %v2498 = vmul.f32 %v2341, 0.2
    %v2499 = vmul.f32 %v2343, 0.2
    %v2500 = vmul.f32 %v2345, 0.2
    %v2501 = vmul.f32 %v2347, 0.2
    %v2502 = vmul.f32 %v2349, 0.2
    %v2503 = vmul.f32 %v2351, 0.2
    %v2504 = vmul.f32 %v2353, 0.2
    %v2505 = vmul.f32 %v2355, 0.2
    %v2506 = vmul.f32 %v2357, 0.2
    %v2507 = vmul.f32 %v2359, 0.2
    %v2508 = vmul.f32 %v2361, 0.2
    %v2509 = vmul.f32 %v2363, 0.2
    %v2510 = vmul.f32 %v2365, 0.2
    %v2511 = vmul.f32 %v2367, 0.2
    %v2512 = vmul.f32 %v2369, 0.2
    %v2513 = vmul.f32 %v2371, 0.2
    %v2514 = vmul.f32 %v2373, 0.2
    %v2515 = vmul.f32 %v2375, 0.2
    %v2516 = vmul.f32 %v2377, 0.2
    %v2517 = vmul.f32 %v2379, 0.2
    %v2518 = vmul.f32 %v2381, 0.2
    %v2519 = vmul.f32 %v2383, 0.2
    %v2520 = vmul.f32 %v2385, 0.2
    %v2521 = vmul.f32 %v2387, 0.2
    %v2522 = vmul.f32 %v2389, 0.2
    %v2523 = vmul.f32 %v2391, 0.2
    %v2524 = vmul.f32 %v2393, 0.2
    %v2525 = vmul.f32 %v2395, 0.2
    %v2526 = vmul.f32 %v2397, 0.2
    %v2655 = vlaneseq
    %v2656 = vshrl.u32 %v2655, 7
    %v2657 = vsub.s32 %v374, %v2656
    %v2658 = vrot.slane %v2399, %v2657
    %v2659 = vlaneseq
    %v2660 = vshrl.u32 %v2659, 7
    %v2661 = vsub.s32 %v1023, %v2660
    %v2662 = vrot.slane %v2400, %v2661
    %v2663 = vsel %vm1028, %v2662, %v2658
    %v2664 = vlaneseq
    %v2665 = vshrl.u32 %v2664, 7
    %v2666 = vsub.s32 %v1030, %v2665
    %v2667 = vrot.slane %v2401, %v2666
    %v2668 = vsel %vm1035, %v2667, %v2663
    %v2669 = vlaneseq
    %v2670 = vshrl.u32 %v2669, 7
    %v2671 = vsub.s32 %v1037, %v2670
    %v2672 = vrot.slane %v2402, %v2671
    %v2673 = vsel %vm1042, %v2672, %v2668
    %v2674 = vlaneseq
    %v2675 = vshrl.u32 %v2674, 7
    %v2676 = vsub.s32 %v1044, %v2675
    %v2677 = vrot.slane %v2403, %v2676
    %v2678 = vsel %vm1049, %v2677, %v2673
    %v2679 = vlaneseq
    %v2680 = vshrl.u32 %v2679, 7
    %v2681 = vsub.s32 %v1051, %v2680
    %v2682 = vrot.slane %v2404, %v2681
    %v2683 = vsel %vm1056, %v2682, %v2678
    %v2684 = vlaneseq
    %v2685 = vshrl.u32 %v2684, 7
    %v2686 = vsub.s32 %v1058, %v2685
    %v2687 = vrot.slane %v2405, %v2686
    %v2688 = vsel %vm1063, %v2687, %v2683
    %v2689 = vlaneseq
    %v2690 = vshrl.u32 %v2689, 7
    %v2691 = vsub.s32 %v1065, %v2690
    %v2692 = vrot.slane %v2406, %v2691
    %v2693 = vsel %vm1070, %v2692, %v2688
    %v2694 = vlaneseq
    %v2695 = vshrl.u32 %v2694, 7
    %v2696 = vsub.s32 %v1072, %v2695
    %v2697 = vrot.slane %v2407, %v2696
    %v2698 = vsel %vm1077, %v2697, %v2693
    %v2699 = vlaneseq
    %v2700 = vshrl.u32 %v2699, 7
    %v2701 = vsub.s32 %v1079, %v2700
    %v2702 = vrot.slane %v2408, %v2701
    %v2703 = vsel %vm1084, %v2702, %v2698
    %v2704 = vlaneseq
    %v2705 = vshrl.u32 %v2704, 7
    %v2706 = vsub.s32 %v1086, %v2705
    %v2707 = vrot.slane %v2409, %v2706
    %v2708 = vsel %vm1091, %v2707, %v2703
    %v2709 = vlaneseq
    %v2710 = vshrl.u32 %v2709, 7
    %v2711 = vsub.s32 %v1093, %v2710
    %v2712 = vrot.slane %v2410, %v2711
    %v2713 = vsel %vm1098, %v2712, %v2708
    %v2714 = vlaneseq
    %v2715 = vshrl.u32 %v2714, 7
    %v2716 = vsub.s32 %v1100, %v2715
    %v2717 = vrot.slane %v2411, %v2716
    %v2718 = vsel %vm1105, %v2717, %v2713
    %v2719 = vlaneseq
    %v2720 = vshrl.u32 %v2719, 7
    %v2721 = vsub.s32 %v1107, %v2720
    %v2722 = vrot.slane %v2412, %v2721
    %v2723 = vsel %vm1112, %v2722, %v2718
    %v2724 = vlaneseq
    %v2725 = vshrl.u32 %v2724, 7
    %v2726 = vsub.s32 %v1114, %v2725
    %v2727 = vrot.slane %v2413, %v2726
    %v2728 = vsel %vm1119, %v2727, %v2723
    %v2729 = vlaneseq
    %v2730 = vshrl.u32 %v2729, 7
    %v2731 = vsub.s32 %v1121, %v2730
    %v2732 = vrot.slane %v2414, %v2731
    %v2733 = vsel %vm1126, %v2732, %v2728
    %v2734 = vlaneseq
    %v2735 = vshrl.u32 %v2734, 7
    %v2736 = vsub.s32 %v374, %v2735
    %v2737 = vrot.slane %v2415, %v2736
    %v2738 = vlaneseq
    %v2739 = vshrl.u32 %v2738, 7
    %v2740 = vsub.s32 %v1023, %v2739
    %v2741 = vrot.slane %v2416, %v2740
    %v2742 = vsel %vm1028, %v2741, %v2737
    %v2743 = vlaneseq
    %v2744 = vshrl.u32 %v2743, 7
    %v2745 = vsub.s32 %v1030, %v2744
    %v2746 = vrot.slane %v2417, %v2745
    %v2747 = vsel %vm1035, %v2746, %v2742
    %v2748 = vlaneseq
    %v2749 = vshrl.u32 %v2748, 7
    %v2750 = vsub.s32 %v1037, %v2749
    %v2751 = vrot.slane %v2418, %v2750
    %v2752 = vsel %vm1042, %v2751, %v2747
    %v2753 = vlaneseq
    %v2754 = vshrl.u32 %v2753, 7
    %v2755 = vsub.s32 %v1044, %v2754
    %v2756 = vrot.slane %v2419, %v2755
    %v2757 = vsel %vm1049, %v2756, %v2752
    %v2758 = vlaneseq
    %v2759 = vshrl.u32 %v2758, 7
    %v2760 = vsub.s32 %v1051, %v2759
    %v2761 = vrot.slane %v2420, %v2760
    %v2762 = vsel %vm1056, %v2761, %v2757
    %v2763 = vlaneseq
    %v2764 = vshrl.u32 %v2763, 7
    %v2765 = vsub.s32 %v1058, %v2764
    %v2766 = vrot.slane %v2421, %v2765
    %v2767 = vsel %vm1063, %v2766, %v2762
    %v2768 = vlaneseq
    %v2769 = vshrl.u32 %v2768, 7
    %v2770 = vsub.s32 %v1065, %v2769
    %v2771 = vrot.slane %v2422, %v2770
    %v2772 = vsel %vm1070, %v2771, %v2767
    %v2773 = vlaneseq
    %v2774 = vshrl.u32 %v2773, 7
    %v2775 = vsub.s32 %v1072, %v2774
    %v2776 = vrot.slane %v2423, %v2775
    %v2777 = vsel %vm1077, %v2776, %v2772
    %v2778 = vlaneseq
    %v2779 = vshrl.u32 %v2778, 7
    %v2780 = vsub.s32 %v1079, %v2779
    %v2781 = vrot.slane %v2424, %v2780
    %v2782 = vsel %vm1084, %v2781, %v2777
    %v2783 = vlaneseq
    %v2784 = vshrl.u32 %v2783, 7
    %v2785 = vsub.s32 %v1086, %v2784
    %v2786 = vrot.slane %v2425, %v2785
    %v2787 = vsel %vm1091, %v2786, %v2782
    %v2788 = vlaneseq
    %v2789 = vshrl.u32 %v2788, 7
    %v2790 = vsub.s32 %v1093, %v2789
    %v2791 = vrot.slane %v2426, %v2790
    %v2792 = vsel %vm1098, %v2791, %v2787
    %v2793 = vlaneseq
    %v2794 = vshrl.u32 %v2793, 7
    %v2795 = vsub.s32 %v1100, %v2794
    %v2796 = vrot.slane %v2427, %v2795
    %v2797 = vsel %vm1105, %v2796, %v2792
    %v2798 = vlaneseq
    %v2799 = vshrl.u32 %v2798, 7
    %v2800 = vsub.s32 %v1107, %v2799
    %v2801 = vrot.slane %v2428, %v2800
    %v2802 = vsel %vm1112, %v2801, %v2797
    %v2803 = vlaneseq
    %v2804 = vshrl.u32 %v2803, 7
    %v2805 = vsub.s32 %v1114, %v2804
    %v2806 = vrot.slane %v2429, %v2805
    %v2807 = vsel %vm1119, %v2806, %v2802
    %v2808 = vlaneseq
    %v2809 = vshrl.u32 %v2808, 7
    %v2810 = vsub.s32 %v1121, %v2809
    %v2811 = vrot.slane %v2430, %v2810
    %v2812 = vsel %vm1126, %v2811, %v2807
    %v2813 = vlaneseq
    %v2814 = vshrl.u32 %v2813, 7
    %v2815 = vsub.s32 %v374, %v2814
    %v2816 = vrot.slane %v2431, %v2815
    %v2817 = vlaneseq
    %v2818 = vshrl.u32 %v2817, 7
    %v2819 = vsub.s32 %v1023, %v2818
    %v2820 = vrot.slane %v2432, %v2819
    %v2821 = vsel %vm1028, %v2820, %v2816
    %v2822 = vlaneseq
    %v2823 = vshrl.u32 %v2822, 7
    %v2824 = vsub.s32 %v1030, %v2823
    %v2825 = vrot.slane %v2433, %v2824
    %v2826 = vsel %vm1035, %v2825, %v2821
    %v2827 = vlaneseq
    %v2828 = vshrl.u32 %v2827, 7
    %v2829 = vsub.s32 %v1037, %v2828
    %v2830 = vrot.slane %v2434, %v2829
    %v2831 = vsel %vm1042, %v2830, %v2826
    %v2832 = vlaneseq
    %v2833 = vshrl.u32 %v2832, 7
    %v2834 = vsub.s32 %v1044, %v2833
    %v2835 = vrot.slane %v2435, %v2834
    %v2836 = vsel %vm1049, %v2835, %v2831
    %v2837 = vlaneseq
    %v2838 = vshrl.u32 %v2837, 7
    %v2839 = vsub.s32 %v1051, %v2838
    %v2840 = vrot.slane %v2436, %v2839
    %v2841 = vsel %vm1056, %v2840, %v2836
    %v2842 = vlaneseq
    %v2843 = vshrl.u32 %v2842, 7
    %v2844 = vsub.s32 %v1058, %v2843
    %v2845 = vrot.slane %v2437, %v2844
    %v2846 = vsel %vm1063, %v2845, %v2841
    %v2847 = vlaneseq
    %v2848 = vshrl.u32 %v2847, 7
    %v2849 = vsub.s32 %v1065, %v2848
    %v2850 = vrot.slane %v2438, %v2849
    %v2851 = vsel %vm1070, %v2850, %v2846
    %v2852 = vlaneseq
    %v2853 = vshrl.u32 %v2852, 7
    %v2854 = vsub.s32 %v1072, %v2853
    %v2855 = vrot.slane %v2439, %v2854
    %v2856 = vsel %vm1077, %v2855, %v2851
    %v2857 = vlaneseq
    %v2858 = vshrl.u32 %v2857, 7
    %v2859 = vsub.s32 %v1079, %v2858
    %v2860 = vrot.slane %v2440, %v2859
    %v2861 = vsel %vm1084, %v2860, %v2856
    %v2862 = vlaneseq
    %v2863 = vshrl.u32 %v2862, 7
    %v2864 = vsub.s32 %v1086, %v2863
    %v2865 = vrot.slane %v2441, %v2864
    %v2866 = vsel %vm1091, %v2865, %v2861
    %v2867 = vlaneseq
    %v2868 = vshrl.u32 %v2867, 7
    %v2869 = vsub.s32 %v1093, %v2868
    %v2870 = vrot.slane %v2442, %v2869
    %v2871 = vsel %vm1098, %v2870, %v2866
    %v2872 = vlaneseq
    %v2873 = vshrl.u32 %v2872, 7
    %v2874 = vsub.s32 %v1100, %v2873
    %v2875 = vrot.slane %v2443, %v2874
    %v2876 = vsel %vm1105, %v2875, %v2871
    %v2877 = vlaneseq
    %v2878 = vshrl.u32 %v2877, 7
    %v2879 = vsub.s32 %v1107, %v2878
    %v2880 = vrot.slane %v2444, %v2879
    %v2881 = vsel %vm1112, %v2880, %v2876
    %v2882 = vlaneseq
    %v2883 = vshrl.u32 %v2882, 7
    %v2884 = vsub.s32 %v1114, %v2883
    %v2885 = vrot.slane %v2445, %v2884
    %v2886 = vsel %vm1119, %v2885, %v2881
    %v2887 = vlaneseq
    %v2888 = vshrl.u32 %v2887, 7
    %v2889 = vsub.s32 %v1121, %v2888
    %v2890 = vrot.slane %v2446, %v2889
    %v2891 = vsel %vm1126, %v2890, %v2886
    %v2892 = vlaneseq
    %v2893 = vshrl.u32 %v2892, 7
    %v2894 = vsub.s32 %v374, %v2893
    %v2895 = vrot.slane %v2447, %v2894
    %v2896 = vlaneseq
    %v2897 = vshrl.u32 %v2896, 7
    %v2898 = vsub.s32 %v1023, %v2897
    %v2899 = vrot.slane %v2448, %v2898
    %v2900 = vsel %vm1028, %v2899, %v2895
    %v2901 = vlaneseq
    %v2902 = vshrl.u32 %v2901, 7
    %v2903 = vsub.s32 %v1030, %v2902
    %v2904 = vrot.slane %v2449, %v2903
    %v2905 = vsel %vm1035, %v2904, %v2900
    %v2906 = vlaneseq
    %v2907 = vshrl.u32 %v2906, 7
    %v2908 = vsub.s32 %v1037, %v2907
    %v2909 = vrot.slane %v2450, %v2908
    %v2910 = vsel %vm1042, %v2909, %v2905
    %v2911 = vlaneseq
    %v2912 = vshrl.u32 %v2911, 7
    %v2913 = vsub.s32 %v1044, %v2912
    %v2914 = vrot.slane %v2451, %v2913
    %v2915 = vsel %vm1049, %v2914, %v2910
    %v2916 = vlaneseq
    %v2917 = vshrl.u32 %v2916, 7
    %v2918 = vsub.s32 %v1051, %v2917
    %v2919 = vrot.slane %v2452, %v2918
    %v2920 = vsel %vm1056, %v2919, %v2915
    %v2921 = vlaneseq
    %v2922 = vshrl.u32 %v2921, 7
    %v2923 = vsub.s32 %v1058, %v2922
    %v2924 = vrot.slane %v2453, %v2923
    %v2925 = vsel %vm1063, %v2924, %v2920
    %v2926 = vlaneseq
    %v2927 = vshrl.u32 %v2926, 7
    %v2928 = vsub.s32 %v1065, %v2927
    %v2929 = vrot.slane %v2454, %v2928
    %v2930 = vsel %vm1070, %v2929, %v2925
    %v2931 = vlaneseq
    %v2932 = vshrl.u32 %v2931, 7
    %v2933 = vsub.s32 %v1072, %v2932
    %v2934 = vrot.slane %v2455, %v2933
    %v2935 = vsel %vm1077, %v2934, %v2930
    %v2936 = vlaneseq
    %v2937 = vshrl.u32 %v2936, 7
    %v2938 = vsub.s32 %v1079, %v2937
    %v2939 = vrot.slane %v2456, %v2938
    %v2940 = vsel %vm1084, %v2939, %v2935
    %v2941 = vlaneseq
    %v2942 = vshrl.u32 %v2941, 7
    %v2943 = vsub.s32 %v1086, %v2942
    %v2944 = vrot.slane %v2457, %v2943
    %v2945 = vsel %vm1091, %v2944, %v2940
    %v2946 = vlaneseq
    %v2947 = vshrl.u32 %v2946, 7
    %v2948 = vsub.s32 %v1093, %v2947
    %v2949 = vrot.slane %v2458, %v2948
    %v2950 = vsel %vm1098, %v2949, %v2945
    %v2951 = vlaneseq
    %v2952 = vshrl.u32 %v2951, 7
    %v2953 = vsub.s32 %v1100, %v2952
    %v2954 = vrot.slane %v2459, %v2953
    %v2955 = vsel %vm1105, %v2954, %v2950
    %v2956 = vlaneseq
    %v2957 = vshrl.u32 %v2956, 7
    %v2958 = vsub.s32 %v1107, %v2957
    %v2959 = vrot.slane %v2460, %v2958
    %v2960 = vsel %vm1112, %v2959, %v2955
    %v2961 = vlaneseq
    %v2962 = vshrl.u32 %v2961, 7
    %v2963 = vsub.s32 %v1114, %v2962
    %v2964 = vrot.slane %v2461, %v2963
    %v2965 = vsel %vm1119, %v2964, %v2960
    %v2966 = vlaneseq
    %v2967 = vshrl.u32 %v2966, 7
    %v2968 = vsub.s32 %v1121, %v2967
    %v2969 = vrot.slane %v2462, %v2968
    %v2970 = vsel %vm1126, %v2969, %v2965
    %v2971 = vlaneseq
    %v2972 = vshrl.u32 %v2971, 7
    %v2973 = vsub.s32 %v374, %v2972
    %v2974 = vrot.slane %v2463, %v2973
    %v2975 = vlaneseq
    %v2976 = vshrl.u32 %v2975, 7
    %v2977 = vsub.s32 %v1023, %v2976
    %v2978 = vrot.slane %v2464, %v2977
    %v2979 = vsel %vm1028, %v2978, %v2974
    %v2980 = vlaneseq
    %v2981 = vshrl.u32 %v2980, 7
    %v2982 = vsub.s32 %v1030, %v2981
    %v2983 = vrot.slane %v2465, %v2982
    %v2984 = vsel %vm1035, %v2983, %v2979
    %v2985 = vlaneseq
    %v2986 = vshrl.u32 %v2985, 7
    %v2987 = vsub.s32 %v1037, %v2986
    %v2988 = vrot.slane %v2466, %v2987
    %v2989 = vsel %vm1042, %v2988, %v2984
    %v2990 = vlaneseq
    %v2991 = vshrl.u32 %v2990, 7
    %v2992 = vsub.s32 %v1044, %v2991
    %v2993 = vrot.slane %v2467, %v2992
    %v2994 = vsel %vm1049, %v2993, %v2989
    %v2995 = vlaneseq
    %v2996 = vshrl.u32 %v2995, 7
    %v2997 = vsub.s32 %v1051, %v2996
    %v2998 = vrot.slane %v2468, %v2997
    %v2999 = vsel %vm1056, %v2998, %v2994
    %v3000 = vlaneseq
    %v3001 = vshrl.u32 %v3000, 7
    %v3002 = vsub.s32 %v1058, %v3001
    %v3003 = vrot.slane %v2469, %v3002
    %v3004 = vsel %vm1063, %v3003, %v2999
    %v3005 = vlaneseq
    %v3006 = vshrl.u32 %v3005, 7
    %v3007 = vsub.s32 %v1065, %v3006
    %v3008 = vrot.slane %v2470, %v3007
    %v3009 = vsel %vm1070, %v3008, %v3004
    %v3010 = vlaneseq
    %v3011 = vshrl.u32 %v3010, 7
    %v3012 = vsub.s32 %v1072, %v3011
    %v3013 = vrot.slane %v2471, %v3012
    %v3014 = vsel %vm1077, %v3013, %v3009
    %v3015 = vlaneseq
    %v3016 = vshrl.u32 %v3015, 7
    %v3017 = vsub.s32 %v1079, %v3016
    %v3018 = vrot.slane %v2472, %v3017
    %v3019 = vsel %vm1084, %v3018, %v3014
    %v3020 = vlaneseq
    %v3021 = vshrl.u32 %v3020, 7
    %v3022 = vsub.s32 %v1086, %v3021
    %v3023 = vrot.slane %v2473, %v3022
    %v3024 = vsel %vm1091, %v3023, %v3019
    %v3025 = vlaneseq
    %v3026 = vshrl.u32 %v3025, 7
    %v3027 = vsub.s32 %v1093, %v3026
    %v3028 = vrot.slane %v2474, %v3027
    %v3029 = vsel %vm1098, %v3028, %v3024
    %v3030 = vlaneseq
    %v3031 = vshrl.u32 %v3030, 7
    %v3032 = vsub.s32 %v1100, %v3031
    %v3033 = vrot.slane %v2475, %v3032
    %v3034 = vsel %vm1105, %v3033, %v3029
    %v3035 = vlaneseq
    %v3036 = vshrl.u32 %v3035, 7
    %v3037 = vsub.s32 %v1107, %v3036
    %v3038 = vrot.slane %v2476, %v3037
    %v3039 = vsel %vm1112, %v3038, %v3034
    %v3040 = vlaneseq
    %v3041 = vshrl.u32 %v3040, 7
    %v3042 = vsub.s32 %v1114, %v3041
    %v3043 = vrot.slane %v2477, %v3042
    %v3044 = vsel %vm1119, %v3043, %v3039
    %v3045 = vlaneseq
    %v3046 = vshrl.u32 %v3045, 7
    %v3047 = vsub.s32 %v1121, %v3046
    %v3048 = vrot.slane %v2478, %v3047
    %v3049 = vsel %vm1126, %v3048, %v3044
    %v3050 = vlaneseq
    %v3051 = vshrl.u32 %v3050, 7
    %v3052 = vsub.s32 %v374, %v3051
    %v3053 = vrot.slane %v2479, %v3052
    %v3054 = vlaneseq
    %v3055 = vshrl.u32 %v3054, 7
    %v3056 = vsub.s32 %v1023, %v3055
    %v3057 = vrot.slane %v2480, %v3056
    %v3058 = vsel %vm1028, %v3057, %v3053
    %v3059 = vlaneseq
    %v3060 = vshrl.u32 %v3059, 7
    %v3061 = vsub.s32 %v1030, %v3060
    %v3062 = vrot.slane %v2481, %v3061
    %v3063 = vsel %vm1035, %v3062, %v3058
    %v3064 = vlaneseq
    %v3065 = vshrl.u32 %v3064, 7
    %v3066 = vsub.s32 %v1037, %v3065
    %v3067 = vrot.slane %v2482, %v3066
    %v3068 = vsel %vm1042, %v3067, %v3063
    %v3069 = vlaneseq
    %v3070 = vshrl.u32 %v3069, 7
    %v3071 = vsub.s32 %v1044, %v3070
    %v3072 = vrot.slane %v2483, %v3071
    %v3073 = vsel %vm1049, %v3072, %v3068
    %v3074 = vlaneseq
    %v3075 = vshrl.u32 %v3074, 7
    %v3076 = vsub.s32 %v1051, %v3075
    %v3077 = vrot.slane %v2484, %v3076
    %v3078 = vsel %vm1056, %v3077, %v3073
    %v3079 = vlaneseq
    %v3080 = vshrl.u32 %v3079, 7
    %v3081 = vsub.s32 %v1058, %v3080
    %v3082 = vrot.slane %v2485, %v3081
    %v3083 = vsel %vm1063, %v3082, %v3078
    %v3084 = vlaneseq
    %v3085 = vshrl.u32 %v3084, 7
    %v3086 = vsub.s32 %v1065, %v3085
    %v3087 = vrot.slane %v2486, %v3086
    %v3088 = vsel %vm1070, %v3087, %v3083
    %v3089 = vlaneseq
    %v3090 = vshrl.u32 %v3089, 7
    %v3091 = vsub.s32 %v1072, %v3090
    %v3092 = vrot.slane %v2487, %v3091
    %v3093 = vsel %vm1077, %v3092, %v3088
    %v3094 = vlaneseq
    %v3095 = vshrl.u32 %v3094, 7
    %v3096 = vsub.s32 %v1079, %v3095
    %v3097 = vrot.slane %v2488, %v3096
    %v3098 = vsel %vm1084, %v3097, %v3093
    %v3099 = vlaneseq
    %v3100 = vshrl.u32 %v3099, 7
    %v3101 = vsub.s32 %v1086, %v3100
    %v3102 = vrot.slane %v2489, %v3101
    %v3103 = vsel %vm1091, %v3102, %v3098
    %v3104 = vlaneseq
    %v3105 = vshrl.u32 %v3104, 7
    %v3106 = vsub.s32 %v1093, %v3105
    %v3107 = vrot.slane %v2490, %v3106
    %v3108 = vsel %vm1098, %v3107, %v3103
    %v3109 = vlaneseq
    %v3110 = vshrl.u32 %v3109, 7
    %v3111 = vsub.s32 %v1100, %v3110
    %v3112 = vrot.slane %v2491, %v3111
    %v3113 = vsel %vm1105, %v3112, %v3108
    %v3114 = vlaneseq
    %v3115 = vshrl.u32 %v3114, 7
    %v3116 = vsub.s32 %v1107, %v3115
    %v3117 = vrot.slane %v2492, %v3116
    %v3118 = vsel %vm1112, %v3117, %v3113
    %v3119 = vlaneseq
    %v3120 = vshrl.u32 %v3119, 7
    %v3121 = vsub.s32 %v1114, %v3120
    %v3122 = vrot.slane %v2493, %v3121
    %v3123 = vsel %vm1119, %v3122, %v3118
    %v3124 = vlaneseq
    %v3125 = vshrl.u32 %v3124, 7
    %v3126 = vsub.s32 %v1121, %v3125
    %v3127 = vrot.slane %v2494, %v3126
    %v3128 = vsel %vm1126, %v3127, %v3123
    %v3129 = vlaneseq
    %v3130 = vshrl.u32 %v3129, 7
    %v3131 = vsub.s32 %v374, %v3130
    %v3132 = vrot.slane %v2495, %v3131
    %v3133 = vlaneseq
    %v3134 = vshrl.u32 %v3133, 7
    %v3135 = vsub.s32 %v1023, %v3134
    %v3136 = vrot.slane %v2496, %v3135
    %v3137 = vsel %vm1028, %v3136, %v3132
    %v3138 = vlaneseq
    %v3139 = vshrl.u32 %v3138, 7
    %v3140 = vsub.s32 %v1030, %v3139
    %v3141 = vrot.slane %v2497, %v3140
    %v3142 = vsel %vm1035, %v3141, %v3137
    %v3143 = vlaneseq
    %v3144 = vshrl.u32 %v3143, 7
    %v3145 = vsub.s32 %v1037, %v3144
    %v3146 = vrot.slane %v2498, %v3145
    %v3147 = vsel %vm1042, %v3146, %v3142
    %v3148 = vlaneseq
    %v3149 = vshrl.u32 %v3148, 7
    %v3150 = vsub.s32 %v1044, %v3149
    %v3151 = vrot.slane %v2499, %v3150
    %v3152 = vsel %vm1049, %v3151, %v3147
    %v3153 = vlaneseq
    %v3154 = vshrl.u32 %v3153, 7
    %v3155 = vsub.s32 %v1051, %v3154
    %v3156 = vrot.slane %v2500, %v3155
    %v3157 = vsel %vm1056, %v3156, %v3152
    %v3158 = vlaneseq
    %v3159 = vshrl.u32 %v3158, 7
    %v3160 = vsub.s32 %v1058, %v3159
    %v3161 = vrot.slane %v2501, %v3160
    %v3162 = vsel %vm1063, %v3161, %v3157
    %v3163 = vlaneseq
    %v3164 = vshrl.u32 %v3163, 7
    %v3165 = vsub.s32 %v1065, %v3164
    %v3166 = vrot.slane %v2502, %v3165
    %v3167 = vsel %vm1070, %v3166, %v3162
    %v3168 = vlaneseq
    %v3169 = vshrl.u32 %v3168, 7
    %v3170 = vsub.s32 %v1072, %v3169
    %v3171 = vrot.slane %v2503, %v3170
    %v3172 = vsel %vm1077, %v3171, %v3167
    %v3173 = vlaneseq
    %v3174 = vshrl.u32 %v3173, 7
    %v3175 = vsub.s32 %v1079, %v3174
    %v3176 = vrot.slane %v2504, %v3175
    %v3177 = vsel %vm1084, %v3176, %v3172
    %v3178 = vlaneseq
    %v3179 = vshrl.u32 %v3178, 7
    %v3180 = vsub.s32 %v1086, %v3179
    %v3181 = vrot.slane %v2505, %v3180
    %v3182 = vsel %vm1091, %v3181, %v3177
    %v3183 = vlaneseq
    %v3184 = vshrl.u32 %v3183, 7
    %v3185 = vsub.s32 %v1093, %v3184
    %v3186 = vrot.slane %v2506, %v3185
    %v3187 = vsel %vm1098, %v3186, %v3182
    %v3188 = vlaneseq
    %v3189 = vshrl.u32 %v3188, 7
    %v3190 = vsub.s32 %v1100, %v3189
    %v3191 = vrot.slane %v2507, %v3190
    %v3192 = vsel %vm1105, %v3191, %v3187
    %v3193 = vlaneseq
    %v3194 = vshrl.u32 %v3193, 7
    %v3195 = vsub.s32 %v1107, %v3194
    %v3196 = vrot.slane %v2508, %v3195
    %v3197 = vsel %vm1112, %v3196, %v3192
    %v3198 = vlaneseq
    %v3199 = vshrl.u32 %v3198, 7
    %v3200 = vsub.s32 %v1114, %v3199
    %v3201 = vrot.slane %v2509, %v3200
    %v3202 = vsel %vm1119, %v3201, %v3197
    %v3203 = vlaneseq
    %v3204 = vshrl.u32 %v3203, 7
    %v3205 = vsub.s32 %v1121, %v3204
    %v3206 = vrot.slane %v2510, %v3205
    %v3207 = vsel %vm1126, %v3206, %v3202
    %v3208 = vlaneseq
    %v3209 = vshrl.u32 %v3208, 7
    %v3210 = vsub.s32 %v374, %v3209
    %v3211 = vrot.slane %v2511, %v3210
    %v3212 = vlaneseq
    %v3213 = vshrl.u32 %v3212, 7
    %v3214 = vsub.s32 %v1023, %v3213
    %v3215 = vrot.slane %v2512, %v3214
    %v3216 = vsel %vm1028, %v3215, %v3211
    %v3217 = vlaneseq
    %v3218 = vshrl.u32 %v3217, 7
    %v3219 = vsub.s32 %v1030, %v3218
    %v3220 = vrot.slane %v2513, %v3219
    %v3221 = vsel %vm1035, %v3220, %v3216
    %v3222 = vlaneseq
    %v3223 = vshrl.u32 %v3222, 7
    %v3224 = vsub.s32 %v1037, %v3223
    %v3225 = vrot.slane %v2514, %v3224
    %v3226 = vsel %vm1042, %v3225, %v3221
    %v3227 = vlaneseq
    %v3228 = vshrl.u32 %v3227, 7
    %v3229 = vsub.s32 %v1044, %v3228
    %v3230 = vrot.slane %v2515, %v3229
    %v3231 = vsel %vm1049, %v3230, %v3226
    %v3232 = vlaneseq
    %v3233 = vshrl.u32 %v3232, 7
    %v3234 = vsub.s32 %v1051, %v3233
    %v3235 = vrot.slane %v2516, %v3234
    %v3236 = vsel %vm1056, %v3235, %v3231
    %v3237 = vlaneseq
    %v3238 = vshrl.u32 %v3237, 7
    %v3239 = vsub.s32 %v1058, %v3238
    %v3240 = vrot.slane %v2517, %v3239
    %v3241 = vsel %vm1063, %v3240, %v3236
    %v3242 = vlaneseq
    %v3243 = vshrl.u32 %v3242, 7
    %v3244 = vsub.s32 %v1065, %v3243
    %v3245 = vrot.slane %v2518, %v3244
    %v3246 = vsel %vm1070, %v3245, %v3241
    %v3247 = vlaneseq
    %v3248 = vshrl.u32 %v3247, 7
    %v3249 = vsub.s32 %v1072, %v3248
    %v3250 = vrot.slane %v2519, %v3249
    %v3251 = vsel %vm1077, %v3250, %v3246
    %v3252 = vlaneseq
    %v3253 = vshrl.u32 %v3252, 7
    %v3254 = vsub.s32 %v1079, %v3253
    %v3255 = vrot.slane %v2520, %v3254
    %v3256 = vsel %vm1084, %v3255, %v3251
    %v3257 = vlaneseq
    %v3258 = vshrl.u32 %v3257, 7
    %v3259 = vsub.s32 %v1086, %v3258
    %v3260 = vrot.slane %v2521, %v3259
    %v3261 = vsel %vm1091, %v3260, %v3256
    %v3262 = vlaneseq
    %v3263 = vshrl.u32 %v3262, 7
    %v3264 = vsub.s32 %v1093, %v3263
    %v3265 = vrot.slane %v2522, %v3264
    %v3266 = vsel %vm1098, %v3265, %v3261
    %v3267 = vlaneseq
    %v3268 = vshrl.u32 %v3267, 7
    %v3269 = vsub.s32 %v1100, %v3268
    %v3270 = vrot.slane %v2523, %v3269
    %v3271 = vsel %vm1105, %v3270, %v3266
    %v3272 = vlaneseq
    %v3273 = vshrl.u32 %v3272, 7
    %v3274 = vsub.s32 %v1107, %v3273
    %v3275 = vrot.slane %v2524, %v3274
    %v3276 = vsel %vm1112, %v3275, %v3271
    %v3277 = vlaneseq
    %v3278 = vshrl.u32 %v3277, 7
    %v3279 = vsub.s32 %v1114, %v3278
    %v3280 = vrot.slane %v2525, %v3279
    %v3281 = vsel %vm1119, %v3280, %v3276
    %v3282 = vlaneseq
    %v3283 = vshrl.u32 %v3282, 7
    %v3284 = vsub.s32 %v1121, %v3283
    %v3285 = vrot.slane %v2526, %v3284
    %v3286 = vsel %vm1126, %v3285, %v3281
    %v3287 = vsel %vm1681, %v2812, %v2733
    %v3288 = vsel %vm1683, %v2891, %v3287
    %v3289 = vsel %vm1685, %v2970, %v3288
    %v3290 = vsel %vm1687, %v3049, %v3289
    %v3291 = vsel %vm1689, %v3128, %v3290
    %v3292 = vsel %vm1691, %v3207, %v3291
    %v3293 = vsel %vm1693, %v3286, %v3292
    %v3295 = vadd.f32 %v2398, %v3293
    %v3297 = vlaneseq
    %v3298 = vshrl.u32 %v3297, 7
    %v3299 = vsub.s32 0, %v3298
    %v3300 = vrot.slane %v1725, %v3299
    %v3302 = vadd.f32 %v3295, %v3300
    %v3303 = vmax.f32 %v3302, 0.0
    %v3304 = vsel %vm1707, %v3303, 0.0
    %v3305 = vld [vmem:[#allocation6] sm:$0xff]
    %v3306 = vld [vmem:[#allocation6 + $0x8] sm:$0xff]
    %v3307 = vld [vmem:[#allocation6 + $0x10] sm:$0xff]
    %v3308 = vld [vmem:[#allocation6 + $0x18] sm:$0xff]
    %v3309 = vld [vmem:[#allocation6 + $0x20] sm:$0xff]
    %v3310 = vld [vmem:[#allocation6 + $0x28] sm:$0xff]
    %v3311 = vld [vmem:[#allocation6 + $0x30] sm:$0xff]
    %v3312 = vld [vmem:[#allocation6 + $0x38] sm:$0xff]
    %v3313 = vld [vmem:[#allocation6 + $0x40] sm:$0xff]
    %v3314 = vld [vmem:[#allocation6 + $0x48] sm:$0xff]
    %v3315 = vld [vmem:[#allocation6 + $0x50] sm:$0xff]
    %v3316 = vld [vmem:[#allocation6 + $0x58] sm:$0xff]
    %v3317 = vld [vmem:[#allocation6 + $0x60] sm:$0xff]
    %v3318 = vld [vmem:[#allocation6 + $0x68] sm:$0xff]
    %v3319 = vld [vmem:[#allocation6 + $0x70] sm:$0xff]
    %v3320 = vld [vmem:[#allocation6 + $0x78] sm:$0xff]
    %v3321 = vld [vmem:[%s6] sm:$0x1]
    %3322 = vmatprep.subr.mxu0 0.0
    %3323 = vmatpush1.xpose.msra.mxu0 %v3305
    %3324 = vmatprep.subr.mxu0 0.0
    %3325 = vmatpush1.xpose.msra.mxu0 %v3306
    %3326 = vmatprep.subr.mxu0 0.0
    %3327 = vmatpush1.xpose.msra.mxu0 %v3307
    %3328 = vmatprep.subr.mxu0 0.0
    %3329 = vmatpush1.xpose.msra.mxu0 %v3308
    %3330 = vmatprep.subr.mxu0 0.0
    %3331 = vmatpush1.xpose.msra.mxu0 %v3309
    %3332 = vmatprep.subr.mxu0 0.0
    %3333 = vmatpush1.xpose.msra.mxu0 %v3310
    %3334 = vmatprep.subr.mxu0 0.0
    %3335 = vmatpush1.xpose.msra.mxu0 %v3311
    %3336 = vmatprep.subr.mxu0 0.0
    %3337 = vmatpush1.xpose.msra.mxu0 %v3312
    %3338 = vmatprep.subr.mxu0 0.0
    %3339 = vmatpush1.xpose.msra.mxu0 %v3313
    %3340 = vmatprep.subr.mxu0 0.0
    %3341 = vmatpush1.xpose.msra.mxu0 %v3314
    %3342 = vmatprep.subr.mxu0 0.0
    %3343 = vmatpush1.xpose.msra.mxu0 %v3315
    %3344 = vmatprep.subr.mxu0 0.0
    %3345 = vmatpush1.xpose.msra.mxu0 %v3316
    %3346 = vmatprep.subr.mxu0 0.0
    %3347 = vmatpush1.xpose.msra.mxu0 %v3317
    %3348 = vmatprep.subr.mxu0 0.0
    %3349 = vmatpush1.xpose.msra.mxu0 %v3318
    %3350 = vmatprep.subr.mxu0 0.0
    %3351 = vmatpush1.xpose.msra.mxu0 %v3319
    %3352 = vmatprep.subr.mxu0 0.0
    %3353 = vmatpush1.xpose.msra.mxu0 %v3320
    %3354 = vmatprep.subr.mxu0 0.0
    %3355 = vmatpush1.xpose.msra.mxu0 0.0
    %3356 = vmatprep.subr.mxu0 0.0
    %3357 = vmatpush1.xpose.msra.mxu0 0.0
    %3358 = vmatprep.subr.mxu0 0.0
    %3359 = vmatpush1.xpose.msra.mxu0 0.0
    %3360 = vmatprep.subr.mxu0 0.0
    %3361 = vmatpush1.xpose.msra.mxu0 0.0
    %3362 = vmatprep.subr.mxu0 0.0
    %3363 = vmatpush1.xpose.msra.mxu0 0.0
    %3364 = vmatprep.subr.mxu0 0.0
    %3365 = vmatpush1.xpose.msra.mxu0 0.0
    %3366 = vmatprep.subr.mxu0 0.0
    %3367 = vmatpush1.xpose.msra.mxu0 0.0
    %3368 = vmatprep.subr.mxu0 0.0
    %3369 = vmatpush1.xpose.msra.mxu0 0.0
    %3370 = vmatprep.subr.mxu0 0.0
    %3371 = vmatpush1.xpose.msra.mxu0 0.0
    %3372 = vmatprep.subr.mxu0 0.0
    %3373 = vmatpush1.xpose.msra.mxu0 0.0
    %3374 = vmatprep.subr.mxu0 0.0
    %3375 = vmatpush1.xpose.msra.mxu0 0.0
    %3376 = vmatprep.subr.mxu0 0.0
    %3377 = vmatpush1.xpose.msra.mxu0 0.0
    %3378 = vmatprep.subr.mxu0 0.0
    %3379 = vmatpush1.xpose.msra.mxu0 0.0
    %3380 = vmatprep.subr.mxu0 0.0
    %3381 = vmatpush1.xpose.msra.mxu0 0.0
    %3382 = vmatprep.subr.mxu0 0.0
    %3383 = vmatpush1.xpose.msra.mxu0 0.0
    %3384 = vmatprep.subr.mxu0 0.0
    %3385 = vmatpush1.xpose.msra.mxu0 0.0
    %3386 = vmatprep.mubr.f32.mxu0 0.0
    %3387 = vmatmul.mubr.f32.gmra.mrb[0].mxu0 %v3304
    %v3388 = vpop.f32.mrb[0].mxu0
    %v3389 = vadd.f32 0.0, %v3388
    %v3390 = vpop.f32.mrb[0].mxu0
    %3391 = vdwg.mxu0
    %v3393 = vcombine.high %v3304, %v3304
    %v3395 = vunpack.c.l.s4 1966171168
    %v3396 = vunpack.c.0.s8 %v3395
    %v3397 = vlaneseq
    %v3398 = vshrl.u32 %v3397, 7
    %v3399 = vsub.s32 %v3396, %v3398
    %v3400 = vrot.slane %v3304, %v3399
    %v3402 = vunpack.c.l.s4 1966171168
    %v3403 = vunpack.c.0.s8 %v3402
    %v3404 = vlaneseq
    %v3405 = vshrl.u32 %v3404, 7
    %v3406 = vsub.s32 %v3403, %v3405
    %v3407 = vrot.slane %v3393, %v3406
    %v3408 = vcombine.high %v3400, %v3400
    %v3409 = vcombine.high %v3407, %v3407
    %v3411 = vunpack.c.l.s4 1966171168
    %v3412 = vunpack.c.0.s8 %v3411
    %v3413 = vlaneseq
    %v3414 = vshrl.u32 %v3413, 7
    %v3415 = vsub.s32 %v3412, %v3414
    %v3416 = vrot.slane %v3400, %v3415
    %v3418 = vunpack.c.l.s4 1966171168
    %v3419 = vunpack.c.0.s8 %v3418
    %v3420 = vlaneseq
    %v3421 = vshrl.u32 %v3420, 7
    %v3422 = vsub.s32 %v3419, %v3421
    %v3423 = vrot.slane %v3407, %v3422
    %v3425 = vunpack.c.l.s4 1966171168
    %v3426 = vunpack.c.0.s8 %v3425
    %v3427 = vlaneseq
    %v3428 = vshrl.u32 %v3427, 7
    %v3429 = vsub.s32 %v3426, %v3428
    %v3430 = vrot.slane %v3408, %v3429
    %v3432 = vunpack.c.l.s4 1966171168
    %v3433 = vunpack.c.0.s8 %v3432
    %v3434 = vlaneseq
    %v3435 = vshrl.u32 %v3434, 7
    %v3436 = vsub.s32 %v3433, %v3435
    %v3437 = vrot.slane %v3409, %v3436
    %v3438 = vcombine.high %v3416, %v3416
    %v3439 = vcombine.high %v3423, %v3423
    %v3440 = vcombine.high %v3430, %v3430
    %v3441 = vcombine.high %v3437, %v3437
    %v3442 = vlaneseq
    %v3443 = vshrl.u32 %v3442, 7
    %v3444 = vsub.s32 0, %v3443
    %v3445 = vrot.slane %v3416, %v3444
    %v3446 = vlaneseq
    %v3447 = vshrl.u32 %v3446, 7
    %v3448 = vsub.s32 0, %v3447
    %v3449 = vrot.slane %v3430, %v3448
    %v3450 = vlaneseq
    %v3451 = vshrl.u32 %v3450, 7
    %v3452 = vsub.s32 0, %v3451
    %v3453 = vrot.slane %v3438, %v3452
    %v3454 = vlaneseq
    %v3455 = vshrl.u32 %v3454, 7
    %v3456 = vsub.s32 0, %v3455
    %v3457 = vrot.slane %v3440, %v3456
    %v3458 = vlaneseq
    %v3459 = vshrl.u32 %v3458, 7
    %v3460 = vsub.s32 0, %v3459
    %v3461 = vrot.slane %v3423, %v3460
    %v3462 = vlaneseq
    %v3463 = vshrl.u32 %v3462, 7
    %v3464 = vsub.s32 0, %v3463
    %v3465 = vrot.slane %v3437, %v3464
    %v3466 = vlaneseq
    %v3467 = vshrl.u32 %v3466, 7
    %v3468 = vsub.s32 0, %v3467
    %v3469 = vrot.slane %v3439, %v3468
    %v3470 = vlaneseq
    %v3471 = vshrl.u32 %v3470, 7
    %v3472 = vsub.s32 0, %v3471
    %v3473 = vrot.slane %v3441, %v3472
    %v3482 = vmul.f32 %v3445, %v3305
    %v3483 = vmul.f32 %v3445, %v3306
    %v3484 = vmul.f32 %v3445, %v3307
    %v3485 = vmul.f32 %v3445, %v3308
    %v3486 = vmul.f32 %v3445, %v3309
    %v3487 = vmul.f32 %v3445, %v3310
    %v3488 = vmul.f32 %v3445, %v3311
    %v3489 = vmul.f32 %v3445, %v3312
    %v3490 = vmul.f32 %v3445, %v3313
    %v3491 = vmul.f32 %v3445, %v3314
    %v3492 = vmul.f32 %v3445, %v3315
    %v3493 = vmul.f32 %v3445, %v3316
    %v3494 = vmul.f32 %v3445, %v3317
    %v3495 = vmul.f32 %v3445, %v3318
    %v3496 = vmul.f32 %v3445, %v3319
    %v3497 = vmul.f32 %v3445, %v3320
    %v3498 = vmul.f32 %v3449, %v3305
    %v3499 = vmul.f32 %v3449, %v3306
    %v3500 = vmul.f32 %v3449, %v3307
    %v3501 = vmul.f32 %v3449, %v3308
    %v3502 = vmul.f32 %v3449, %v3309
    %v3503 = vmul.f32 %v3449, %v3310
    %v3504 = vmul.f32 %v3449, %v3311
    %v3505 = vmul.f32 %v3449, %v3312
    %v3506 = vmul.f32 %v3449, %v3313
    %v3507 = vmul.f32 %v3449, %v3314
    %v3508 = vmul.f32 %v3449, %v3315
    %v3509 = vmul.f32 %v3449, %v3316
    %v3510 = vmul.f32 %v3449, %v3317
    %v3511 = vmul.f32 %v3449, %v3318
    %v3512 = vmul.f32 %v3449, %v3319
    %v3513 = vmul.f32 %v3449, %v3320
    %v3514 = vmul.f32 %v3453, %v3305
    %v3515 = vmul.f32 %v3453, %v3306
    %v3516 = vmul.f32 %v3453, %v3307
    %v3517 = vmul.f32 %v3453, %v3308
    %v3518 = vmul.f32 %v3453, %v3309
    %v3519 = vmul.f32 %v3453, %v3310
    %v3520 = vmul.f32 %v3453, %v3311
    %v3521 = vmul.f32 %v3453, %v3312
    %v3522 = vmul.f32 %v3453, %v3313
    %v3523 = vmul.f32 %v3453, %v3314
    %v3524 = vmul.f32 %v3453, %v3315
    %v3525 = vmul.f32 %v3453, %v3316
    %v3526 = vmul.f32 %v3453, %v3317
    %v3527 = vmul.f32 %v3453, %v3318
    %v3528 = vmul.f32 %v3453, %v3319
    %v3529 = vmul.f32 %v3453, %v3320
    %v3530 = vmul.f32 %v3457, %v3305
    %v3531 = vmul.f32 %v3457, %v3306
    %v3532 = vmul.f32 %v3457, %v3307
    %v3533 = vmul.f32 %v3457, %v3308
    %v3534 = vmul.f32 %v3457, %v3309
    %v3535 = vmul.f32 %v3457, %v3310
    %v3536 = vmul.f32 %v3457, %v3311
    %v3537 = vmul.f32 %v3457, %v3312
    %v3538 = vmul.f32 %v3457, %v3313
    %v3539 = vmul.f32 %v3457, %v3314
    %v3540 = vmul.f32 %v3457, %v3315
    %v3541 = vmul.f32 %v3457, %v3316
    %v3542 = vmul.f32 %v3457, %v3317
    %v3543 = vmul.f32 %v3457, %v3318
    %v3544 = vmul.f32 %v3457, %v3319
    %v3545 = vmul.f32 %v3457, %v3320
    %v3546 = vmul.f32 %v3461, %v3305
    %v3547 = vmul.f32 %v3461, %v3306
    %v3548 = vmul.f32 %v3461, %v3307
    %v3549 = vmul.f32 %v3461, %v3308
    %v3550 = vmul.f32 %v3461, %v3309
    %v3551 = vmul.f32 %v3461, %v3310
    %v3552 = vmul.f32 %v3461, %v3311
    %v3553 = vmul.f32 %v3461, %v3312
    %v3554 = vmul.f32 %v3461, %v3313
    %v3555 = vmul.f32 %v3461, %v3314
    %v3556 = vmul.f32 %v3461, %v3315
    %v3557 = vmul.f32 %v3461, %v3316
    %v3558 = vmul.f32 %v3461, %v3317
    %v3559 = vmul.f32 %v3461, %v3318
    %v3560 = vmul.f32 %v3461, %v3319
    %v3561 = vmul.f32 %v3461, %v3320
    %v3562 = vmul.f32 %v3465, %v3305
    %v3563 = vmul.f32 %v3465, %v3306
    %v3564 = vmul.f32 %v3465, %v3307
    %v3565 = vmul.f32 %v3465, %v3308
    %v3566 = vmul.f32 %v3465, %v3309
    %v3567 = vmul.f32 %v3465, %v3310
    %v3568 = vmul.f32 %v3465, %v3311
    %v3569 = vmul.f32 %v3465, %v3312
    %v3570 = vmul.f32 %v3465, %v3313
    %v3571 = vmul.f32 %v3465, %v3314
    %v3572 = vmul.f32 %v3465, %v3315
    %v3573 = vmul.f32 %v3465, %v3316
    %v3574 = vmul.f32 %v3465, %v3317
    %v3575 = vmul.f32 %v3465, %v3318
    %v3576 = vmul.f32 %v3465, %v3319
    %v3577 = vmul.f32 %v3465, %v3320
    %v3578 = vmul.f32 %v3469, %v3305
    %v3579 = vmul.f32 %v3469, %v3306
    %v3580 = vmul.f32 %v3469, %v3307
    %v3581 = vmul.f32 %v3469, %v3308
    %v3582 = vmul.f32 %v3469, %v3309
    %v3583 = vmul.f32 %v3469, %v3310
    %v3584 = vmul.f32 %v3469, %v3311
    %v3585 = vmul.f32 %v3469, %v3312
    %v3586 = vmul.f32 %v3469, %v3313
    %v3587 = vmul.f32 %v3469, %v3314
    %v3588 = vmul.f32 %v3469, %v3315
    %v3589 = vmul.f32 %v3469, %v3316
    %v3590 = vmul.f32 %v3469, %v3317
    %v3591 = vmul.f32 %v3469, %v3318
    %v3592 = vmul.f32 %v3469, %v3319
    %v3593 = vmul.f32 %v3469, %v3320
    %v3594 = vmul.f32 %v3473, %v3305
    %v3595 = vmul.f32 %v3473, %v3306
    %v3596 = vmul.f32 %v3473, %v3307
    %v3597 = vmul.f32 %v3473, %v3308
    %v3598 = vmul.f32 %v3473, %v3309
    %v3599 = vmul.f32 %v3473, %v3310
    %v3600 = vmul.f32 %v3473, %v3311
    %v3601 = vmul.f32 %v3473, %v3312
    %v3602 = vmul.f32 %v3473, %v3313
    %v3603 = vmul.f32 %v3473, %v3314
    %v3604 = vmul.f32 %v3473, %v3315
    %v3605 = vmul.f32 %v3473, %v3316
    %v3606 = vmul.f32 %v3473, %v3317
    %v3607 = vmul.f32 %v3473, %v3318
    %v3608 = vmul.f32 %v3473, %v3319
    %v3609 = vmul.f32 %v3473, %v3320
    %v3610 = vsel %vm1707, %v3482, -inf
    %v3611 = vsel %vm1707, %v3483, -inf
    %v3612 = vsel %vm1707, %v3484, -inf
    %v3613 = vsel %vm1707, %v3485, -inf
    %v3614 = vsel %vm1707, %v3486, -inf
    %v3615 = vsel %vm1707, %v3487, -inf
    %v3616 = vsel %vm1707, %v3488, -inf
    %v3617 = vsel %vm1707, %v3489, -inf
    %v3618 = vsel %vm1707, %v3490, -inf
    %v3619 = vsel %vm1707, %v3491, -inf
    %v3620 = vsel %vm1707, %v3492, -inf
    %v3621 = vsel %vm1707, %v3493, -inf
    %v3622 = vsel %vm1707, %v3494, -inf
    %v3623 = vsel %vm1707, %v3495, -inf
    %v3624 = vsel %vm1707, %v3496, -inf
    %v3625 = vsel %vm1707, %v3497, -inf
    %v3626 = vsel %vm1707, %v3498, -inf
    %v3627 = vsel %vm1707, %v3499, -inf
    %v3628 = vsel %vm1707, %v3500, -inf
    %v3629 = vsel %vm1707, %v3501, -inf
    %v3630 = vsel %vm1707, %v3502, -inf
    %v3631 = vsel %vm1707, %v3503, -inf
    %v3632 = vsel %vm1707, %v3504, -inf
    %v3633 = vsel %vm1707, %v3505, -inf
    %v3634 = vsel %vm1707, %v3506, -inf
    %v3635 = vsel %vm1707, %v3507, -inf
    %v3636 = vsel %vm1707, %v3508, -inf
    %v3637 = vsel %vm1707, %v3509, -inf
    %v3638 = vsel %vm1707, %v3510, -inf
    %v3639 = vsel %vm1707, %v3511, -inf
    %v3640 = vsel %vm1707, %v3512, -inf
    %v3641 = vsel %vm1707, %v3513, -inf
    %v3642 = vsel %vm1707, %v3514, -inf
    %v3643 = vsel %vm1707, %v3515, -inf
    %v3644 = vsel %vm1707, %v3516, -inf
    %v3645 = vsel %vm1707, %v3517, -inf
    %v3646 = vsel %vm1707, %v3518, -inf
    %v3647 = vsel %vm1707, %v3519, -inf
    %v3648 = vsel %vm1707, %v3520, -inf
    %v3649 = vsel %vm1707, %v3521, -inf
    %v3650 = vsel %vm1707, %v3522, -inf
    %v3651 = vsel %vm1707, %v3523, -inf
    %v3652 = vsel %vm1707, %v3524, -inf
    %v3653 = vsel %vm1707, %v3525, -inf
    %v3654 = vsel %vm1707, %v3526, -inf
    %v3655 = vsel %vm1707, %v3527, -inf
    %v3656 = vsel %vm1707, %v3528, -inf
    %v3657 = vsel %vm1707, %v3529, -inf
    %v3658 = vsel %vm1707, %v3530, -inf
    %v3659 = vsel %vm1707, %v3531, -inf
    %v3660 = vsel %vm1707, %v3532, -inf
    %v3661 = vsel %vm1707, %v3533, -inf
    %v3662 = vsel %vm1707, %v3534, -inf
    %v3663 = vsel %vm1707, %v3535, -inf
    %v3664 = vsel %vm1707, %v3536, -inf
    %v3665 = vsel %vm1707, %v3537, -inf
    %v3666 = vsel %vm1707, %v3538, -inf
    %v3667 = vsel %vm1707, %v3539, -inf
    %v3668 = vsel %vm1707, %v3540, -inf
    %v3669 = vsel %vm1707, %v3541, -inf
    %v3670 = vsel %vm1707, %v3542, -inf
    %v3671 = vsel %vm1707, %v3543, -inf
    %v3672 = vsel %vm1707, %v3544, -inf
    %v3673 = vsel %vm1707, %v3545, -inf
    %v3674 = vsel %vm1707, %v3546, -inf
    %v3675 = vsel %vm1707, %v3547, -inf
    %v3676 = vsel %vm1707, %v3548, -inf
    %v3677 = vsel %vm1707, %v3549, -inf
    %v3678 = vsel %vm1707, %v3550, -inf
    %v3679 = vsel %vm1707, %v3551, -inf
    %v3680 = vsel %vm1707, %v3552, -inf
    %v3681 = vsel %vm1707, %v3553, -inf
    %v3682 = vsel %vm1707, %v3554, -inf
    %v3683 = vsel %vm1707, %v3555, -inf
    %v3684 = vsel %vm1707, %v3556, -inf
    %v3685 = vsel %vm1707, %v3557, -inf
    %v3686 = vsel %vm1707, %v3558, -inf
    %v3687 = vsel %vm1707, %v3559, -inf
    %v3688 = vsel %vm1707, %v3560, -inf
    %v3689 = vsel %vm1707, %v3561, -inf
    %v3690 = vsel %vm1707, %v3562, -inf
    %v3691 = vsel %vm1707, %v3563, -inf
    %v3692 = vsel %vm1707, %v3564, -inf
    %v3693 = vsel %vm1707, %v3565, -inf
    %v3694 = vsel %vm1707, %v3566, -inf
    %v3695 = vsel %vm1707, %v3567, -inf
    %v3696 = vsel %vm1707, %v3568, -inf
    %v3697 = vsel %vm1707, %v3569, -inf
    %v3698 = vsel %vm1707, %v3570, -inf
    %v3699 = vsel %vm1707, %v3571, -inf
    %v3700 = vsel %vm1707, %v3572, -inf
    %v3701 = vsel %vm1707, %v3573, -inf
    %v3702 = vsel %vm1707, %v3574, -inf
    %v3703 = vsel %vm1707, %v3575, -inf
    %v3704 = vsel %vm1707, %v3576, -inf
    %v3705 = vsel %vm1707, %v3577, -inf
    %v3706 = vsel %vm1707, %v3578, -inf
    %v3707 = vsel %vm1707, %v3579, -inf
    %v3708 = vsel %vm1707, %v3580, -inf
    %v3709 = vsel %vm1707, %v3581, -inf
    %v3710 = vsel %vm1707, %v3582, -inf
    %v3711 = vsel %vm1707, %v3583, -inf
    %v3712 = vsel %vm1707, %v3584, -inf
    %v3713 = vsel %vm1707, %v3585, -inf
    %v3714 = vsel %vm1707, %v3586, -inf
    %v3715 = vsel %vm1707, %v3587, -inf
    %v3716 = vsel %vm1707, %v3588, -inf
    %v3717 = vsel %vm1707, %v3589, -inf
    %v3718 = vsel %vm1707, %v3590, -inf
    %v3719 = vsel %vm1707, %v3591, -inf
    %v3720 = vsel %vm1707, %v3592, -inf
    %v3721 = vsel %vm1707, %v3593, -inf
    %v3722 = vsel %vm1707, %v3594, -inf
    %v3723 = vsel %vm1707, %v3595, -inf
    %v3724 = vsel %vm1707, %v3596, -inf
    %v3725 = vsel %vm1707, %v3597, -inf
    %v3726 = vsel %vm1707, %v3598, -inf
    %v3727 = vsel %vm1707, %v3599, -inf
    %v3728 = vsel %vm1707, %v3600, -inf
    %v3729 = vsel %vm1707, %v3601, -inf
    %v3730 = vsel %vm1707, %v3602, -inf
    %v3731 = vsel %vm1707, %v3603, -inf
    %v3732 = vsel %vm1707, %v3604, -inf
    %v3733 = vsel %vm1707, %v3605, -inf
    %v3734 = vsel %vm1707, %v3606, -inf
    %v3735 = vsel %vm1707, %v3607, -inf
    %v3736 = vsel %vm1707, %v3608, -inf
    %v3737 = vsel %vm1707, %v3609, -inf
    %3738 = vmax.xlane.f32.xlu0 %v3610
    %v3739 = vpop.xlane.xlu0 %3738
    %3740 = vmax.xlane.f32.xlu0 %v3611
    %v3741 = vpop.xlane.xlu0 %3740
    %3742 = vmax.xlane.f32.xlu0 %v3612
    %v3743 = vpop.xlane.xlu0 %3742
    %3744 = vmax.xlane.f32.xlu0 %v3613
    %v3745 = vpop.xlane.xlu0 %3744
    %3746 = vmax.xlane.f32.xlu0 %v3614
    %v3747 = vpop.xlane.xlu0 %3746
    %3748 = vmax.xlane.f32.xlu0 %v3615
    %v3749 = vpop.xlane.xlu0 %3748
    %3750 = vmax.xlane.f32.xlu0 %v3616
    %v3751 = vpop.xlane.xlu0 %3750
    %3752 = vmax.xlane.f32.xlu0 %v3617
    %v3753 = vpop.xlane.xlu0 %3752
    %3754 = vmax.xlane.f32.xlu0 %v3618
    %v3755 = vpop.xlane.xlu0 %3754
    %3756 = vmax.xlane.f32.xlu0 %v3619
    %v3757 = vpop.xlane.xlu0 %3756
    %3758 = vmax.xlane.f32.xlu0 %v3620
    %v3759 = vpop.xlane.xlu0 %3758
    %3760 = vmax.xlane.f32.xlu0 %v3621
    %v3761 = vpop.xlane.xlu0 %3760
    %3762 = vmax.xlane.f32.xlu0 %v3622
    %v3763 = vpop.xlane.xlu0 %3762
    %3764 = vmax.xlane.f32.xlu0 %v3623
    %v3765 = vpop.xlane.xlu0 %3764
    %3766 = vmax.xlane.f32.xlu0 %v3624
    %v3767 = vpop.xlane.xlu0 %3766
    %3768 = vmax.xlane.f32.xlu0 %v3625
    %v3769 = vpop.xlane.xlu0 %3768
    %3770 = vmax.xlane.f32.xlu0 %v3626
    %v3771 = vpop.xlane.xlu0 %3770
    %3772 = vmax.xlane.f32.xlu0 %v3627
    %v3773 = vpop.xlane.xlu0 %3772
    %3774 = vmax.xlane.f32.xlu0 %v3628
    %v3775 = vpop.xlane.xlu0 %3774
    %3776 = vmax.xlane.f32.xlu0 %v3629
    %v3777 = vpop.xlane.xlu0 %3776
    %3778 = vmax.xlane.f32.xlu0 %v3630
    %v3779 = vpop.xlane.xlu0 %3778
    %3780 = vmax.xlane.f32.xlu0 %v3631
    %v3781 = vpop.xlane.xlu0 %3780
    %3782 = vmax.xlane.f32.xlu0 %v3632
    %v3783 = vpop.xlane.xlu0 %3782
    %3784 = vmax.xlane.f32.xlu0 %v3633
    %v3785 = vpop.xlane.xlu0 %3784
    %3786 = vmax.xlane.f32.xlu0 %v3634
    %v3787 = vpop.xlane.xlu0 %3786
    %3788 = vmax.xlane.f32.xlu0 %v3635
    %v3789 = vpop.xlane.xlu0 %3788
    %3790 = vmax.xlane.f32.xlu0 %v3636
    %v3791 = vpop.xlane.xlu0 %3790
    %3792 = vmax.xlane.f32.xlu0 %v3637
    %v3793 = vpop.xlane.xlu0 %3792
    %3794 = vmax.xlane.f32.xlu0 %v3638
    %v3795 = vpop.xlane.xlu0 %3794
    %3796 = vmax.xlane.f32.xlu0 %v3639
    %v3797 = vpop.xlane.xlu0 %3796
    %3798 = vmax.xlane.f32.xlu0 %v3640
    %v3799 = vpop.xlane.xlu0 %3798
    %3800 = vmax.xlane.f32.xlu0 %v3641
    %v3801 = vpop.xlane.xlu0 %3800
    %3802 = vmax.xlane.f32.xlu0 %v3642
    %v3803 = vpop.xlane.xlu0 %3802
    %3804 = vmax.xlane.f32.xlu0 %v3643
    %v3805 = vpop.xlane.xlu0 %3804
    %3806 = vmax.xlane.f32.xlu0 %v3644
    %v3807 = vpop.xlane.xlu0 %3806
    %3808 = vmax.xlane.f32.xlu0 %v3645
    %v3809 = vpop.xlane.xlu0 %3808
    %3810 = vmax.xlane.f32.xlu0 %v3646
    %v3811 = vpop.xlane.xlu0 %3810
    %3812 = vmax.xlane.f32.xlu0 %v3647
    %v3813 = vpop.xlane.xlu0 %3812
    %3814 = vmax.xlane.f32.xlu0 %v3648
    %v3815 = vpop.xlane.xlu0 %3814
    %3816 = vmax.xlane.f32.xlu0 %v3649
    %v3817 = vpop.xlane.xlu0 %3816
    %3818 = vmax.xlane.f32.xlu0 %v3650
    %v3819 = vpop.xlane.xlu0 %3818
    %3820 = vmax.xlane.f32.xlu0 %v3651
    %v3821 = vpop.xlane.xlu0 %3820
    %3822 = vmax.xlane.f32.xlu0 %v3652
    %v3823 = vpop.xlane.xlu0 %3822
    %3824 = vmax.xlane.f32.xlu0 %v3653
    %v3825 = vpop.xlane.xlu0 %3824
    %3826 = vmax.xlane.f32.xlu0 %v3654
    %v3827 = vpop.xlane.xlu0 %3826
    %3828 = vmax.xlane.f32.xlu0 %v3655
    %v3829 = vpop.xlane.xlu0 %3828
    %3830 = vmax.xlane.f32.xlu0 %v3656
    %v3831 = vpop.xlane.xlu0 %3830
    %3832 = vmax.xlane.f32.xlu0 %v3657
    %v3833 = vpop.xlane.xlu0 %3832
    %3834 = vmax.xlane.f32.xlu0 %v3658
    %v3835 = vpop.xlane.xlu0 %3834
    %3836 = vmax.xlane.f32.xlu0 %v3659
    %v3837 = vpop.xlane.xlu0 %3836
    %3838 = vmax.xlane.f32.xlu0 %v3660
    %v3839 = vpop.xlane.xlu0 %3838
    %3840 = vmax.xlane.f32.xlu0 %v3661
    %v3841 = vpop.xlane.xlu0 %3840
    %3842 = vmax.xlane.f32.xlu0 %v3662
    %v3843 = vpop.xlane.xlu0 %3842
    %3844 = vmax.xlane.f32.xlu0 %v3663
    %v3845 = vpop.xlane.xlu0 %3844
    %3846 = vmax.xlane.f32.xlu0 %v3664
    %v3847 = vpop.xlane.xlu0 %3846
    %3848 = vmax.xlane.f32.xlu0 %v3665
    %v3849 = vpop.xlane.xlu0 %3848
    %3850 = vmax.xlane.f32.xlu0 %v3666
    %v3851 = vpop.xlane.xlu0 %3850
    %3852 = vmax.xlane.f32.xlu0 %v3667
    %v3853 = vpop.xlane.xlu0 %3852
    %3854 = vmax.xlane.f32.xlu0 %v3668
    %v3855 = vpop.xlane.xlu0 %3854
    %3856 = vmax.xlane.f32.xlu0 %v3669
    %v3857 = vpop.xlane.xlu0 %3856
    %3858 = vmax.xlane.f32.xlu0 %v3670
    %v3859 = vpop.xlane.xlu0 %3858
    %3860 = vmax.xlane.f32.xlu0 %v3671
    %v3861 = vpop.xlane.xlu0 %3860
    %3862 = vmax.xlane.f32.xlu0 %v3672
    %v3863 = vpop.xlane.xlu0 %3862
    %3864 = vmax.xlane.f32.xlu0 %v3673
    %v3865 = vpop.xlane.xlu0 %3864
    %3866 = vmax.xlane.f32.xlu0 %v3674
    %v3867 = vpop.xlane.xlu0 %3866
    %3868 = vmax.xlane.f32.xlu0 %v3675
    %v3869 = vpop.xlane.xlu0 %3868
    %3870 = vmax.xlane.f32.xlu0 %v3676
    %v3871 = vpop.xlane.xlu0 %3870
    %3872 = vmax.xlane.f32.xlu0 %v3677
    %v3873 = vpop.xlane.xlu0 %3872
    %3874 = vmax.xlane.f32.xlu0 %v3678
    %v3875 = vpop.xlane.xlu0 %3874
    %3876 = vmax.xlane.f32.xlu0 %v3679
    %v3877 = vpop.xlane.xlu0 %3876
    %3878 = vmax.xlane.f32.xlu0 %v3680
    %v3879 = vpop.xlane.xlu0 %3878
    %3880 = vmax.xlane.f32.xlu0 %v3681
    %v3881 = vpop.xlane.xlu0 %3880
    %3882 = vmax.xlane.f32.xlu0 %v3682
    %v3883 = vpop.xlane.xlu0 %3882
    %3884 = vmax.xlane.f32.xlu0 %v3683
    %v3885 = vpop.xlane.xlu0 %3884
    %3886 = vmax.xlane.f32.xlu0 %v3684
    %v3887 = vpop.xlane.xlu0 %3886
    %3888 = vmax.xlane.f32.xlu0 %v3685
    %v3889 = vpop.xlane.xlu0 %3888
    %3890 = vmax.xlane.f32.xlu0 %v3686
    %v3891 = vpop.xlane.xlu0 %3890
    %3892 = vmax.xlane.f32.xlu0 %v3687
    %v3893 = vpop.xlane.xlu0 %3892
    %3894 = vmax.xlane.f32.xlu0 %v3688
    %v3895 = vpop.xlane.xlu0 %3894
    %3896 = vmax.xlane.f32.xlu0 %v3689
    %v3897 = vpop.xlane.xlu0 %3896
    %3898 = vmax.xlane.f32.xlu0 %v3690
    %v3899 = vpop.xlane.xlu0 %3898
    %3900 = vmax.xlane.f32.xlu0 %v3691
    %v3901 = vpop.xlane.xlu0 %3900
    %3902 = vmax.xlane.f32.xlu0 %v3692
    %v3903 = vpop.xlane.xlu0 %3902
    %3904 = vmax.xlane.f32.xlu0 %v3693
    %v3905 = vpop.xlane.xlu0 %3904
    %3906 = vmax.xlane.f32.xlu0 %v3694
    %v3907 = vpop.xlane.xlu0 %3906
    %3908 = vmax.xlane.f32.xlu0 %v3695
    %v3909 = vpop.xlane.xlu0 %3908
    %3910 = vmax.xlane.f32.xlu0 %v3696
    %v3911 = vpop.xlane.xlu0 %3910
    %3912 = vmax.xlane.f32.xlu0 %v3697
    %v3913 = vpop.xlane.xlu0 %3912
    %3914 = vmax.xlane.f32.xlu0 %v3698
    %v3915 = vpop.xlane.xlu0 %3914
    %3916 = vmax.xlane.f32.xlu0 %v3699
    %v3917 = vpop.xlane.xlu0 %3916
    %3918 = vmax.xlane.f32.xlu0 %v3700
    %v3919 = vpop.xlane.xlu0 %3918
    %3920 = vmax.xlane.f32.xlu0 %v3701
    %v3921 = vpop.xlane.xlu0 %3920
    %3922 = vmax.xlane.f32.xlu0 %v3702
    %v3923 = vpop.xlane.xlu0 %3922
    %3924 = vmax.xlane.f32.xlu0 %v3703
    %v3925 = vpop.xlane.xlu0 %3924
    %3926 = vmax.xlane.f32.xlu0 %v3704
    %v3927 = vpop.xlane.xlu0 %3926
    %3928 = vmax.xlane.f32.xlu0 %v3705
    %v3929 = vpop.xlane.xlu0 %3928
    %3930 = vmax.xlane.f32.xlu0 %v3706
    %v3931 = vpop.xlane.xlu0 %3930
    %3932 = vmax.xlane.f32.xlu0 %v3707
    %v3933 = vpop.xlane.xlu0 %3932
    %3934 = vmax.xlane.f32.xlu0 %v3708
    %v3935 = vpop.xlane.xlu0 %3934
    %3936 = vmax.xlane.f32.xlu0 %v3709
    %v3937 = vpop.xlane.xlu0 %3936
    %3938 = vmax.xlane.f32.xlu0 %v3710
    %v3939 = vpop.xlane.xlu0 %3938
    %3940 = vmax.xlane.f32.xlu0 %v3711
    %v3941 = vpop.xlane.xlu0 %3940
    %3942 = vmax.xlane.f32.xlu0 %v3712
    %v3943 = vpop.xlane.xlu0 %3942
    %3944 = vmax.xlane.f32.xlu0 %v3713
    %v3945 = vpop.xlane.xlu0 %3944
    %3946 = vmax.xlane.f32.xlu0 %v3714
    %v3947 = vpop.xlane.xlu0 %3946
    %3948 = vmax.xlane.f32.xlu0 %v3715
    %v3949 = vpop.xlane.xlu0 %3948
    %3950 = vmax.xlane.f32.xlu0 %v3716
    %v3951 = vpop.xlane.xlu0 %3950
    %3952 = vmax.xlane.f32.xlu0 %v3717
    %v3953 = vpop.xlane.xlu0 %3952
    %3954 = vmax.xlane.f32.xlu0 %v3718
    %v3955 = vpop.xlane.xlu0 %3954
    %3956 = vmax.xlane.f32.xlu0 %v3719
    %v3957 = vpop.xlane.xlu0 %3956
    %3958 = vmax.xlane.f32.xlu0 %v3720
    %v3959 = vpop.xlane.xlu0 %3958
    %3960 = vmax.xlane.f32.xlu0 %v3721
    %v3961 = vpop.xlane.xlu0 %3960
    %3962 = vmax.xlane.f32.xlu0 %v3722
    %v3963 = vpop.xlane.xlu0 %3962
    %3964 = vmax.xlane.f32.xlu0 %v3723
    %v3965 = vpop.xlane.xlu0 %3964
    %3966 = vmax.xlane.f32.xlu0 %v3724
    %v3967 = vpop.xlane.xlu0 %3966
    %3968 = vmax.xlane.f32.xlu0 %v3725
    %v3969 = vpop.xlane.xlu0 %3968
    %3970 = vmax.xlane.f32.xlu0 %v3726
    %v3971 = vpop.xlane.xlu0 %3970
    %3972 = vmax.xlane.f32.xlu0 %v3727
    %v3973 = vpop.xlane.xlu0 %3972
    %3974 = vmax.xlane.f32.xlu0 %v3728
    %v3975 = vpop.xlane.xlu0 %3974
    %3976 = vmax.xlane.f32.xlu0 %v3729
    %v3977 = vpop.xlane.xlu0 %3976
    %3978 = vmax.xlane.f32.xlu0 %v3730
    %v3979 = vpop.xlane.xlu0 %3978
    %3980 = vmax.xlane.f32.xlu0 %v3731
    %v3981 = vpop.xlane.xlu0 %3980
    %3982 = vmax.xlane.f32.xlu0 %v3732
    %v3983 = vpop.xlane.xlu0 %3982
    %3984 = vmax.xlane.f32.xlu0 %v3733
    %v3985 = vpop.xlane.xlu0 %3984
    %3986 = vmax.xlane.f32.xlu0 %v3734
    %v3987 = vpop.xlane.xlu0 %3986
    %3988 = vmax.xlane.f32.xlu0 %v3735
    %v3989 = vpop.xlane.xlu0 %3988
    %3990 = vmax.xlane.f32.xlu0 %v3736
    %v3991 = vpop.xlane.xlu0 %3990
    %3992 = vmax.xlane.f32.xlu0 %v3737
    %v3993 = vpop.xlane.xlu0 %3992
    %v3994 = vmul.f32 %v3389, 0.8
    %v3995 = vmul.f32 %v3739, 0.2
    %v3996 = vmul.f32 %v3741, 0.2
    %v3997 = vmul.f32 %v3743, 0.2
    %v3998 = vmul.f32 %v3745, 0.2
    %v3999 = vmul.f32 %v3747, 0.2
    %v4000 = vmul.f32 %v3749, 0.2
    %v4001 = vmul.f32 %v3751, 0.2
    %v4002 = vmul.f32 %v3753, 0.2
    %v4003 = vmul.f32 %v3755, 0.2
    %v4004 = vmul.f32 %v3757, 0.2
    %v4005 = vmul.f32 %v3759, 0.2
    %v4006 = vmul.f32 %v3761, 0.2
    %v4007 = vmul.f32 %v3763, 0.2
    %v4008 = vmul.f32 %v3765, 0.2
    %v4009 = vmul.f32 %v3767, 0.2
    %v4010 = vmul.f32 %v3769, 0.2
    %v4011 = vmul.f32 %v3771, 0.2
    %v4012 = vmul.f32 %v3773, 0.2
    %v4013 = vmul.f32 %v3775, 0.2
    %v4014 = vmul.f32 %v3777, 0.2
    %v4015 = vmul.f32 %v3779, 0.2
    %v4016 = vmul.f32 %v3781, 0.2
    %v4017 = vmul.f32 %v3783, 0.2
    %v4018 = vmul.f32 %v3785, 0.2
    %v4019 = vmul.f32 %v3787, 0.2
    %v4020 = vmul.f32 %v3789, 0.2
    %v4021 = vmul.f32 %v3791, 0.2
    %v4022 = vmul.f32 %v3793, 0.2
    %v4023 = vmul.f32 %v3795, 0.2
    %v4024 = vmul.f32 %v3797, 0.2
    %v4025 = vmul.f32 %v3799, 0.2
    %v4026 = vmul.f32 %v3801, 0.2
    %v4027 = vmul.f32 %v3803, 0.2
    %v4028 = vmul.f32 %v3805, 0.2
    %v4029 = vmul.f32 %v3807, 0.2
    %v4030 = vmul.f32 %v3809, 0.2
    %v4031 = vmul.f32 %v3811, 0.2
    %v4032 = vmul.f32 %v3813, 0.2
    %v4033 = vmul.f32 %v3815, 0.2
    %v4034 = vmul.f32 %v3817, 0.2
    %v4035 = vmul.f32 %v3819, 0.2
    %v4036 = vmul.f32 %v3821, 0.2
    %v4037 = vmul.f32 %v3823, 0.2
    %v4038 = vmul.f32 %v3825, 0.2
    %v4039 = vmul.f32 %v3827, 0.2
    %v4040 = vmul.f32 %v3829, 0.2
    %v4041 = vmul.f32 %v3831, 0.2
    %v4042 = vmul.f32 %v3833, 0.2
    %v4043 = vmul.f32 %v3835, 0.2
    %v4044 = vmul.f32 %v3837, 0.2
    %v4045 = vmul.f32 %v3839, 0.2
    %v4046 = vmul.f32 %v3841, 0.2
    %v4047 = vmul.f32 %v3843, 0.2
    %v4048 = vmul.f32 %v3845, 0.2
    %v4049 = vmul.f32 %v3847, 0.2
    %v4050 = vmul.f32 %v3849, 0.2
    %v4051 = vmul.f32 %v3851, 0.2
    %v4052 = vmul.f32 %v3853, 0.2
    %v4053 = vmul.f32 %v3855, 0.2
    %v4054 = vmul.f32 %v3857, 0.2
    %v4055 = vmul.f32 %v3859, 0.2
    %v4056 = vmul.f32 %v3861, 0.2
    %v4057 = vmul.f32 %v3863, 0.2
    %v4058 = vmul.f32 %v3865, 0.2
    %v4059 = vmul.f32 %v3867, 0.2
    %v4060 = vmul.f32 %v3869, 0.2
    %v4061 = vmul.f32 %v3871, 0.2
    %v4062 = vmul.f32 %v3873, 0.2
    %v4063 = vmul.f32 %v3875, 0.2
    %v4064 = vmul.f32 %v3877, 0.2
    %v4065 = vmul.f32 %v3879, 0.2
    %v4066 = vmul.f32 %v3881, 0.2
    %v4067 = vmul.f32 %v3883, 0.2
    %v4068 = vmul.f32 %v3885, 0.2
    %v4069 = vmul.f32 %v3887, 0.2
    %v4070 = vmul.f32 %v3889, 0.2
    %v4071 = vmul.f32 %v3891, 0.2
    %v4072 = vmul.f32 %v3893, 0.2
    %v4073 = vmul.f32 %v3895, 0.2
    %v4074 = vmul.f32 %v3897, 0.2
    %v4075 = vmul.f32 %v3899, 0.2
    %v4076 = vmul.f32 %v3901, 0.2
    %v4077 = vmul.f32 %v3903, 0.2
    %v4078 = vmul.f32 %v3905, 0.2
    %v4079 = vmul.f32 %v3907, 0.2
    %v4080 = vmul.f32 %v3909, 0.2
    %v4081 = vmul.f32 %v3911, 0.2
    %v4082 = vmul.f32 %v3913, 0.2
    %v4083 = vmul.f32 %v3915, 0.2
    %v4084 = vmul.f32 %v3917, 0.2
    %v4085 = vmul.f32 %v3919, 0.2
    %v4086 = vmul.f32 %v3921, 0.2
    %v4087 = vmul.f32 %v3923, 0.2
    %v4088 = vmul.f32 %v3925, 0.2
    %v4089 = vmul.f32 %v3927, 0.2
    %v4090 = vmul.f32 %v3929, 0.2
    %v4091 = vmul.f32 %v3931, 0.2
    %v4092 = vmul.f32 %v3933, 0.2
    %v4093 = vmul.f32 %v3935, 0.2
    %v4094 = vmul.f32 %v3937, 0.2
    %v4095 = vmul.f32 %v3939, 0.2
    %v4096 = vmul.f32 %v3941, 0.2
    %v4097 = vmul.f32 %v3943, 0.2
    %v4098 = vmul.f32 %v3945, 0.2
    %v4099 = vmul.f32 %v3947, 0.2
    %v4100 = vmul.f32 %v3949, 0.2
    %v4101 = vmul.f32 %v3951, 0.2
    %v4102 = vmul.f32 %v3953, 0.2
    %v4103 = vmul.f32 %v3955, 0.2
    %v4104 = vmul.f32 %v3957, 0.2
    %v4105 = vmul.f32 %v3959, 0.2
    %v4106 = vmul.f32 %v3961, 0.2
    %v4107 = vmul.f32 %v3963, 0.2
    %v4108 = vmul.f32 %v3965, 0.2
    %v4109 = vmul.f32 %v3967, 0.2
    %v4110 = vmul.f32 %v3969, 0.2
    %v4111 = vmul.f32 %v3971, 0.2
    %v4112 = vmul.f32 %v3973, 0.2
    %v4113 = vmul.f32 %v3975, 0.2
    %v4114 = vmul.f32 %v3977, 0.2
    %v4115 = vmul.f32 %v3979, 0.2
    %v4116 = vmul.f32 %v3981, 0.2
    %v4117 = vmul.f32 %v3983, 0.2
    %v4118 = vmul.f32 %v3985, 0.2
    %v4119 = vmul.f32 %v3987, 0.2
    %v4120 = vmul.f32 %v3989, 0.2
    %v4121 = vmul.f32 %v3991, 0.2
    %v4122 = vmul.f32 %v3993, 0.2
    %v4251 = vlaneseq
    %v4252 = vshrl.u32 %v4251, 7
    %v4253 = vsub.s32 %v374, %v4252
    %v4254 = vrot.slane %v3995, %v4253
    %v4255 = vlaneseq
    %v4256 = vshrl.u32 %v4255, 7
    %v4257 = vsub.s32 %v1023, %v4256
    %v4258 = vrot.slane %v3996, %v4257
    %v4259 = vsel %vm1028, %v4258, %v4254
    %v4260 = vlaneseq
    %v4261 = vshrl.u32 %v4260, 7
    %v4262 = vsub.s32 %v1030, %v4261
    %v4263 = vrot.slane %v3997, %v4262
    %v4264 = vsel %vm1035, %v4263, %v4259
    %v4265 = vlaneseq
    %v4266 = vshrl.u32 %v4265, 7
    %v4267 = vsub.s32 %v1037, %v4266
    %v4268 = vrot.slane %v3998, %v4267
    %v4269 = vsel %vm1042, %v4268, %v4264
    %v4270 = vlaneseq
    %v4271 = vshrl.u32 %v4270, 7
    %v4272 = vsub.s32 %v1044, %v4271
    %v4273 = vrot.slane %v3999, %v4272
    %v4274 = vsel %vm1049, %v4273, %v4269
    %v4275 = vlaneseq
    %v4276 = vshrl.u32 %v4275, 7
    %v4277 = vsub.s32 %v1051, %v4276
    %v4278 = vrot.slane %v4000, %v4277
    %v4279 = vsel %vm1056, %v4278, %v4274
    %v4280 = vlaneseq
    %v4281 = vshrl.u32 %v4280, 7
    %v4282 = vsub.s32 %v1058, %v4281
    %v4283 = vrot.slane %v4001, %v4282
    %v4284 = vsel %vm1063, %v4283, %v4279
    %v4285 = vlaneseq
    %v4286 = vshrl.u32 %v4285, 7
    %v4287 = vsub.s32 %v1065, %v4286
    %v4288 = vrot.slane %v4002, %v4287
    %v4289 = vsel %vm1070, %v4288, %v4284
    %v4290 = vlaneseq
    %v4291 = vshrl.u32 %v4290, 7
    %v4292 = vsub.s32 %v1072, %v4291
    %v4293 = vrot.slane %v4003, %v4292
    %v4294 = vsel %vm1077, %v4293, %v4289
    %v4295 = vlaneseq
    %v4296 = vshrl.u32 %v4295, 7
    %v4297 = vsub.s32 %v1079, %v4296
    %v4298 = vrot.slane %v4004, %v4297
    %v4299 = vsel %vm1084, %v4298, %v4294
    %v4300 = vlaneseq
    %v4301 = vshrl.u32 %v4300, 7
    %v4302 = vsub.s32 %v1086, %v4301
    %v4303 = vrot.slane %v4005, %v4302
    %v4304 = vsel %vm1091, %v4303, %v4299
    %v4305 = vlaneseq
    %v4306 = vshrl.u32 %v4305, 7
    %v4307 = vsub.s32 %v1093, %v4306
    %v4308 = vrot.slane %v4006, %v4307
    %v4309 = vsel %vm1098, %v4308, %v4304
    %v4310 = vlaneseq
    %v4311 = vshrl.u32 %v4310, 7
    %v4312 = vsub.s32 %v1100, %v4311
    %v4313 = vrot.slane %v4007, %v4312
    %v4314 = vsel %vm1105, %v4313, %v4309
    %v4315 = vlaneseq
    %v4316 = vshrl.u32 %v4315, 7
    %v4317 = vsub.s32 %v1107, %v4316
    %v4318 = vrot.slane %v4008, %v4317
    %v4319 = vsel %vm1112, %v4318, %v4314
    %v4320 = vlaneseq
    %v4321 = vshrl.u32 %v4320, 7
    %v4322 = vsub.s32 %v1114, %v4321
    %v4323 = vrot.slane %v4009, %v4322
    %v4324 = vsel %vm1119, %v4323, %v4319
    %v4325 = vlaneseq
    %v4326 = vshrl.u32 %v4325, 7
    %v4327 = vsub.s32 %v1121, %v4326
    %v4328 = vrot.slane %v4010, %v4327
    %v4329 = vsel %vm1126, %v4328, %v4324
    %v4330 = vlaneseq
    %v4331 = vshrl.u32 %v4330, 7
    %v4332 = vsub.s32 %v374, %v4331
    %v4333 = vrot.slane %v4011, %v4332
    %v4334 = vlaneseq
    %v4335 = vshrl.u32 %v4334, 7
    %v4336 = vsub.s32 %v1023, %v4335
    %v4337 = vrot.slane %v4012, %v4336
    %v4338 = vsel %vm1028, %v4337, %v4333
    %v4339 = vlaneseq
    %v4340 = vshrl.u32 %v4339, 7
    %v4341 = vsub.s32 %v1030, %v4340
    %v4342 = vrot.slane %v4013, %v4341
    %v4343 = vsel %vm1035, %v4342, %v4338
    %v4344 = vlaneseq
    %v4345 = vshrl.u32 %v4344, 7
    %v4346 = vsub.s32 %v1037, %v4345
    %v4347 = vrot.slane %v4014, %v4346
    %v4348 = vsel %vm1042, %v4347, %v4343
    %v4349 = vlaneseq
    %v4350 = vshrl.u32 %v4349, 7
    %v4351 = vsub.s32 %v1044, %v4350
    %v4352 = vrot.slane %v4015, %v4351
    %v4353 = vsel %vm1049, %v4352, %v4348
    %v4354 = vlaneseq
    %v4355 = vshrl.u32 %v4354, 7
    %v4356 = vsub.s32 %v1051, %v4355
    %v4357 = vrot.slane %v4016, %v4356
    %v4358 = vsel %vm1056, %v4357, %v4353
    %v4359 = vlaneseq
    %v4360 = vshrl.u32 %v4359, 7
    %v4361 = vsub.s32 %v1058, %v4360
    %v4362 = vrot.slane %v4017, %v4361
    %v4363 = vsel %vm1063, %v4362, %v4358
    %v4364 = vlaneseq
    %v4365 = vshrl.u32 %v4364, 7
    %v4366 = vsub.s32 %v1065, %v4365
    %v4367 = vrot.slane %v4018, %v4366
    %v4368 = vsel %vm1070, %v4367, %v4363
    %v4369 = vlaneseq
    %v4370 = vshrl.u32 %v4369, 7
    %v4371 = vsub.s32 %v1072, %v4370
    %v4372 = vrot.slane %v4019, %v4371
    %v4373 = vsel %vm1077, %v4372, %v4368
    %v4374 = vlaneseq
    %v4375 = vshrl.u32 %v4374, 7
    %v4376 = vsub.s32 %v1079, %v4375
    %v4377 = vrot.slane %v4020, %v4376
    %v4378 = vsel %vm1084, %v4377, %v4373
    %v4379 = vlaneseq
    %v4380 = vshrl.u32 %v4379, 7
    %v4381 = vsub.s32 %v1086, %v4380
    %v4382 = vrot.slane %v4021, %v4381
    %v4383 = vsel %vm1091, %v4382, %v4378
    %v4384 = vlaneseq
    %v4385 = vshrl.u32 %v4384, 7
    %v4386 = vsub.s32 %v1093, %v4385
    %v4387 = vrot.slane %v4022, %v4386
    %v4388 = vsel %vm1098, %v4387, %v4383
    %v4389 = vlaneseq
    %v4390 = vshrl.u32 %v4389, 7
    %v4391 = vsub.s32 %v1100, %v4390
    %v4392 = vrot.slane %v4023, %v4391
    %v4393 = vsel %vm1105, %v4392, %v4388
    %v4394 = vlaneseq
    %v4395 = vshrl.u32 %v4394, 7
    %v4396 = vsub.s32 %v1107, %v4395
    %v4397 = vrot.slane %v4024, %v4396
    %v4398 = vsel %vm1112, %v4397, %v4393
    %v4399 = vlaneseq
    %v4400 = vshrl.u32 %v4399, 7
    %v4401 = vsub.s32 %v1114, %v4400
    %v4402 = vrot.slane %v4025, %v4401
    %v4403 = vsel %vm1119, %v4402, %v4398
    %v4404 = vlaneseq
    %v4405 = vshrl.u32 %v4404, 7
    %v4406 = vsub.s32 %v1121, %v4405
    %v4407 = vrot.slane %v4026, %v4406
    %v4408 = vsel %vm1126, %v4407, %v4403
    %v4409 = vlaneseq
    %v4410 = vshrl.u32 %v4409, 7
    %v4411 = vsub.s32 %v374, %v4410
    %v4412 = vrot.slane %v4027, %v4411
    %v4413 = vlaneseq
    %v4414 = vshrl.u32 %v4413, 7
    %v4415 = vsub.s32 %v1023, %v4414
    %v4416 = vrot.slane %v4028, %v4415
    %v4417 = vsel %vm1028, %v4416, %v4412
    %v4418 = vlaneseq
    %v4419 = vshrl.u32 %v4418, 7
    %v4420 = vsub.s32 %v1030, %v4419
    %v4421 = vrot.slane %v4029, %v4420
    %v4422 = vsel %vm1035, %v4421, %v4417
    %v4423 = vlaneseq
    %v4424 = vshrl.u32 %v4423, 7
    %v4425 = vsub.s32 %v1037, %v4424
    %v4426 = vrot.slane %v4030, %v4425
    %v4427 = vsel %vm1042, %v4426, %v4422
    %v4428 = vlaneseq
    %v4429 = vshrl.u32 %v4428, 7
    %v4430 = vsub.s32 %v1044, %v4429
    %v4431 = vrot.slane %v4031, %v4430
    %v4432 = vsel %vm1049, %v4431, %v4427
    %v4433 = vlaneseq
    %v4434 = vshrl.u32 %v4433, 7
    %v4435 = vsub.s32 %v1051, %v4434
    %v4436 = vrot.slane %v4032, %v4435
    %v4437 = vsel %vm1056, %v4436, %v4432
    %v4438 = vlaneseq
    %v4439 = vshrl.u32 %v4438, 7
    %v4440 = vsub.s32 %v1058, %v4439
    %v4441 = vrot.slane %v4033, %v4440
    %v4442 = vsel %vm1063, %v4441, %v4437
    %v4443 = vlaneseq
    %v4444 = vshrl.u32 %v4443, 7
    %v4445 = vsub.s32 %v1065, %v4444
    %v4446 = vrot.slane %v4034, %v4445
    %v4447 = vsel %vm1070, %v4446, %v4442
    %v4448 = vlaneseq
    %v4449 = vshrl.u32 %v4448, 7
    %v4450 = vsub.s32 %v1072, %v4449
    %v4451 = vrot.slane %v4035, %v4450
    %v4452 = vsel %vm1077, %v4451, %v4447
    %v4453 = vlaneseq
    %v4454 = vshrl.u32 %v4453, 7
    %v4455 = vsub.s32 %v1079, %v4454
    %v4456 = vrot.slane %v4036, %v4455
    %v4457 = vsel %vm1084, %v4456, %v4452
    %v4458 = vlaneseq
    %v4459 = vshrl.u32 %v4458, 7
    %v4460 = vsub.s32 %v1086, %v4459
    %v4461 = vrot.slane %v4037, %v4460
    %v4462 = vsel %vm1091, %v4461, %v4457
    %v4463 = vlaneseq
    %v4464 = vshrl.u32 %v4463, 7
    %v4465 = vsub.s32 %v1093, %v4464
    %v4466 = vrot.slane %v4038, %v4465
    %v4467 = vsel %vm1098, %v4466, %v4462
    %v4468 = vlaneseq
    %v4469 = vshrl.u32 %v4468, 7
    %v4470 = vsub.s32 %v1100, %v4469
    %v4471 = vrot.slane %v4039, %v4470
    %v4472 = vsel %vm1105, %v4471, %v4467
    %v4473 = vlaneseq
    %v4474 = vshrl.u32 %v4473, 7
    %v4475 = vsub.s32 %v1107, %v4474
    %v4476 = vrot.slane %v4040, %v4475
    %v4477 = vsel %vm1112, %v4476, %v4472
    %v4478 = vlaneseq
    %v4479 = vshrl.u32 %v4478, 7
    %v4480 = vsub.s32 %v1114, %v4479
    %v4481 = vrot.slane %v4041, %v4480
    %v4482 = vsel %vm1119, %v4481, %v4477
    %v4483 = vlaneseq
    %v4484 = vshrl.u32 %v4483, 7
    %v4485 = vsub.s32 %v1121, %v4484
    %v4486 = vrot.slane %v4042, %v4485
    %v4487 = vsel %vm1126, %v4486, %v4482
    %v4488 = vlaneseq
    %v4489 = vshrl.u32 %v4488, 7
    %v4490 = vsub.s32 %v374, %v4489
    %v4491 = vrot.slane %v4043, %v4490
    %v4492 = vlaneseq
    %v4493 = vshrl.u32 %v4492, 7
    %v4494 = vsub.s32 %v1023, %v4493
    %v4495 = vrot.slane %v4044, %v4494
    %v4496 = vsel %vm1028, %v4495, %v4491
    %v4497 = vlaneseq
    %v4498 = vshrl.u32 %v4497, 7
    %v4499 = vsub.s32 %v1030, %v4498
    %v4500 = vrot.slane %v4045, %v4499
    %v4501 = vsel %vm1035, %v4500, %v4496
    %v4502 = vlaneseq
    %v4503 = vshrl.u32 %v4502, 7
    %v4504 = vsub.s32 %v1037, %v4503
    %v4505 = vrot.slane %v4046, %v4504
    %v4506 = vsel %vm1042, %v4505, %v4501
    %v4507 = vlaneseq
    %v4508 = vshrl.u32 %v4507, 7
    %v4509 = vsub.s32 %v1044, %v4508
    %v4510 = vrot.slane %v4047, %v4509
    %v4511 = vsel %vm1049, %v4510, %v4506
    %v4512 = vlaneseq
    %v4513 = vshrl.u32 %v4512, 7
    %v4514 = vsub.s32 %v1051, %v4513
    %v4515 = vrot.slane %v4048, %v4514
    %v4516 = vsel %vm1056, %v4515, %v4511
    %v4517 = vlaneseq
    %v4518 = vshrl.u32 %v4517, 7
    %v4519 = vsub.s32 %v1058, %v4518
    %v4520 = vrot.slane %v4049, %v4519
    %v4521 = vsel %vm1063, %v4520, %v4516
    %v4522 = vlaneseq
    %v4523 = vshrl.u32 %v4522, 7
    %v4524 = vsub.s32 %v1065, %v4523
    %v4525 = vrot.slane %v4050, %v4524
    %v4526 = vsel %vm1070, %v4525, %v4521
    %v4527 = vlaneseq
    %v4528 = vshrl.u32 %v4527, 7
    %v4529 = vsub.s32 %v1072, %v4528
    %v4530 = vrot.slane %v4051, %v4529
    %v4531 = vsel %vm1077, %v4530, %v4526
    %v4532 = vlaneseq
    %v4533 = vshrl.u32 %v4532, 7
    %v4534 = vsub.s32 %v1079, %v4533
    %v4535 = vrot.slane %v4052, %v4534
    %v4536 = vsel %vm1084, %v4535, %v4531
    %v4537 = vlaneseq
    %v4538 = vshrl.u32 %v4537, 7
    %v4539 = vsub.s32 %v1086, %v4538
    %v4540 = vrot.slane %v4053, %v4539
    %v4541 = vsel %vm1091, %v4540, %v4536
    %v4542 = vlaneseq
    %v4543 = vshrl.u32 %v4542, 7
    %v4544 = vsub.s32 %v1093, %v4543
    %v4545 = vrot.slane %v4054, %v4544
    %v4546 = vsel %vm1098, %v4545, %v4541
    %v4547 = vlaneseq
    %v4548 = vshrl.u32 %v4547, 7
    %v4549 = vsub.s32 %v1100, %v4548
    %v4550 = vrot.slane %v4055, %v4549
    %v4551 = vsel %vm1105, %v4550, %v4546
    %v4552 = vlaneseq
    %v4553 = vshrl.u32 %v4552, 7
    %v4554 = vsub.s32 %v1107, %v4553
    %v4555 = vrot.slane %v4056, %v4554
    %v4556 = vsel %vm1112, %v4555, %v4551
    %v4557 = vlaneseq
    %v4558 = vshrl.u32 %v4557, 7
    %v4559 = vsub.s32 %v1114, %v4558
    %v4560 = vrot.slane %v4057, %v4559
    %v4561 = vsel %vm1119, %v4560, %v4556
    %v4562 = vlaneseq
    %v4563 = vshrl.u32 %v4562, 7
    %v4564 = vsub.s32 %v1121, %v4563
    %v4565 = vrot.slane %v4058, %v4564
    %v4566 = vsel %vm1126, %v4565, %v4561
    %v4567 = vlaneseq
    %v4568 = vshrl.u32 %v4567, 7
    %v4569 = vsub.s32 %v374, %v4568
    %v4570 = vrot.slane %v4059, %v4569
    %v4571 = vlaneseq
    %v4572 = vshrl.u32 %v4571, 7
    %v4573 = vsub.s32 %v1023, %v4572
    %v4574 = vrot.slane %v4060, %v4573
    %v4575 = vsel %vm1028, %v4574, %v4570
    %v4576 = vlaneseq
    %v4577 = vshrl.u32 %v4576, 7
    %v4578 = vsub.s32 %v1030, %v4577
    %v4579 = vrot.slane %v4061, %v4578
    %v4580 = vsel %vm1035, %v4579, %v4575
    %v4581 = vlaneseq
    %v4582 = vshrl.u32 %v4581, 7
    %v4583 = vsub.s32 %v1037, %v4582
    %v4584 = vrot.slane %v4062, %v4583
    %v4585 = vsel %vm1042, %v4584, %v4580
    %v4586 = vlaneseq
    %v4587 = vshrl.u32 %v4586, 7
    %v4588 = vsub.s32 %v1044, %v4587
    %v4589 = vrot.slane %v4063, %v4588
    %v4590 = vsel %vm1049, %v4589, %v4585
    %v4591 = vlaneseq
    %v4592 = vshrl.u32 %v4591, 7
    %v4593 = vsub.s32 %v1051, %v4592
    %v4594 = vrot.slane %v4064, %v4593
    %v4595 = vsel %vm1056, %v4594, %v4590
    %v4596 = vlaneseq
    %v4597 = vshrl.u32 %v4596, 7
    %v4598 = vsub.s32 %v1058, %v4597
    %v4599 = vrot.slane %v4065, %v4598
    %v4600 = vsel %vm1063, %v4599, %v4595
    %v4601 = vlaneseq
    %v4602 = vshrl.u32 %v4601, 7
    %v4603 = vsub.s32 %v1065, %v4602
    %v4604 = vrot.slane %v4066, %v4603
    %v4605 = vsel %vm1070, %v4604, %v4600
    %v4606 = vlaneseq
    %v4607 = vshrl.u32 %v4606, 7
    %v4608 = vsub.s32 %v1072, %v4607
    %v4609 = vrot.slane %v4067, %v4608
    %v4610 = vsel %vm1077, %v4609, %v4605
    %v4611 = vlaneseq
    %v4612 = vshrl.u32 %v4611, 7
    %v4613 = vsub.s32 %v1079, %v4612
    %v4614 = vrot.slane %v4068, %v4613
    %v4615 = vsel %vm1084, %v4614, %v4610
    %v4616 = vlaneseq
    %v4617 = vshrl.u32 %v4616, 7
    %v4618 = vsub.s32 %v1086, %v4617
    %v4619 = vrot.slane %v4069, %v4618
    %v4620 = vsel %vm1091, %v4619, %v4615
    %v4621 = vlaneseq
    %v4622 = vshrl.u32 %v4621, 7
    %v4623 = vsub.s32 %v1093, %v4622
    %v4624 = vrot.slane %v4070, %v4623
    %v4625 = vsel %vm1098, %v4624, %v4620
    %v4626 = vlaneseq
    %v4627 = vshrl.u32 %v4626, 7
    %v4628 = vsub.s32 %v1100, %v4627
    %v4629 = vrot.slane %v4071, %v4628
    %v4630 = vsel %vm1105, %v4629, %v4625
    %v4631 = vlaneseq
    %v4632 = vshrl.u32 %v4631, 7
    %v4633 = vsub.s32 %v1107, %v4632
    %v4634 = vrot.slane %v4072, %v4633
    %v4635 = vsel %vm1112, %v4634, %v4630
    %v4636 = vlaneseq
    %v4637 = vshrl.u32 %v4636, 7
    %v4638 = vsub.s32 %v1114, %v4637
    %v4639 = vrot.slane %v4073, %v4638
    %v4640 = vsel %vm1119, %v4639, %v4635
    %v4641 = vlaneseq
    %v4642 = vshrl.u32 %v4641, 7
    %v4643 = vsub.s32 %v1121, %v4642
    %v4644 = vrot.slane %v4074, %v4643
    %v4645 = vsel %vm1126, %v4644, %v4640
    %v4646 = vlaneseq
    %v4647 = vshrl.u32 %v4646, 7
    %v4648 = vsub.s32 %v374, %v4647
    %v4649 = vrot.slane %v4075, %v4648
    %v4650 = vlaneseq
    %v4651 = vshrl.u32 %v4650, 7
    %v4652 = vsub.s32 %v1023, %v4651
    %v4653 = vrot.slane %v4076, %v4652
    %v4654 = vsel %vm1028, %v4653, %v4649
    %v4655 = vlaneseq
    %v4656 = vshrl.u32 %v4655, 7
    %v4657 = vsub.s32 %v1030, %v4656
    %v4658 = vrot.slane %v4077, %v4657
    %v4659 = vsel %vm1035, %v4658, %v4654
    %v4660 = vlaneseq
    %v4661 = vshrl.u32 %v4660, 7
    %v4662 = vsub.s32 %v1037, %v4661
    %v4663 = vrot.slane %v4078, %v4662
    %v4664 = vsel %vm1042, %v4663, %v4659
    %v4665 = vlaneseq
    %v4666 = vshrl.u32 %v4665, 7
    %v4667 = vsub.s32 %v1044, %v4666
    %v4668 = vrot.slane %v4079, %v4667
    %v4669 = vsel %vm1049, %v4668, %v4664
    %v4670 = vlaneseq
    %v4671 = vshrl.u32 %v4670, 7
    %v4672 = vsub.s32 %v1051, %v4671
    %v4673 = vrot.slane %v4080, %v4672
    %v4674 = vsel %vm1056, %v4673, %v4669
    %v4675 = vlaneseq
    %v4676 = vshrl.u32 %v4675, 7
    %v4677 = vsub.s32 %v1058, %v4676
    %v4678 = vrot.slane %v4081, %v4677
    %v4679 = vsel %vm1063, %v4678, %v4674
    %v4680 = vlaneseq
    %v4681 = vshrl.u32 %v4680, 7
    %v4682 = vsub.s32 %v1065, %v4681
    %v4683 = vrot.slane %v4082, %v4682
    %v4684 = vsel %vm1070, %v4683, %v4679
    %v4685 = vlaneseq
    %v4686 = vshrl.u32 %v4685, 7
    %v4687 = vsub.s32 %v1072, %v4686
    %v4688 = vrot.slane %v4083, %v4687
    %v4689 = vsel %vm1077, %v4688, %v4684
    %v4690 = vlaneseq
    %v4691 = vshrl.u32 %v4690, 7
    %v4692 = vsub.s32 %v1079, %v4691
    %v4693 = vrot.slane %v4084, %v4692
    %v4694 = vsel %vm1084, %v4693, %v4689
    %v4695 = vlaneseq
    %v4696 = vshrl.u32 %v4695, 7
    %v4697 = vsub.s32 %v1086, %v4696
    %v4698 = vrot.slane %v4085, %v4697
    %v4699 = vsel %vm1091, %v4698, %v4694
    %v4700 = vlaneseq
    %v4701 = vshrl.u32 %v4700, 7
    %v4702 = vsub.s32 %v1093, %v4701
    %v4703 = vrot.slane %v4086, %v4702
    %v4704 = vsel %vm1098, %v4703, %v4699
    %v4705 = vlaneseq
    %v4706 = vshrl.u32 %v4705, 7
    %v4707 = vsub.s32 %v1100, %v4706
    %v4708 = vrot.slane %v4087, %v4707
    %v4709 = vsel %vm1105, %v4708, %v4704
    %v4710 = vlaneseq
    %v4711 = vshrl.u32 %v4710, 7
    %v4712 = vsub.s32 %v1107, %v4711
    %v4713 = vrot.slane %v4088, %v4712
    %v4714 = vsel %vm1112, %v4713, %v4709
    %v4715 = vlaneseq
    %v4716 = vshrl.u32 %v4715, 7
    %v4717 = vsub.s32 %v1114, %v4716
    %v4718 = vrot.slane %v4089, %v4717
    %v4719 = vsel %vm1119, %v4718, %v4714
    %v4720 = vlaneseq
    %v4721 = vshrl.u32 %v4720, 7
    %v4722 = vsub.s32 %v1121, %v4721
    %v4723 = vrot.slane %v4090, %v4722
    %v4724 = vsel %vm1126, %v4723, %v4719
    %v4725 = vlaneseq
    %v4726 = vshrl.u32 %v4725, 7
    %v4727 = vsub.s32 %v374, %v4726
    %v4728 = vrot.slane %v4091, %v4727
    %v4729 = vlaneseq
    %v4730 = vshrl.u32 %v4729, 7
    %v4731 = vsub.s32 %v1023, %v4730
    %v4732 = vrot.slane %v4092, %v4731
    %v4733 = vsel %vm1028, %v4732, %v4728
    %v4734 = vlaneseq
    %v4735 = vshrl.u32 %v4734, 7
    %v4736 = vsub.s32 %v1030, %v4735
    %v4737 = vrot.slane %v4093, %v4736
    %v4738 = vsel %vm1035, %v4737, %v4733
    %v4739 = vlaneseq
    %v4740 = vshrl.u32 %v4739, 7
    %v4741 = vsub.s32 %v1037, %v4740
    %v4742 = vrot.slane %v4094, %v4741
    %v4743 = vsel %vm1042, %v4742, %v4738
    %v4744 = vlaneseq
    %v4745 = vshrl.u32 %v4744, 7
    %v4746 = vsub.s32 %v1044, %v4745
    %v4747 = vrot.slane %v4095, %v4746
    %v4748 = vsel %vm1049, %v4747, %v4743
    %v4749 = vlaneseq
    %v4750 = vshrl.u32 %v4749, 7
    %v4751 = vsub.s32 %v1051, %v4750
    %v4752 = vrot.slane %v4096, %v4751
    %v4753 = vsel %vm1056, %v4752, %v4748
    %v4754 = vlaneseq
    %v4755 = vshrl.u32 %v4754, 7
    %v4756 = vsub.s32 %v1058, %v4755
    %v4757 = vrot.slane %v4097, %v4756
    %v4758 = vsel %vm1063, %v4757, %v4753
    %v4759 = vlaneseq
    %v4760 = vshrl.u32 %v4759, 7
    %v4761 = vsub.s32 %v1065, %v4760
    %v4762 = vrot.slane %v4098, %v4761
    %v4763 = vsel %vm1070, %v4762, %v4758
    %v4764 = vlaneseq
    %v4765 = vshrl.u32 %v4764, 7
    %v4766 = vsub.s32 %v1072, %v4765
    %v4767 = vrot.slane %v4099, %v4766
    %v4768 = vsel %vm1077, %v4767, %v4763
    %v4769 = vlaneseq
    %v4770 = vshrl.u32 %v4769, 7
    %v4771 = vsub.s32 %v1079, %v4770
    %v4772 = vrot.slane %v4100, %v4771
    %v4773 = vsel %vm1084, %v4772, %v4768
    %v4774 = vlaneseq
    %v4775 = vshrl.u32 %v4774, 7
    %v4776 = vsub.s32 %v1086, %v4775
    %v4777 = vrot.slane %v4101, %v4776
    %v4778 = vsel %vm1091, %v4777, %v4773
    %v4779 = vlaneseq
    %v4780 = vshrl.u32 %v4779, 7
    %v4781 = vsub.s32 %v1093, %v4780
    %v4782 = vrot.slane %v4102, %v4781
    %v4783 = vsel %vm1098, %v4782, %v4778
    %v4784 = vlaneseq
    %v4785 = vshrl.u32 %v4784, 7
    %v4786 = vsub.s32 %v1100, %v4785
    %v4787 = vrot.slane %v4103, %v4786
    %v4788 = vsel %vm1105, %v4787, %v4783
    %v4789 = vlaneseq
    %v4790 = vshrl.u32 %v4789, 7
    %v4791 = vsub.s32 %v1107, %v4790
    %v4792 = vrot.slane %v4104, %v4791
    %v4793 = vsel %vm1112, %v4792, %v4788
    %v4794 = vlaneseq
    %v4795 = vshrl.u32 %v4794, 7
    %v4796 = vsub.s32 %v1114, %v4795
    %v4797 = vrot.slane %v4105, %v4796
    %v4798 = vsel %vm1119, %v4797, %v4793
    %v4799 = vlaneseq
    %v4800 = vshrl.u32 %v4799, 7
    %v4801 = vsub.s32 %v1121, %v4800
    %v4802 = vrot.slane %v4106, %v4801
    %v4803 = vsel %vm1126, %v4802, %v4798
    %v4804 = vlaneseq
    %v4805 = vshrl.u32 %v4804, 7
    %v4806 = vsub.s32 %v374, %v4805
    %v4807 = vrot.slane %v4107, %v4806
    %v4808 = vlaneseq
    %v4809 = vshrl.u32 %v4808, 7
    %v4810 = vsub.s32 %v1023, %v4809
    %v4811 = vrot.slane %v4108, %v4810
    %v4812 = vsel %vm1028, %v4811, %v4807
    %v4813 = vlaneseq
    %v4814 = vshrl.u32 %v4813, 7
    %v4815 = vsub.s32 %v1030, %v4814
    %v4816 = vrot.slane %v4109, %v4815
    %v4817 = vsel %vm1035, %v4816, %v4812
    %v4818 = vlaneseq
    %v4819 = vshrl.u32 %v4818, 7
    %v4820 = vsub.s32 %v1037, %v4819
    %v4821 = vrot.slane %v4110, %v4820
    %v4822 = vsel %vm1042, %v4821, %v4817
    %v4823 = vlaneseq
    %v4824 = vshrl.u32 %v4823, 7
    %v4825 = vsub.s32 %v1044, %v4824
    %v4826 = vrot.slane %v4111, %v4825
    %v4827 = vsel %vm1049, %v4826, %v4822
    %v4828 = vlaneseq
    %v4829 = vshrl.u32 %v4828, 7
    %v4830 = vsub.s32 %v1051, %v4829
    %v4831 = vrot.slane %v4112, %v4830
    %v4832 = vsel %vm1056, %v4831, %v4827
    %v4833 = vlaneseq
    %v4834 = vshrl.u32 %v4833, 7
    %v4835 = vsub.s32 %v1058, %v4834
    %v4836 = vrot.slane %v4113, %v4835
    %v4837 = vsel %vm1063, %v4836, %v4832
    %v4838 = vlaneseq
    %v4839 = vshrl.u32 %v4838, 7
    %v4840 = vsub.s32 %v1065, %v4839
    %v4841 = vrot.slane %v4114, %v4840
    %v4842 = vsel %vm1070, %v4841, %v4837
    %v4843 = vlaneseq
    %v4844 = vshrl.u32 %v4843, 7
    %v4845 = vsub.s32 %v1072, %v4844
    %v4846 = vrot.slane %v4115, %v4845
    %v4847 = vsel %vm1077, %v4846, %v4842
    %v4848 = vlaneseq
    %v4849 = vshrl.u32 %v4848, 7
    %v4850 = vsub.s32 %v1079, %v4849
    %v4851 = vrot.slane %v4116, %v4850
    %v4852 = vsel %vm1084, %v4851, %v4847
    %v4853 = vlaneseq
    %v4854 = vshrl.u32 %v4853, 7
    %v4855 = vsub.s32 %v1086, %v4854
    %v4856 = vrot.slane %v4117, %v4855
    %v4857 = vsel %vm1091, %v4856, %v4852
    %v4858 = vlaneseq
    %v4859 = vshrl.u32 %v4858, 7
    %v4860 = vsub.s32 %v1093, %v4859
    %v4861 = vrot.slane %v4118, %v4860
    %v4862 = vsel %vm1098, %v4861, %v4857
    %v4863 = vlaneseq
    %v4864 = vshrl.u32 %v4863, 7
    %v4865 = vsub.s32 %v1100, %v4864
    %v4866 = vrot.slane %v4119, %v4865
    %v4867 = vsel %vm1105, %v4866, %v4862
    %v4868 = vlaneseq
    %v4869 = vshrl.u32 %v4868, 7
    %v4870 = vsub.s32 %v1107, %v4869
    %v4871 = vrot.slane %v4120, %v4870
    %v4872 = vsel %vm1112, %v4871, %v4867
    %v4873 = vlaneseq
    %v4874 = vshrl.u32 %v4873, 7
    %v4875 = vsub.s32 %v1114, %v4874
    %v4876 = vrot.slane %v4121, %v4875
    %v4877 = vsel %vm1119, %v4876, %v4872
    %v4878 = vlaneseq
    %v4879 = vshrl.u32 %v4878, 7
    %v4880 = vsub.s32 %v1121, %v4879
    %v4881 = vrot.slane %v4122, %v4880
    %v4882 = vsel %vm1126, %v4881, %v4877
    %v4883 = vsel %vm1681, %v4408, %v4329
    %v4884 = vsel %vm1683, %v4487, %v4883
    %v4885 = vsel %vm1685, %v4566, %v4884
    %v4886 = vsel %vm1687, %v4645, %v4885
    %v4887 = vsel %vm1689, %v4724, %v4886
    %v4888 = vsel %vm1691, %v4803, %v4887
    %v4889 = vsel %vm1693, %v4882, %v4888
    %v4891 = vadd.f32 %v3994, %v4889
    %v4893 = vlaneseq
    %v4894 = vshrl.u32 %v4893, 7
    %v4895 = vsub.s32 0, %v4894
    %v4896 = vrot.slane %v3321, %v4895
    %v4898 = vadd.f32 %v4891, %v4896
    %vm4899 = vcmp.lt.s32.totalorder %v374, 1
    %v4900 = vsel %vm4899, 1, 0
    %vm4901 = vcmp.eq.s32.totalorder %v4900, 1
    %v4902 = vsel %vm4901, %v4898, 0.0
    %4903 = vst [vmem:[%s7] sm:$0xff] %v4902
    // Predicated region
    $region42: #{_forward_host.1} parent=1 // pred_check
      _
    $region43: #{_forward_host.1} parent=1 // pred_check_branch
      %4905 = sbr.rel (0) target = $region45
    $region44: #{_forward_host.1} parent=1 // pred_region
      _
    $region45: #{_forward_host.1} parent=1 // pred_fallthru
      _
    // Predicated region
    $region46: #{_forward_host.1} parent=1 // pred_check
      _
    $region47: #{_forward_host.1} parent=1 // pred_check_branch
      %4907 = sbr.rel (0) target = $region49
    $region48: #{_forward_host.1} parent=1 // pred_region
      _
    $region49: #{_forward_host.1} parent=1 // pred_fallthru
      _
    %4908 = vsyncpa [#allocation3], 1
    %4909 = vsyncpa [#allocation5], 1

</llo_original>
